<compile_context>
chip_gen: v5e
topology: v5e:2x2
jax: 0.10.0
libtpu: 0.0.40
codegen_flags: <defaults>
</compile_context>

<pallas_src>
import math
from functools import partial

import jax
import jax.numpy as jnp
from jax import lax
from jax.experimental import pallas as pl
from jax.experimental.pallas import tpu as pltpu


_MATMUL_VMEM_LIMIT = 48 * 1024 * 1024   # > v5e's 16 MiB scoped default, < v7x's 64 MiB physical


# ----------------------------------------------------------------------------- helpers
def _round_up(x, m):
    return ((x + m - 1) // m) * m


def _pick_tile(dim, target, granule):
    """Largest tile <= target that divides `dim` and is a multiple of `granule`,
    falling back to the full dim (always legal as a block shape)."""
    if dim <= target:
        return dim
    t = (target // granule) * granule
    while t >= granule:
        if dim % t == 0:
            return t
        t -= granule
    return dim


def _attn_seq_tile_target():
    """256 for 256x256-MXU chips (v6e / v7x); 128 for older generations."""
    try:
        kind = jax.devices()[0].device_kind.lower()
    except Exception:
        return 128
    if any(v in kind for v in ("v2", "v3", "v4", "v5")):
        return 128
    return 256


def _gelu_tanh(x):
    c = math.sqrt(2.0 / math.pi)
    return 0.5 * x * (1.0 + jnp.tanh(c * (x + 0.044715 * x * x * x)))


# ----------------------------------------------------------------------------- kernels
def _ln_linear_kernel(x_ref, g_ref, b_ref, w_ref, bias_ref, o_ref, xn_ref, *, activation):
    """Fused LayerNorm + Linear (+ optional tanh-GELU).

    K (=C) is un-tiled so LN statistics are exact.  Grid is (M//tm, N//tn) with
    N innermost ("arbitrary"): the LayerNorm'd bf16 activation of the current
    M tile is computed ONCE (at j == 0) into a VMEM scratch and reused for
    every N tile."""
    @pl.when(pl.program_id(1) == 0)
    def _():
        x = x_ref[...].astype(jnp.float32)                       # (tm, C)
        mu = jnp.mean(x, axis=-1, keepdims=True)
        var = jnp.mean(jnp.square(x - mu), axis=-1, keepdims=True)
        xn = (x - mu) * lax.rsqrt(var + 1e-5)
        xn_ref[...] = (xn * g_ref[...] + b_ref[...]).astype(jnp.bfloat16)

    h = jnp.dot(xn_ref[...], w_ref[...],
                preferred_element_type=jnp.float32) + bias_ref[...]
    if activation == "gelu":
        h = _gelu_tanh(h)
    o_ref[...] = h.astype(o_ref.dtype)


def _ln_matmul_kernel(x_ref, g_ref, b_ref, w_ref, o_ref, xn_ref):
    """Fused final LayerNorm + (bias-free) lm_head matmul, with the same
    once-per-M-tile LN scratch reuse as above."""
    @pl.when(pl.program_id(1) == 0)
    def _():
        x = x_ref[...].astype(jnp.float32)
        mu = jnp.mean(x, axis=-1, keepdims=True)
        var = jnp.mean(jnp.square(x - mu), axis=-1, keepdims=True)
        xn = (x - mu) * lax.rsqrt(var + 1e-5)
        xn_ref[...] = (xn * g_ref[...] + b_ref[...]).astype(jnp.bfloat16)

    o_ref[...] = jnp.dot(xn_ref[...], w_ref[...],
                         preferred_element_type=jnp.float32)


def _matmul_resid_kernel(x_ref, w_ref, bias_ref, r_ref, o_ref, acc_ref):
    """Canonical tiled matmul with K-accumulation: out = resid + x @ w + bias.
    Accumulator and residual add are f32; the HBM residual stream is bf16."""
    @pl.when(pl.program_id(2) == 0)
    def _():
        acc_ref[...] = jnp.zeros_like(acc_ref)

    acc_ref[...] += jnp.dot(x_ref[...], w_ref[...],
                            preferred_element_type=jnp.float32)

    @pl.when(pl.program_id(2) == pl.num_programs(2) - 1)
    def _():
        o_ref[...] = (acc_ref[...] + bias_ref[...]
                      + r_ref[...].astype(jnp.float32)).astype(o_ref.dtype)


def _attn_kernel(q_ref, k_ref, v_ref, o_ref, m_sc, l_sc, acc_sc, *, hg, hd, tq, tkv):
    """Flash-style causal attention.  q_ref plays the *query* role (callers pass
    the reference's (k, q, v) SDPA ordering); the 1/sqrt(hd) scale is already
    folded into the query-producing weights.

    Grid: (B, head_groups, nQ, nKV) with KV innermost / 'arbitrary'.  Blocks
    hold `hg` heads side by side on the lane dim; the output accumulator is a
    single lane-dense (tq, hg*hd) f32 scratch so the epilogue is ONE full-width
    store.  Above-diagonal KV tiles are skipped (and, via the clamped KV
    index_map, never DMA'd); only the diagonal tile applies the causal mask."""
    qi = pl.program_id(2)
    ki = pl.program_id(3)

    @pl.when(ki == 0)
    def _():
        m_sc[...] = jnp.full(m_sc.shape, -1e30, jnp.float32)
        l_sc[...] = jnp.zeros(l_sc.shape, jnp.float32)
        acc_sc[...] = jnp.zeros(acc_sc.shape, jnp.float32)

    def update(masked):
        if masked:
            row = qi * tq + lax.broadcasted_iota(jnp.int32, (tq, tkv), 0)
            col = ki * tkv + lax.broadcasted_iota(jnp.int32, (tq, tkv), 1)
            causal = col <= row
        for h in range(hg):                       # static unroll over the head group
            lo, hi = h * hd, (h + 1) * hd
            qh = q_ref[0, :, lo:hi]               # (tq, hd) bf16 (scale pre-folded)
            kh = k_ref[0, :, lo:hi]               # (tkv, hd) bf16
            vh = v_ref[0, :, lo:hi]               # (tkv, hd) bf16
            # q @ k^T without materializing a transpose.
            s = lax.dot_general(qh, kh, (((1,), (1,)), ((), ())),
                                preferred_element_type=jnp.float32)   # (tq, tkv)
            if masked:
                s = jnp.where(causal, s, -1e30)
            m_prev = m_sc[h]                                           # (tq, 1)
            m_new = jnp.maximum(m_prev, jnp.max(s, axis=-1, keepdims=True))
            alpha = jnp.exp(m_prev - m_new)
            p = jnp.exp(s - m_new)
            l_sc[h] = alpha * l_sc[h] + jnp.sum(p, axis=-1, keepdims=True)
            acc_sc[:, lo:hi] = alpha * acc_sc[:, lo:hi] + jnp.dot(
                p.astype(jnp.bfloat16), vh, preferred_element_type=jnp.float32)
            m_sc[h] = m_new

    # Interior (fully-below-diagonal) tiles: no causal masking needed.
    @pl.when(ki < qi)
    def _():
        update(masked=False)

    # Diagonal tile: apply the causal mask (requires tq == tkv).
    @pl.when(ki == qi)
    def _():
        update(masked=True)

    @pl.when(ki == pl.num_programs(3) - 1)
    def _():
        for h in range(hg):
            lo, hi = h * hd, (h + 1) * hd
            acc_sc[:, lo:hi] = acc_sc[:, lo:hi] * pl.reciprocal(l_sc[h], approx=True)
        o_ref[0, :, :] = acc_sc[...].astype(o_ref.dtype)   # single lane-dense store


# ----------------------------------------------------------------------------- wrappers
def ln_linear(x, g, b, w, bias, *, activation, out_dtype):
    M, K = x.shape
    N = w.shape[1]
    tm = _pick_tile(M, 512, 8)
    tn = _pick_tile(N, 256, 128)
    return pl.pallas_call(
        partial(_ln_linear_kernel, activation=activation),
        out_shape=jax.ShapeDtypeStruct((M, N), out_dtype),
        grid=(M // tm, N // tn),
        in_specs=[
            pl.BlockSpec((tm, K), lambda i, j: (i, 0)),
            pl.BlockSpec((1, K), lambda i, j: (0, 0)),
            pl.BlockSpec((1, K), lambda i, j: (0, 0)),
            pl.BlockSpec((K, tn), lambda i, j: (0, j)),
            pl.BlockSpec((1, tn), lambda i, j: (0, j)),
        ],
        out_specs=pl.BlockSpec((tm, tn), lambda i, j: (i, j)),
        scratch_shapes=[pltpu.VMEM((tm, K), jnp.bfloat16)],       # LN'd activation, reused over N
        compiler_params=pltpu.CompilerParams(
            dimension_semantics=("parallel", "arbitrary"),        # "arbitrary" N: scratch reuse is megacore-safe
            vmem_limit_bytes=_MATMUL_VMEM_LIMIT),
        cost_estimate=pl.CostEstimate(
            flops=2 * M * K * N, transcendentals=M,
            bytes_accessed=M * K * 2 + K * N * 2 + M * N * 2),
    )(x, g, b, w, bias)


def ln_matmul(x, g, b, w):
    M, K = x.shape
    N = w.shape[1]
    tm = _pick_tile(M, 512, 8)
    tn = _pick_tile(N, 512, 128)
    return pl.pallas_call(
        _ln_matmul_kernel,
        out_shape=jax.ShapeDtypeStruct((M, N), jnp.float32),
        grid=(M // tm, N // tn),
        in_specs=[
            pl.BlockSpec((tm, K), lambda i, j: (i, 0)),
            pl.BlockSpec((1, K), lambda i, j: (0, 0)),
            pl.BlockSpec((1, K), lambda i, j: (0, 0)),
            pl.BlockSpec((K, tn), lambda i, j: (0, j)),
        ],
        out_specs=pl.BlockSpec((tm, tn), lambda i, j: (i, j)),
        scratch_shapes=[pltpu.VMEM((tm, K), jnp.bfloat16)],
        compiler_params=pltpu.CompilerParams(
            dimension_semantics=("parallel", "arbitrary"),
            vmem_limit_bytes=_MATMUL_VMEM_LIMIT),
        cost_estimate=pl.CostEstimate(
            flops=2 * M * K * N, transcendentals=M,
            bytes_accessed=M * K * 2 + K * N * 2 + M * N * 4),
    )(x, g, b, w)


def linear_resid(x, w, bias, resid):
    M, K = x.shape
    N = w.shape[1]
    tm = _pick_tile(M, 512, 8)
    tn = _pick_tile(N, 256, 128)
    tk = _pick_tile(K, 512, 128)
    return pl.pallas_call(
        _matmul_resid_kernel,
        out_shape=jax.ShapeDtypeStruct((M, N), resid.dtype),
        grid=(M // tm, N // tn, K // tk),
        in_specs=[
            pl.BlockSpec((tm, tk), lambda i, j, k: (i, k)),
            pl.BlockSpec((tk, tn), lambda i, j, k: (k, j)),
            pl.BlockSpec((1, tn), lambda i, j, k: (0, j)),
            pl.BlockSpec((tm, tn), lambda i, j, k: (i, j)),
        ],
        out_specs=pl.BlockSpec((tm, tn), lambda i, j, k: (i, j)),
        scratch_shapes=[pltpu.VMEM((tm, tn), jnp.float32)],
        input_output_aliases={3: 0},                              # residual buffer reused for the output
        compiler_params=pltpu.CompilerParams(
            dimension_semantics=("parallel", "parallel", "arbitrary"),
            vmem_limit_bytes=_MATMUL_VMEM_LIMIT),
        cost_estimate=pl.CostEstimate(
            flops=2 * M * K * N, transcendentals=0,
            bytes_accessed=M * K * 2 + K * N * 2 + 2 * M * N * 2),
    )(x, w, bias, resid)


def causal_attention(q, k, v, n_head):
    """q plays the *query* role (callers pass the reference's (k, q, v) order).
    The 1/sqrt(hd) query scale is pre-folded into the qkv weights."""
    B, T, C = q.shape
    H = n_head
    hd = C // H
    # Head group size: aim for a 128-lane-dense block.
    target_h = max(1, 128 // hd)
    hg = H if target_h >= H else math.gcd(H, target_h)
    hgd = hg * hd
    if hgd % 128 != 0 and hgd != C:
        hg, hgd = H, C                      # fall back to a full-C (always legal) block
    G = H // hg
    tq = _pick_tile(T, _attn_seq_tile_target(), 8)
    tkv = tq                                # diagonal-only masking assumes tq == tkv
    assert tq == tkv

    q_spec = pl.BlockSpec((1, tq, hgd), lambda b, g, qi, ki: (b, qi, g))
    # Clamp the KV block index at the diagonal: above-diagonal tiles keep the
    # previous block index, so Pallas issues no DMA for them (compute is already
    # skipped in-kernel).  ~2x less K/V HBM traffic for causal attention.
    kv_spec = pl.BlockSpec((1, tkv, hgd),
                           lambda b, g, qi, ki: (b, jnp.minimum(ki, qi), g))
    out_spec = pl.BlockSpec((1, tq, hgd), lambda b, g, qi, ki: (b, qi, g))

    return pl.pallas_call(
        partial(_attn_kernel, hg=hg, hd=hd, tq=tq, tkv=tkv),
        out_shape=jax.ShapeDtypeStruct((B, T, C), jnp.bfloat16),
        grid=(B, G, T // tq, T // tkv),
        in_specs=[q_spec, kv_spec, kv_spec],
        out_specs=out_spec,
        scratch_shapes=[
            pltpu.VMEM((hg, tq, 1), jnp.float32),    # running max (per head)
            pltpu.VMEM((hg, tq, 1), jnp.float32),    # running denom (per head)
            pltpu.VMEM((tq, hgd), jnp.float32),      # lane-dense output accumulator
        ],
        compiler_params=pltpu.CompilerParams(
            dimension_semantics=("parallel", "parallel", "parallel", "arbitrary")),
    )(q, k, v)


# ----------------------------------------------------------------------------- model
def init_params(key, *, n_layer, n_head, n_embd, vocab_size, block_size):
    std = 0.02
    proj_std = 0.02 * (2 * n_layer) ** -0.5
    hd = n_embd // n_head
    attn_scale = 1.0 / math.sqrt(hd)
    v_pad = _round_up(vocab_size, 128)
    keys = iter(jax.random.split(key, 2 + n_layer * 4))

    def norm(k, shape, s):
        return s * jax.random.normal(k, shape, dtype=jnp.float32)

    wte = norm(next(keys), (v_pad, n_embd), std)
    wte = wte.at[vocab_size:].set(0.0)            # padded vocab rows (never gathered)
    params = {
        "wte": wte,                                          # (V_pad, C) f32, embedding
        "lm_head_w": wte.T.astype(jnp.bfloat16),             # (C, V_pad) bf16, tied, pre-transposed once
        "wpe": norm(next(keys), (block_size, n_embd), std),
        "lnf_g": jnp.ones((1, n_embd), jnp.float32),
        "lnf_b": jnp.zeros((1, n_embd), jnp.float32),
        "blocks": [],
    }
    for _ in range(n_layer):
        attn_w = norm(next(keys), (n_embd, 3 * n_embd), std)
        # Fold SDPA's 1/sqrt(hd) query scale into the query-producing slice.
        # Reference: SDPA(query=k, key=q, value=v) and k = qkv[:, C:2C],
        # so the scale belongs to columns [C, 2C).  (attn bias is zero, so no
        # bias fold is needed; scale attn_b[:, C:2C] too if biases are loaded.)
        attn_w = attn_w.at[:, n_embd:2 * n_embd].multiply(attn_scale)
        blk = {
            "ln1_g": jnp.ones((1, n_embd), jnp.float32),
            "ln1_b": jnp.zeros((1, n_embd), jnp.float32),
            "ln2_g": jnp.ones((1, n_embd), jnp.float32),
            "ln2_b": jnp.zeros((1, n_embd), jnp.float32),
            # weights stored as (in, out); bf16 for the MXU, biases f32
            "attn_w": attn_w.astype(jnp.bfloat16),
            "attn_b": jnp.zeros((1, 3 * n_embd), jnp.float32),
            "attn_proj_w": norm(next(keys), (n_embd, n_embd), proj_std).astype(jnp.bfloat16),
            "attn_proj_b": jnp.zeros((1, n_embd), jnp.float32),
            "fc_w": norm(next(keys), (n_embd, 4 * n_embd), std).astype(jnp.bfloat16),
            "fc_b": jnp.zeros((1, 4 * n_embd), jnp.float32),
            "mlp_proj_w": norm(next(keys), (4 * n_embd, n_embd), proj_std).astype(jnp.bfloat16),
            "mlp_proj_b": jnp.zeros((1, n_embd), jnp.float32),
        }
        params["blocks"].append(blk)
    return params


def block_forward(x2, p, B, T, C, H):
    # --- attention (ln_1 fused into the qkv projection) ---
    qkv = ln_linear(x2, p["ln1_g"], p["ln1_b"], p["attn_w"], p["attn_b"],
                    activation=None, out_dtype=jnp.bfloat16)          # (B*T, 3C) bf16
    qkv = qkv.reshape(B, T, 3 * C)
    q, k, v = qkv[:, :, :C], qkv[:, :, C:2 * C], qkv[:, :, 2 * C:]
    # reference passes (k, q, v) to SDPA: query=k, key=q, value=v
    y = causal_attention(k, q, v, H)                                  # (B, T, C) bf16
    x2 = linear_resid(y.reshape(B * T, C), p["attn_proj_w"], p["attn_proj_b"], x2)
    # --- mlp (ln_2 + GELU fused into the fc projection) ---
    h = ln_linear(x2, p["ln2_g"], p["ln2_b"], p["fc_w"], p["fc_b"],
                  activation="gelu", out_dtype=jnp.bfloat16)          # (B*T, 4C) bf16
    x2 = linear_resid(h, p["mlp_proj_w"], p["mlp_proj_b"], x2)
    return x2


@partial(jax.jit, static_argnames=("n_head", "vocab_size"))
def gpt_forward(params, idx, n_head, vocab_size):
    B, T = idx.shape
    C = params["wpe"].shape[-1]
    # embedding gather + positional add: plain-JAX glue.  Residual stream is
    # bf16 in HBM; all in-kernel LN stats / accumulation stay f32.
    tok_emb = jnp.take(params["wte"], idx, axis=0)            # (B, T, C)
    pos_emb = params["wpe"][:T]                               # (T, C)
    x2 = (tok_emb + pos_emb).astype(jnp.bfloat16).reshape(B * T, C)
    for blk in params["blocks"]:
        x2 = block_forward(x2, blk, B, T, C, n_head)
    # final LayerNorm fused into the weight-tied lm_head matmul (vocab padded to 128)
    logits = ln_matmul(x2, params["lnf_g"], params["lnf_b"], params["lm_head_w"])
    v_pad = logits.shape[-1]
    logits = logits.reshape(B, T, v_pad)[:, :, :vocab_size]
    # TODO(synk): cross-entropy loss (targets path) not implemented; only logits.
    return logits


# ----------------------------------------------------------------------------- main
if __name__ == "__main__":
    # small config consistent with GPTConfig fields
    n_layer, n_head, n_embd = 2, 2, 32
    vocab_size, block_size = 64, 16
    B, T = 2, 16

    key = jax.random.PRNGKey(0)
    pkey, ikey = jax.random.split(key)
    params = init_params(pkey, n_layer=n_layer, n_head=n_head, n_embd=n_embd,
                         vocab_size=vocab_size, block_size=block_size)
    idx = jax.random.randint(ikey, (B, T), 0, vocab_size, dtype=jnp.int32)

    logits = gpt_forward(params, idx, n_head=n_head, vocab_size=vocab_size)
    jax.block_until_ready(logits)
    assert logits.shape == (B, T, vocab_size)
    assert bool(jnp.all(jnp.isfinite(logits)))
    print("KERNEL_OK")
</pallas_src>

<mosaic_0001>
module attributes {stable_mosaic.version = 11 : i64} {
  func.func @_ln_linear_kernel(%arg0: i32, %arg1: i32, %arg2: memref<32x32xbf16, #tpu.memory_space<vmem>>, %arg3: memref<1x32xf32, #tpu.memory_space<vmem>>, %arg4: memref<1x32xf32, #tpu.memory_space<vmem>>, %arg5: memref<32x96xbf16, #tpu.memory_space<vmem>>, %arg6: memref<1x96xf32, #tpu.memory_space<vmem>>, %arg7: memref<32x96xbf16, #tpu.memory_space<vmem>>, %arg8: memref<32x32xbf16, #tpu.memory_space<vmem>>) attributes {dimension_semantics = [#tpu.dimension_semantics<parallel>, #tpu.dimension_semantics<arbitrary>], iteration_bounds = array<i64: 1, 1>, scalar_prefetch = 0 : i64, scratch_operands = 1 : i64, tpu.core_type = #tpu.core_type<tc>, window_params = [{transform_indices = @transform_0, window_bounds = array<i64: 32, 32>}, {pipeline_mode = #tpu.pipeline_mode<synchronous>, transform_indices = @transform_1, window_bounds = array<i64: 1, 32>}, {pipeline_mode = #tpu.pipeline_mode<synchronous>, transform_indices = @transform_2, window_bounds = array<i64: 1, 32>}, {transform_indices = @transform_3, window_bounds = array<i64: 32, 96>}, {transform_indices = @transform_4, window_bounds = array<i64: 1, 96>}, {transform_indices = @transform_5, window_bounds = array<i64: 32, 96>}]} {
    %c0_i32 = arith.constant 0 : i32
    %0 = arith.cmpi eq, %arg1, %c0_i32 : i32
    %1 = arith.extui %0 : i1 to i32
    %c0_i32_0 = arith.constant 0 : i32
    %2 = arith.cmpi ne, %1, %c0_i32_0 : i32
    scf.if %2 {
      %c0_8 = arith.constant 0 : index
      %c0_9 = arith.constant 0 : index
      %11 = vector.load %arg2[%c0_8, %c0_9] : memref<32x32xbf16, #tpu.memory_space<vmem>>, vector<32x32xbf16>
      %12 = arith.extf %11 : vector<32x32xbf16> to vector<32x32xf32>
      %cst_10 = arith.constant dense<0.000000e+00> : vector<32xf32>
      %13 = vector.multi_reduction <add>, %12, %cst_10 [1] : vector<32x32xf32> to vector<32xf32>
      %14 = vector.shape_cast %13 : vector<32xf32> to vector<32x1xf32>
      %cst_11 = arith.constant 3.200000e+01 : f32
      %15 = vector.broadcast %cst_11 : f32 to vector<32x1xf32>
      %16 = arith.divf %14, %15 : vector<32x1xf32>
      %17 = vector.broadcast %16 : vector<32x1xf32> to vector<32x32xf32>
      %18 = arith.subf %12, %17 : vector<32x32xf32>
      %19 = arith.mulf %18, %18 : vector<32x32xf32>
      %cst_12 = arith.constant dense<0.000000e+00> : vector<32xf32>
      %20 = vector.multi_reduction <add>, %19, %cst_12 [1] : vector<32x32xf32> to vector<32xf32>
      %21 = vector.shape_cast %20 : vector<32xf32> to vector<32x1xf32>
      %cst_13 = arith.constant 3.200000e+01 : f32
      %22 = vector.broadcast %cst_13 : f32 to vector<32x1xf32>
      %23 = arith.divf %21, %22 : vector<32x1xf32>
      %24 = vector.broadcast %16 : vector<32x1xf32> to vector<32x32xf32>
      %25 = arith.subf %12, %24 : vector<32x32xf32>
      %cst_14 = arith.constant 9.99999974E-6 : f32
      %26 = vector.broadcast %cst_14 : f32 to vector<32x1xf32>
      %27 = arith.addf %23, %26 : vector<32x1xf32>
      %28 = math.rsqrt %27 : vector<32x1xf32>
      %29 = vector.broadcast %28 : vector<32x1xf32> to vector<32x32xf32>
      %30 = arith.mulf %25, %29 : vector<32x32xf32>
      %c0_15 = arith.constant 0 : index
      %c0_16 = arith.constant 0 : index
      %31 = vector.load %arg3[%c0_15, %c0_16] : memref<1x32xf32, #tpu.memory_space<vmem>>, vector<1x32xf32>
      %32 = vector.broadcast %31 : vector<1x32xf32> to vector<32x32xf32>
      %33 = arith.mulf %30, %32 : vector<32x32xf32>
      %c0_17 = arith.constant 0 : index
      %c0_18 = arith.constant 0 : index
      %34 = vector.load %arg4[%c0_17, %c0_18] : memref<1x32xf32, #tpu.memory_space<vmem>>, vector<1x32xf32>
      %35 = vector.broadcast %34 : vector<1x32xf32> to vector<32x32xf32>
      %36 = arith.addf %33, %35 : vector<32x32xf32>
      %37 = arith.truncf %36 : vector<32x32xf32> to vector<32x32xbf16>
      %c0_19 = arith.constant 0 : index
      %c0_20 = arith.constant 0 : index
      %38 = vector.load %arg8[%c0_19, %c0_20] : memref<32x32xbf16, #tpu.memory_space<vmem>>, vector<32x32xbf16>
      tpu.vector_store %arg8[%c0_19, %c0_20], %37 {strides = array<i32>} : memref<32x32xbf16, #tpu.memory_space<vmem>>, vector<32x32xbf16>,
    } else {
    }
    %c0 = arith.constant 0 : index
    %c0_1 = arith.constant 0 : index
    %3 = vector.load %arg8[%c0, %c0_1] : memref<32x32xbf16, #tpu.memory_space<vmem>>, vector<32x32xbf16>
    %c0_2 = arith.constant 0 : index
    %c0_3 = arith.constant 0 : index
    %4 = vector.load %arg5[%c0_2, %c0_3] : memref<32x96xbf16, #tpu.memory_space<vmem>>, vector<32x96xbf16>
    %cst = arith.constant dense<0.000000e+00> : vector<32x96xf32>
    %5 = tpu.matmul %3, %4, %cst {dimension_numbers = #tpu.dot_dimension_numbers<[1], [0], [0], [1], [0, 0, 1, 1], [], []>} : vector<32x32xbf16>, vector<32x96xbf16>, vector<32x96xf32> -> vector<32x96xf32>
    %c0_4 = arith.constant 0 : index
    %c0_5 = arith.constant 0 : index
    %6 = vector.load %arg6[%c0_4, %c0_5] : memref<1x96xf32, #tpu.memory_space<vmem>>, vector<1x96xf32>
    %7 = vector.broadcast %6 : vector<1x96xf32> to vector<32x96xf32>
    %8 = arith.addf %5, %7 : vector<32x96xf32>
    %9 = arith.truncf %8 : vector<32x96xf32> to vector<32x96xbf16>
    %c0_6 = arith.constant 0 : index
    %c0_7 = arith.constant 0 : index
    %10 = vector.load %arg7[%c0_6, %c0_7] : memref<32x96xbf16, #tpu.memory_space<vmem>>, vector<32x96xbf16>
    tpu.vector_store %arg7[%c0_6, %c0_7], %9 {strides = array<i32>} : memref<32x96xbf16, #tpu.memory_space<vmem>>, vector<32x96xbf16>,
    return
  }
  func.func @transform_0(%arg0: i32, %arg1: i32) -> (i32, i32) {
    %c0_i32 = arith.constant 0 : i32
    %c0_i32_0 = arith.constant 0 : i32
    return %arg0, %c0_i32 : i32, i32
  }
  func.func @transform_1(%arg0: i32, %arg1: i32) -> (i32, i32) {
    %c0_i32 = arith.constant 0 : i32
    %c0_i32_0 = arith.constant 0 : i32
    %c0_i32_1 = arith.constant 0 : i32
    return %c0_i32, %c0_i32_0 : i32, i32
  }
  func.func @transform_2(%arg0: i32, %arg1: i32) -> (i32, i32) {
    %c0_i32 = arith.constant 0 : i32
    %c0_i32_0 = arith.constant 0 : i32
    %c0_i32_1 = arith.constant 0 : i32
    return %c0_i32, %c0_i32_0 : i32, i32
  }
  func.func @transform_3(%arg0: i32, %arg1: i32) -> (i32, i32) {
    %c0_i32 = arith.constant 0 : i32
    %c0_i32_0 = arith.constant 0 : i32
    return %c0_i32, %arg1 : i32, i32
  }
  func.func @transform_4(%arg0: i32, %arg1: i32) -> (i32, i32) {
    %c0_i32 = arith.constant 0 : i32
    %c0_i32_0 = arith.constant 0 : i32
    return %c0_i32, %arg1 : i32, i32
  }
  func.func @transform_5(%arg0: i32, %arg1: i32) -> (i32, i32) {
    %c0_i32 = arith.constant 0 : i32
    return %arg0, %arg1 : i32, i32
  }
}

module attributes {stable_mosaic.version = 11 : i64} {
  func.func @_attn_kernel(%arg0: i32, %arg1: i32, %arg2: i32, %arg3: i32, %arg4: memref<1x16x32xbf16, #tpu.memory_space<vmem>>, %arg5: memref<1x16x32xbf16, #tpu.memory_space<vmem>>, %arg6: memref<1x16x32xbf16, #tpu.memory_space<vmem>>, %arg7: memref<1x16x32xbf16, #tpu.memory_space<vmem>>, %arg8: memref<2x16x1xf32, #tpu.memory_space<vmem>>, %arg9: memref<2x16x1xf32, #tpu.memory_space<vmem>>, %arg10: memref<16x32xf32, #tpu.memory_space<vmem>>) attributes {dimension_semantics = [#tpu.dimension_semantics<parallel>, #tpu.dimension_semantics<parallel>, #tpu.dimension_semantics<parallel>, #tpu.dimension_semantics<arbitrary>], iteration_bounds = array<i64: 2, 1, 1, 1>, scalar_prefetch = 0 : i64, scratch_operands = 3 : i64, tpu.core_type = #tpu.core_type<tc>, window_params = [{transform_indices = @transform_0, window_bounds = array<i64: 1, 16, 32>}, {transform_indices = @transform_1, window_bounds = array<i64: 1, 16, 32>}, {transform_indices = @transform_2, window_bounds = array<i64: 1, 16, 32>}, {transform_indices = @transform_3, window_bounds = array<i64: 1, 16, 32>}]} {
    %c0_i32 = arith.constant 0 : i32
    %0 = arith.cmpi eq, %arg3, %c0_i32 : i32
    %1 = arith.extui %0 : i1 to i32
    %c0_i32_0 = arith.constant 0 : i32
    %2 = arith.cmpi ne, %1, %c0_i32_0 : i32
    scf.if %2 {
      %cst = arith.constant -1.000000e+30 : f32
      %12 = vector.broadcast %cst : f32 to vector<2x16x1xf32>
      %c0 = arith.constant 0 : index
      %c0_5 = arith.constant 0 : index
      %c0_6 = arith.constant 0 : index
      %13 = vector.load %arg8[%c0, %c0_5, %c0_6] : memref<2x16x1xf32, #tpu.memory_space<vmem>>, vector<2x16x1xf32>
      tpu.vector_store %arg8[%c0, %c0_5, %c0_6], %12 {strides = array<i32>} : memref<2x16x1xf32, #tpu.memory_space<vmem>>, vector<2x16x1xf32>,
      %cst_7 = arith.constant 0.000000e+00 : f32
      %14 = vector.broadcast %cst_7 : f32 to vector<2x16x1xf32>
      %c0_8 = arith.constant 0 : index
      %c0_9 = arith.constant 0 : index
      %c0_10 = arith.constant 0 : index
      %15 = vector.load %arg9[%c0_8, %c0_9, %c0_10] : memref<2x16x1xf32, #tpu.memory_space<vmem>>, vector<2x16x1xf32>
      tpu.vector_store %arg9[%c0_8, %c0_9, %c0_10], %14 {strides = array<i32>} : memref<2x16x1xf32, #tpu.memory_space<vmem>>, vector<2x16x1xf32>,
      %cst_11 = arith.constant 0.000000e+00 : f32
      %16 = vector.broadcast %cst_11 : f32 to vector<16x32xf32>
      %c0_12 = arith.constant 0 : index
      %c0_13 = arith.constant 0 : index
      %17 = vector.load %arg10[%c0_12, %c0_13] : memref<16x32xf32, #tpu.memory_space<vmem>>, vector<16x32xf32>
      tpu.vector_store %arg10[%c0_12, %c0_13], %16 {strides = array<i32>} : memref<16x32xf32, #tpu.memory_space<vmem>>, vector<16x32xf32>,
    } else {
    }
    %3 = arith.cmpi slt, %arg3, %arg2 : i32
    %4 = arith.extui %3 : i1 to i32
    %c0_i32_1 = arith.constant 0 : i32
    %5 = arith.cmpi ne, %4, %c0_i32_1 : i32
    scf.if %5 {
      %c0 = arith.constant 0 : index
      %c0_5 = arith.constant 0 : index
      %c0_6 = arith.constant 0 : index
      %12 = vector.load %arg4[%c0, %c0_5, %c0_6] : memref<1x16x32xbf16, #tpu.memory_space<vmem>>, vector<1x16x16xbf16>
      %13 = vector.shape_cast %12 : vector<1x16x16xbf16> to vector<16x16xbf16>
      %c0_7 = arith.constant 0 : index
      %c0_8 = arith.constant 0 : index
      %c0_9 = arith.constant 0 : index
      %14 = vector.load %arg5[%c0_7, %c0_8, %c0_9] : memref<1x16x32xbf16, #tpu.memory_space<vmem>>, vector<1x16x16xbf16>
      %15 = vector.shape_cast %14 : vector<1x16x16xbf16> to vector<16x16xbf16>
      %c0_10 = arith.constant 0 : index
      %c0_11 = arith.constant 0 : index
      %c0_12 = arith.constant 0 : index
      %16 = vector.load %arg6[%c0_10, %c0_11, %c0_12] : memref<1x16x32xbf16, #tpu.memory_space<vmem>>, vector<1x16x16xbf16>
      %17 = vector.shape_cast %16 : vector<1x16x16xbf16> to vector<16x16xbf16>
      %cst = arith.constant dense<0.000000e+00> : vector<16x16xf32>
      %18 = tpu.matmul %13, %15, %cst {dimension_numbers = #tpu.dot_dimension_numbers<[1], [1], [0], [0], [0, 0, 1, 0], [], []>} : vector<16x16xbf16>, vector<16x16xbf16>, vector<16x16xf32> -> vector<16x16xf32>
      %c0_13 = arith.constant 0 : index
      %c0_14 = arith.constant 0 : index
      %c0_15 = arith.constant 0 : index
      %19 = vector.load %arg8[%c0_13, %c0_14, %c0_15] : memref<2x16x1xf32, #tpu.memory_space<vmem>>, vector<1x16x1xf32>
      %20 = vector.shape_cast %19 : vector<1x16x1xf32> to vector<16x1xf32>
      %cst_16 = arith.constant dense<0xFF800000> : vector<16xf32>
      %21 = vector.multi_reduction <maximumf>, %18, %cst_16 [1] : vector<16x16xf32> to vector<16xf32>
      %22 = vector.shape_cast %21 : vector<16xf32> to vector<16x1xf32>
      %23 = arith.maximumf %20, %22 : vector<16x1xf32>
      %24 = arith.subf %20, %23 : vector<16x1xf32>
      %25 = math.exp %24 : vector<16x1xf32>
      %26 = vector.broadcast %23 : vector<16x1xf32> to vector<16x16xf32>
      %27 = arith.subf %18, %26 : vector<16x16xf32>
      %28 = math.exp %27 : vector<16x16xf32>
      %c0_17 = arith.constant 0 : index
      %c0_18 = arith.constant 0 : index
      %c0_19 = arith.constant 0 : index
      %29 = vector.load %arg9[%c0_17, %c0_18, %c0_19] : memref<2x16x1xf32, #tpu.memory_space<vmem>>, vector<1x16x1xf32>
      %30 = vector.shape_cast %29 : vector<1x16x1xf32> to vector<16x1xf32>
      %31 = arith.mulf %25, %30 : vector<16x1xf32>
      %cst_20 = arith.constant dense<0.000000e+00> : vector<16xf32>
      %32 = vector.multi_reduction <add>, %28, %cst_20 [1] : vector<16x16xf32> to vector<16xf32>
      %33 = vector.shape_cast %32 : vector<16xf32> to vector<16x1xf32>
      %34 = arith.addf %31, %33 : vector<16x1xf32>
      %c0_21 = arith.constant 0 : index
      %c0_22 = arith.constant 0 : index
      %c0_23 = arith.constant 0 : index
      %35 = vector.load %arg9[%c0_21, %c0_22, %c0_23] : memref<2x16x1xf32, #tpu.memory_space<vmem>>, vector<1x16x1xf32>
      %36 = vector.shape_cast %35 : vector<1x16x1xf32> to vector<16x1xf32>
      %37 = vector.shape_cast %34 : vector<16x1xf32> to vector<1x16x1xf32>
      tpu.vector_store %arg9[%c0_21, %c0_22, %c0_23], %37 {strides = array<i32>} : memref<2x16x1xf32, #tpu.memory_space<vmem>>, vector<1x16x1xf32>,
      %c0_24 = arith.constant 0 : index
      %c0_25 = arith.constant 0 : index
      %38 = vector.load %arg10[%c0_24, %c0_25] : memref<16x32xf32, #tpu.memory_space<vmem>>, vector<16x16xf32>
      %39 = vector.broadcast %25 : vector<16x1xf32> to vector<16x16xf32>
      %40 = arith.mulf %39, %38 : vector<16x16xf32>
      %41 = arith.truncf %28 : vector<16x16xf32> to vector<16x16xbf16>
      %cst_26 = arith.constant dense<0.000000e+00> : vector<16x16xf32>
      %42 = tpu.matmul %41, %17, %cst_26 {dimension_numbers = #tpu.dot_dimension_numbers<[1], [0], [0], [1], [0, 0, 1, 1], [], []>} : vector<16x16xbf16>, vector<16x16xbf16>, vector<16x16xf32> -> vector<16x16xf32>
      %43 = arith.addf %40, %42 : vector<16x16xf32>
      %c0_27 = arith.constant 0 : index
      %c0_28 = arith.constant 0 : index
      %44 = vector.load %arg10[%c0_27, %c0_28] : memref<16x32xf32, #tpu.memory_space<vmem>>, vector<16x16xf32>
      tpu.vector_store %arg10[%c0_27, %c0_28], %43 {strides = array<i32>} : memref<16x32xf32, #tpu.memory_space<vmem>>, vector<16x16xf32>,
      %c0_29 = arith.constant 0 : index
      %c0_30 = arith.constant 0 : index
      %c0_31 = arith.constant 0 : index
      %45 = vector.load %arg8[%c0_29, %c0_30, %c0_31] : memref<2x16x1xf32, #tpu.memory_space<vmem>>, vector<1x16x1xf32>
      %46 = vector.shape_cast %45 : vector<1x16x1xf32> to vector<16x1xf32>
      %47 = vector.shape_cast %23 : vector<16x1xf32> to vector<1x16x1xf32>
      tpu.vector_store %arg8[%c0_29, %c0_30, %c0_31], %47 {strides = array<i32>} : memref<2x16x1xf32, #tpu.memory_space<vmem>>, vector<1x16x1xf32>,
      %c0_32 = arith.constant 0 : index
      %c0_33 = arith.constant 0 : index
      %c16 = arith.constant 16 : index
      %48 = vector.load %arg4[%c0_32, %c0_33, %c16] : memref<1x16x32xbf16, #tpu.memory_space<vmem>>, vector<1x16x16xbf16>
      %49 = vector.shape_cast %48 : vector<1x16x16xbf16> to vector<16x16xbf16>
      %c0_34 = arith.constant 0 : index
      %c0_35 = arith.constant 0 : index
      %c16_36 = arith.constant 16 : index
      %50 = vector.load %arg5[%c0_34, %c0_35, %c16_36] : memref<1x16x32xbf16, #tpu.memory_space<vmem>>, vector<1x16x16xbf16>
      %51 = vector.shape_cast %50 : vector<1x16x16xbf16> to vector<16x16xbf16>
      %c0_37 = arith.constant 0 : index
      %c0_38 = arith.constant 0 : index
      %c16_39 = arith.constant 16 : index
      %52 = vector.load %arg6[%c0_37, %c0_38, %c16_39] : memref<1x16x32xbf16, #tpu.memory_space<vmem>>, vector<1x16x16xbf16>
      %53 = vector.shape_cast %52 : vector<1x16x16xbf16> to vector<16x16xbf16>
      %cst_40 = arith.constant dense<0.000000e+00> : vector<16x16xf32>
      %54 = tpu.matmul %49, %51, %cst_40 {dimension_numbers = #tpu.dot_dimension_numbers<[1], [1], [0], [0], [0, 0, 1, 0], [], []>} : vector<16x16xbf16>, vector<16x16xbf16>, vector<16x16xf32> -> vector<16x16xf32>
      %c1 = arith.constant 1 : index
      %c0_41 = arith.constant 0 : index
      %c0_42 = arith.constant 0 : index
      %55 = vector.load %arg8[%c1, %c0_41, %c0_42] : memref<2x16x1xf32, #tpu.memory_space<vmem>>, vector<1x16x1xf32>
      %56 = vector.shape_cast %55 : vector<1x16x1xf32> to vector<16x1xf32>
      %cst_43 = arith.constant dense<0xFF800000> : vector<16xf32>
      %57 = vector.multi_reduction <maximumf>, %54, %cst_43 [1] : vector<16x16xf32> to vector<16xf32>
      %58 = vector.shape_cast %57 : vector<16xf32> to vector<16x1xf32>
      %59 = arith.maximumf %56, %58 : vector<16x1xf32>
      %60 = arith.subf %56, %59 : vector<16x1xf32>
      %61 = math.exp %60 : vector<16x1xf32>
      %62 = vector.broadcast %59 : vector<16x1xf32> to vector<16x16xf32>
      %63 = arith.subf %54, %62 : vector<16x16xf32>
      %64 = math.exp %63 : vector<16x16xf32>
      %c1_44 = arith.constant 1 : index
      %c0_45 = arith.constant 0 : index
      %c0_46 = arith.constant 0 : index
      %65 = vector.load %arg9[%c1_44, %c0_45, %c0_46] : memref<2x16x1xf32, #tpu.memory_space<vmem>>, vector<1x16x1xf32>
      %66 = vector.shape_cast %65 : vector<1x16x1xf32> to vector<16x1xf32>
      %67 = arith.mulf %61, %66 : vector<16x1xf32>
      %cst_47 = arith.constant dense<0.000000e+00> : vector<16xf32>
      %68 = vector.multi_reduction <add>, %64, %cst_47 [1] : vector<16x16xf32> to vector<16xf32>
      %69 = vector.shape_cast %68 : vector<16xf32> to vector<16x1xf32>
      %70 = arith.addf %67, %69 : vector<16x1xf32>
      %c1_48 = arith.constant 1 : index
      %c0_49 = arith.constant 0 : index
      %c0_50 = arith.constant 0 : index
      %71 = vector.load %arg9[%c1_48, %c0_49, %c0_50] : memref<2x16x1xf32, #tpu.memory_space<vmem>>, vector<1x16x1xf32>
      %72 = vector.shape_cast %71 : vector<1x16x1xf32> to vector<16x1xf32>
      %73 = vector.shape_cast %70 : vector<16x1xf32> to vector<1x16x1xf32>
      tpu.vector_store %arg9[%c1_48, %c0_49, %c0_50], %73 {strides = array<i32>} : memref<2x16x1xf32, #tpu.memory_space<vmem>>, vector<1x16x1xf32>,
      %c0_51 = arith.constant 0 : index
      %c16_52 = arith.constant 16 : index
      %74 = vector.load %arg10[%c0_51, %c16_52] : memref<16x32xf32, #tpu.memory_space<vmem>>, vector<16x16xf32>
      %75 = vector.broadcast %61 : vector<16x1xf32> to vector<16x16xf32>
      %76 = arith.mulf %75, %74 : vector<16x16xf32>
      %77 = arith.truncf %64 : vector<16x16xf32> to vector<16x16xbf16>
      %cst_53 = arith.constant dense<0.000000e+00> : vector<16x16xf32>
      %78 = tpu.matmul %77, %53, %cst_53 {dimension_numbers = #tpu.dot_dimension_numbers<[1], [0], [0], [1], [0, 0, 1, 1], [], []>} : vector<16x16xbf16>, vector<16x16xbf16>, vector<16x16xf32> -> vector<16x16xf32>
      %79 = arith.addf %76, %78 : vector<16x16xf32>
      %c0_54 = arith.constant 0 : index
      %c16_55 = arith.constant 16 : index
      %80 = vector.load %arg10[%c0_54, %c16_55] : memref<16x32xf32, #tpu.memory_space<vmem>>, vector<16x16xf32>
      tpu.vector_store %arg10[%c0_54, %c16_55], %79 {strides = array<i32>} : memref<16x32xf32, #tpu.memory_space<vmem>>, vector<16x16xf32>,
      %c1_56 = arith.constant 1 : index
      %c0_57 = arith.constant 0 : index
      %c0_58 = arith.constant 0 : index
      %81 = vector.load %arg8[%c1_56, %c0_57, %c0_58] : memref<2x16x1xf32, #tpu.memory_space<vmem>>, vector<1x16x1xf32>
      %82 = vector.shape_cast %81 : vector<1x16x1xf32> to vector<16x1xf32>
      %83 = vector.shape_cast %59 : vector<16x1xf32> to vector<1x16x1xf32>
      tpu.vector_store %arg8[%c1_56, %c0_57, %c0_58], %83 {strides = array<i32>} : memref<2x16x1xf32, #tpu.memory_space<vmem>>, vector<1x16x1xf32>,
    } else {
    }
    %6 = arith.cmpi eq, %arg3, %arg2 : i32
    %7 = arith.extui %6 : i1 to i32
    %c0_i32_2 = arith.constant 0 : i32
    %8 = arith.cmpi ne, %7, %c0_i32_2 : i32
    scf.if %8 {
      %c16_i32 = arith.constant 16 : i32
      %12 = arith.muli %arg2, %c16_i32 : i32
      %13 = tpu.iota {dimensions = array<i32: 0>} : vector<16x16xi32>
      %14 = vector.broadcast %12 : i32 to vector<16x16xi32>
      %15 = arith.addi %14, %13 : vector<16x16xi32>
      %c16_i32_5 = arith.constant 16 : i32
      %16 = arith.muli %arg3, %c16_i32_5 : i32
      %17 = tpu.iota {dimensions = array<i32: 1>} : vector<16x16xi32>
      %18 = vector.broadcast %16 : i32 to vector<16x16xi32>
      %19 = arith.addi %18, %17 : vector<16x16xi32>
      %20 = arith.cmpi sle, %19, %15 : vector<16x16xi32>
      %c0 = arith.constant 0 : index
      %c0_6 = arith.constant 0 : index
      %c0_7 = arith.constant 0 : index
      %21 = vector.load %arg4[%c0, %c0_6, %c0_7] : memref<1x16x32xbf16, #tpu.memory_space<vmem>>, vector<1x16x16xbf16>
      %22 = vector.shape_cast %21 : vector<1x16x16xbf16> to vector<16x16xbf16>
      %c0_8 = arith.constant 0 : index
      %c0_9 = arith.constant 0 : index
      %c0_10 = arith.constant 0 : index
      %23 = vector.load %arg5[%c0_8, %c0_9, %c0_10] : memref<1x16x32xbf16, #tpu.memory_space<vmem>>, vector<1x16x16xbf16>
      %24 = vector.shape_cast %23 : vector<1x16x16xbf16> to vector<16x16xbf16>
      %c0_11 = arith.constant 0 : index
      %c0_12 = arith.constant 0 : index
      %c0_13 = arith.constant 0 : index
      %25 = vector.load %arg6[%c0_11, %c0_12, %c0_13] : memref<1x16x32xbf16, #tpu.memory_space<vmem>>, vector<1x16x16xbf16>
      %26 = vector.shape_cast %25 : vector<1x16x16xbf16> to vector<16x16xbf16>
      %cst = arith.constant dense<0.000000e+00> : vector<16x16xf32>
      %27 = tpu.matmul %22, %24, %cst {dimension_numbers = #tpu.dot_dimension_numbers<[1], [1], [0], [0], [0, 0, 1, 0], [], []>} : vector<16x16xbf16>, vector<16x16xbf16>, vector<16x16xf32> -> vector<16x16xf32>
      %cst_14 = arith.constant -1.000000e+30 : f32
      %28 = vector.broadcast %cst_14 : f32 to vector<16x16xf32>
      %29 = arith.select %20, %27, %28 : vector<16x16xi1>, vector<16x16xf32>
      %c0_15 = arith.constant 0 : index
      %c0_16 = arith.constant 0 : index
      %c0_17 = arith.constant 0 : index
      %30 = vector.load %arg8[%c0_15, %c0_16, %c0_17] : memref<2x16x1xf32, #tpu.memory_space<vmem>>, vector<1x16x1xf32>
      %31 = vector.shape_cast %30 : vector<1x16x1xf32> to vector<16x1xf32>
      %cst_18 = arith.constant dense<0xFF800000> : vector<16xf32>
      %32 = vector.multi_reduction <maximumf>, %29, %cst_18 [1] : vector<16x16xf32> to vector<16xf32>
      %33 = vector.shape_cast %32 : vector<16xf32> to vector<16x1xf32>
      %34 = arith.maximumf %31, %33 : vector<16x1xf32>
      %35 = arith.subf %31, %34 : vector<16x1xf32>
      %36 = math.exp %35 : vector<16x1xf32>
      %37 = vector.broadcast %34 : vector<16x1xf32> to vector<16x16xf32>
      %38 = arith.subf %29, %37 : vector<16x16xf32>
      %39 = math.exp %38 : vector<16x16xf32>
      %c0_19 = arith.constant 0 : index
      %c0_20 = arith.constant 0 : index
      %c0_21 = arith.constant 0 : index
      %40 = vector.load %arg9[%c0_19, %c0_20, %c0_21] : memref<2x16x1xf32, #tpu.memory_space<vmem>>, vector<1x16x1xf32>
      %41 = vector.shape_cast %40 : vector<1x16x1xf32> to vector<16x1xf32>
      %42 = arith.mulf %36, %41 : vector<16x1xf32>
      %cst_22 = arith.constant dense<0.000000e+00> : vector<16xf32>
      %43 = vector.multi_reduction <add>, %39, %cst_22 [1] : vector<16x16xf32> to vector<16xf32>
      %44 = vector.shape_cast %43 : vector<16xf32> to vector<16x1xf32>
      %45 = arith.addf %42, %44 : vector<16x1xf32>
      %c0_23 = arith.constant 0 : index
      %c0_24 = arith.constant 0 : index
      %c0_25 = arith.constant 0 : index
      %46 = vector.load %arg9[%c0_23, %c0_24, %c0_25] : memref<2x16x1xf32, #tpu.memory_space<vmem>>, vector<1x16x1xf32>
      %47 = vector.shape_cast %46 : vector<1x16x1xf32> to vector<16x1xf32>
      %48 = vector.shape_cast %45 : vector<16x1xf32> to vector<1x16x1xf32>
      tpu.vector_store %arg9[%c0_23, %c0_24, %c0_25], %48 {strides = array<i32>} : memref<2x16x1xf32, #tpu.memory_space<vmem>>, vector<1x16x1xf32>,
      %c0_26 = arith.constant 0 : index
      %c0_27 = arith.constant 0 : index
      %49 = vector.load %arg10[%c0_26, %c0_27] : memref<16x32xf32, #tpu.memory_space<vmem>>, vector<16x16xf32>
      %50 = vector.broadcast %36 : vector<16x1xf32> to vector<16x16xf32>
      %51 = arith.mulf %50, %49 : vector<16x16xf32>
      %52 = arith.truncf %39 : vector<16x16xf32> to vector<16x16xbf16>
      %cst_28 = arith.constant dense<0.000000e+00> : vector<16x16xf32>
      %53 = tpu.matmul %52, %26, %cst_28 {dimension_numbers = #tpu.dot_dimension_numbers<[1], [0], [0], [1], [0, 0, 1, 1], [], []>} : vector<16x16xbf16>, vector<16x16xbf16>, vector<16x16xf32> -> vector<16x16xf32>
      %54 = arith.addf %51, %53 : vector<16x16xf32>
      %c0_29 = arith.constant 0 : index
      %c0_30 = arith.constant 0 : index
      %55 = vector.load %arg10[%c0_29, %c0_30] : memref<16x32xf32, #tpu.memory_space<vmem>>, vector<16x16xf32>
      tpu.vector_store %arg10[%c0_29, %c0_30], %54 {strides = array<i32>} : memref<16x32xf32, #tpu.memory_space<vmem>>, vector<16x16xf32>,
      %c0_31 = arith.constant 0 : index
      %c0_32 = arith.constant 0 : index
      %c0_33 = arith.constant 0 : index
      %56 = vector.load %arg8[%c0_31, %c0_32, %c0_33] : memref<2x16x1xf32, #tpu.memory_space<vmem>>, vector<1x16x1xf32>
      %57 = vector.shape_cast %56 : vector<1x16x1xf32> to vector<16x1xf32>
      %58 = vector.shape_cast %34 : vector<16x1xf32> to vector<1x16x1xf32>
      tpu.vector_store %arg8[%c0_31, %c0_32, %c0_33], %58 {strides = array<i32>} : memref<2x16x1xf32, #tpu.memory_space<vmem>>, vector<1x16x1xf32>,
      %c0_34 = arith.constant 0 : index
      %c0_35 = arith.constant 0 : index
      %c16 = arith.constant 16 : index
      %59 = vector.load %arg4[%c0_34, %c0_35, %c16] : memref<1x16x32xbf16, #tpu.memory_space<vmem>>, vector<1x16x16xbf16>
      %60 = vector.shape_cast %59 : vector<1x16x16xbf16> to vector<16x16xbf16>
      %c0_36 = arith.constant 0 : index
      %c0_37 = arith.constant 0 : index
      %c16_38 = arith.constant 16 : index
      %61 = vector.load %arg5[%c0_36, %c0_37, %c16_38] : memref<1x16x32xbf16, #tpu.memory_space<vmem>>, vector<1x16x16xbf16>
      %62 = vector.shape_cast %61 : vector<1x16x16xbf16> to vector<16x16xbf16>
      %c0_39 = arith.constant 0 : index
      %c0_40 = arith.constant 0 : index
      %c16_41 = arith.constant 16 : index
      %63 = vector.load %arg6[%c0_39, %c0_40, %c16_41] : memref<1x16x32xbf16, #tpu.memory_space<vmem>>, vector<1x16x16xbf16>
      %64 = vector.shape_cast %63 : vector<1x16x16xbf16> to vector<16x16xbf16>
      %cst_42 = arith.constant dense<0.000000e+00> : vector<16x16xf32>
      %65 = tpu.matmul %60, %62, %cst_42 {dimension_numbers = #tpu.dot_dimension_numbers<[1], [1], [0], [0], [0, 0, 1, 0], [], []>} : vector<16x16xbf16>, vector<16x16xbf16>, vector<16x16xf32> -> vector<16x16xf32>
      %cst_43 = arith.constant -1.000000e+30 : f32
      %66 = vector.broadcast %cst_43 : f32 to vector<16x16xf32>
      %67 = arith.select %20, %65, %66 : vector<16x16xi1>, vector<16x16xf32>
      %c1 = arith.constant 1 : index
      %c0_44 = arith.constant 0 : index
      %c0_45 = arith.constant 0 : index
      %68 = vector.load %arg8[%c1, %c0_44, %c0_45] : memref<2x16x1xf32, #tpu.memory_space<vmem>>, vector<1x16x1xf32>
      %69 = vector.shape_cast %68 : vector<1x16x1xf32> to vector<16x1xf32>
      %cst_46 = arith.constant dense<0xFF800000> : vector<16xf32>
      %70 = vector.multi_reduction <maximumf>, %67, %cst_46 [1] : vector<16x16xf32> to vector<16xf32>
      %71 = vector.shape_cast %70 : vector<16xf32> to vector<16x1xf32>
      %72 = arith.maximumf %69, %71 : vector<16x1xf32>
      %73 = arith.subf %69, %72 : vector<16x1xf32>
      %74 = math.exp %73 : vector<16x1xf32>
      %75 = vector.broadcast %72 : vector<16x1xf32> to vector<16x16xf32>
      %76 = arith.subf %67, %75 : vector<16x16xf32>
      %77 = math.exp %76 : vector<16x16xf32>
      %c1_47 = arith.constant 1 : index
      %c0_48 = arith.constant 0 : index
      %c0_49 = arith.constant 0 : index
      %78 = vector.load %arg9[%c1_47, %c0_48, %c0_49] : memref<2x16x1xf32, #tpu.memory_space<vmem>>, vector<1x16x1xf32>
      %79 = vector.shape_cast %78 : vector<1x16x1xf32> to vector<16x1xf32>
      %80 = arith.mulf %74, %79 : vector<16x1xf32>
      %cst_50 = arith.constant dense<0.000000e+00> : vector<16xf32>
      %81 = vector.multi_reduction <add>, %77, %cst_50 [1] : vector<16x16xf32> to vector<16xf32>
      %82 = vector.shape_cast %81 : vector<16xf32> to vector<16x1xf32>
      %83 = arith.addf %80, %82 : vector<16x1xf32>
      %c1_51 = arith.constant 1 : index
      %c0_52 = arith.constant 0 : index
      %c0_53 = arith.constant 0 : index
      %84 = vector.load %arg9[%c1_51, %c0_52, %c0_53] : memref<2x16x1xf32, #tpu.memory_space<vmem>>, vector<1x16x1xf32>
      %85 = vector.shape_cast %84 : vector<1x16x1xf32> to vector<16x1xf32>
      %86 = vector.shape_cast %83 : vector<16x1xf32> to vector<1x16x1xf32>
      tpu.vector_store %arg9[%c1_51, %c0_52, %c0_53], %86 {strides = array<i32>} : memref<2x16x1xf32, #tpu.memory_space<vmem>>, vector<1x16x1xf32>,
      %c0_54 = arith.constant 0 : index
      %c16_55 = arith.constant 16 : index
      %87 = vector.load %arg10[%c0_54, %c16_55] : memref<16x32xf32, #tpu.memory_space<vmem>>, vector<16x16xf32>
      %88 = vector.broadcast %74 : vector<16x1xf32> to vector<16x16xf32>
      %89 = arith.mulf %88, %87 : vector<16x16xf32>
      %90 = arith.truncf %77 : vector<16x16xf32> to vector<16x16xbf16>
      %cst_56 = arith.constant dense<0.000000e+00> : vector<16x16xf32>
      %91 = tpu.matmul %90, %64, %cst_56 {dimension_numbers = #tpu.dot_dimension_numbers<[1], [0], [0], [1], [0, 0, 1, 1], [], []>} : vector<16x16xbf16>, vector<16x16xbf16>, vector<16x16xf32> -> vector<16x16xf32>
      %92 = arith.addf %89, %91 : vector<16x16xf32>
      %c0_57 = arith.constant 0 : index
      %c16_58 = arith.constant 16 : index
      %93 = vector.load %arg10[%c0_57, %c16_58] : memref<16x32xf32, #tpu.memory_space<vmem>>, vector<16x16xf32>
      tpu.vector_store %arg10[%c0_57, %c16_58], %92 {strides = array<i32>} : memref<16x32xf32, #tpu.memory_space<vmem>>, vector<16x16xf32>,
      %c1_59 = arith.constant 1 : index
      %c0_60 = arith.constant 0 : index
      %c0_61 = arith.constant 0 : index
      %94 = vector.load %arg8[%c1_59, %c0_60, %c0_61] : memref<2x16x1xf32, #tpu.memory_space<vmem>>, vector<1x16x1xf32>
      %95 = vector.shape_cast %94 : vector<1x16x1xf32> to vector<16x1xf32>
      %96 = vector.shape_cast %72 : vector<16x1xf32> to vector<1x16x1xf32>
      tpu.vector_store %arg8[%c1_59, %c0_60, %c0_61], %96 {strides = array<i32>} : memref<2x16x1xf32, #tpu.memory_space<vmem>>, vector<1x16x1xf32>,
    } else {
    }
    %c0_i32_3 = arith.constant 0 : i32
    %9 = arith.cmpi eq, %arg3, %c0_i32_3 : i32
    %10 = arith.extui %9 : i1 to i32
    %c0_i32_4 = arith.constant 0 : i32
    %11 = arith.cmpi ne, %10, %c0_i32_4 : i32
    scf.if %11 {
      %c0 = arith.constant 0 : index
      %c0_5 = arith.constant 0 : index
      %12 = vector.load %arg10[%c0, %c0_5] : memref<16x32xf32, #tpu.memory_space<vmem>>, vector<16x16xf32>
      %c0_6 = arith.constant 0 : index
      %c0_7 = arith.constant 0 : index
      %c0_8 = arith.constant 0 : index
      %13 = vector.load %arg9[%c0_6, %c0_7, %c0_8] : memref<2x16x1xf32, #tpu.memory_space<vmem>>, vector<1x16x1xf32>
      %14 = vector.shape_cast %13 : vector<1x16x1xf32> to vector<16x1xf32>
      %15 = tpu.reciprocal %14 {approx = true} : vector<16x1xf32> -> vector<16x1xf32>
      %16 = vector.broadcast %15 : vector<16x1xf32> to vector<16x16xf32>
      %17 = arith.mulf %12, %16 : vector<16x16xf32>
      %c0_9 = arith.constant 0 : index
      %c0_10 = arith.constant 0 : index
      %18 = vector.load %arg10[%c0_9, %c0_10] : memref<16x32xf32, #tpu.memory_space<vmem>>, vector<16x16xf32>
      tpu.vector_store %arg10[%c0_9, %c0_10], %17 {strides = array<i32>} : memref<16x32xf32, #tpu.memory_space<vmem>>, vector<16x16xf32>,
      %c0_11 = arith.constant 0 : index
      %c16 = arith.constant 16 : index
      %19 = vector.load %arg10[%c0_11, %c16] : memref<16x32xf32, #tpu.memory_space<vmem>>, vector<16x16xf32>
      %c1 = arith.constant 1 : index
      %c0_12 = arith.constant 0 : index
      %c0_13 = arith.constant 0 : index
      %20 = vector.load %arg9[%c1, %c0_12, %c0_13] : memref<2x16x1xf32, #tpu.memory_space<vmem>>, vector<1x16x1xf32>
      %21 = vector.shape_cast %20 : vector<1x16x1xf32> to vector<16x1xf32>
      %22 = tpu.reciprocal %21 {approx = true} : vector<16x1xf32> -> vector<16x1xf32>
      %23 = vector.broadcast %22 : vector<16x1xf32> to vector<16x16xf32>
      %24 = arith.mulf %19, %23 : vector<16x16xf32>
      %c0_14 = arith.constant 0 : index
      %c16_15 = arith.constant 16 : index
      %25 = vector.load %arg10[%c0_14, %c16_15] : memref<16x32xf32, #tpu.memory_space<vmem>>, vector<16x16xf32>
      tpu.vector_store %arg10[%c0_14, %c16_15], %24 {strides = array<i32>} : memref<16x32xf32, #tpu.memory_space<vmem>>, vector<16x16xf32>,
      %c0_16 = arith.constant 0 : index
      %c0_17 = arith.constant 0 : index
      %26 = vector.load %arg10[%c0_16, %c0_17] : memref<16x32xf32, #tpu.memory_space<vmem>>, vector<16x32xf32>
      %27 = arith.truncf %26 : vector<16x32xf32> to vector<16x32xbf16>
      %c0_18 = arith.constant 0 : index
      %c0_19 = arith.constant 0 : index
      %c0_20 = arith.constant 0 : index
      %28 = vector.load %arg7[%c0_18, %c0_19, %c0_20] : memref<1x16x32xbf16, #tpu.memory_space<vmem>>, vector<1x16x32xbf16>
      %29 = vector.shape_cast %28 : vector<1x16x32xbf16> to vector<16x32xbf16>
      %30 = vector.shape_cast %27 : vector<16x32xbf16> to vector<1x16x32xbf16>
      tpu.vector_store %arg7[%c0_18, %c0_19, %c0_20], %30 {strides = array<i32>} : memref<1x16x32xbf16, #tpu.memory_space<vmem>>, vector<1x16x32xbf16>,
    } else {
    }
    return
  }
  func.func @transform_0(%arg0: i32, %arg1: i32, %arg2: i32, %arg3: i32) -> (i32, i32, i32) {
    %c0_i32 = arith.constant 0 : i32
    return %arg0, %arg2, %arg1 : i32, i32, i32
  }
  func.func @transform_1(%arg0: i32, %arg1: i32, %arg2: i32, %arg3: i32) -> (i32, i32, i32) {
    %0 = arith.minsi %arg3, %arg2 : i32
    %c0_i32 = arith.constant 0 : i32
    return %arg0, %0, %arg1 : i32, i32, i32
  }
  func.func @transform_2(%arg0: i32, %arg1: i32, %arg2: i32, %arg3: i32) -> (i32, i32, i32) {
    %0 = arith.minsi %arg3, %arg2 : i32
    %c0_i32 = arith.constant 0 : i32
    return %arg0, %0, %arg1 : i32, i32, i32
  }
  func.func @transform_3(%arg0: i32, %arg1: i32, %arg2: i32, %arg3: i32) -> (i32, i32, i32) {
    %c0_i32 = arith.constant 0 : i32
    return %arg0, %arg2, %arg1 : i32, i32, i32
  }
}

module attributes {stable_mosaic.version = 11 : i64} {
  func.func @_matmul_resid_kernel(%arg0: i32, %arg1: i32, %arg2: i32, %arg3: memref<32x32xbf16, #tpu.memory_space<vmem>>, %arg4: memref<32x32xbf16, #tpu.memory_space<vmem>>, %arg5: memref<1x32xf32, #tpu.memory_space<vmem>>, %arg6: memref<32x32xbf16, #tpu.memory_space<vmem>>, %arg7: memref<32x32xbf16, #tpu.memory_space<vmem>>, %arg8: memref<32x32xf32, #tpu.memory_space<vmem>>) attributes {dimension_semantics = [#tpu.dimension_semantics<parallel>, #tpu.dimension_semantics<parallel>, #tpu.dimension_semantics<arbitrary>], iteration_bounds = array<i64: 1, 1, 1>, scalar_prefetch = 0 : i64, scratch_operands = 1 : i64, tpu.core_type = #tpu.core_type<tc>, window_params = [{transform_indices = @transform_0, window_bounds = array<i64: 32, 32>}, {transform_indices = @transform_1, window_bounds = array<i64: 32, 32>}, {transform_indices = @transform_2, window_bounds = array<i64: 1, 32>}, {transform_indices = @transform_3, window_bounds = array<i64: 32, 32>}, {transform_indices = @transform_4, window_bounds = array<i64: 32, 32>}]} {
    %c0_i32 = arith.constant 0 : i32
    %0 = arith.cmpi eq, %arg2, %c0_i32 : i32
    %1 = arith.extui %0 : i1 to i32
    %c0_i32_0 = arith.constant 0 : i32
    %2 = arith.cmpi ne, %1, %c0_i32_0 : i32
    scf.if %2 {
      %cst_10 = arith.constant 0.000000e+00 : f32
      %12 = vector.broadcast %cst_10 : f32 to vector<32x32xf32>
      %c0_11 = arith.constant 0 : index
      %c0_12 = arith.constant 0 : index
      %13 = vector.load %arg8[%c0_11, %c0_12] : memref<32x32xf32, #tpu.memory_space<vmem>>, vector<32x32xf32>
      tpu.vector_store %arg8[%c0_11, %c0_12], %12 {strides = array<i32>} : memref<32x32xf32, #tpu.memory_space<vmem>>, vector<32x32xf32>,
    } else {
    }
    %c0 = arith.constant 0 : index
    %c0_1 = arith.constant 0 : index
    %3 = vector.load %arg8[%c0, %c0_1] : memref<32x32xf32, #tpu.memory_space<vmem>>, vector<32x32xf32>
    %c0_2 = arith.constant 0 : index
    %c0_3 = arith.constant 0 : index
    %4 = vector.load %arg3[%c0_2, %c0_3] : memref<32x32xbf16, #tpu.memory_space<vmem>>, vector<32x32xbf16>
    %c0_4 = arith.constant 0 : index
    %c0_5 = arith.constant 0 : index
    %5 = vector.load %arg4[%c0_4, %c0_5] : memref<32x32xbf16, #tpu.memory_space<vmem>>, vector<32x32xbf16>
    %cst = arith.constant dense<0.000000e+00> : vector<32x32xf32>
    %6 = tpu.matmul %4, %5, %cst {dimension_numbers = #tpu.dot_dimension_numbers<[1], [0], [0], [1], [0, 0, 1, 1], [], []>} : vector<32x32xbf16>, vector<32x32xbf16>, vector<32x32xf32> -> vector<32x32xf32>
    %7 = arith.addf %3, %6 : vector<32x32xf32>
    %c0_6 = arith.constant 0 : index
    %c0_7 = arith.constant 0 : index
    %8 = vector.load %arg8[%c0_6, %c0_7] : memref<32x32xf32, #tpu.memory_space<vmem>>, vector<32x32xf32>
    tpu.vector_store %arg8[%c0_6, %c0_7], %7 {strides = array<i32>} : memref<32x32xf32, #tpu.memory_space<vmem>>, vector<32x32xf32>,
    %c0_i32_8 = arith.constant 0 : i32
    %9 = arith.cmpi eq, %arg2, %c0_i32_8 : i32
    %10 = arith.extui %9 : i1 to i32
    %c0_i32_9 = arith.constant 0 : i32
    %11 = arith.cmpi ne, %10, %c0_i32_9 : i32
    scf.if %11 {
      %c0_10 = arith.constant 0 : index
      %c0_11 = arith.constant 0 : index
      %12 = vector.load %arg8[%c0_10, %c0_11] : memref<32x32xf32, #tpu.memory_space<vmem>>, vector<32x32xf32>
      %c0_12 = arith.constant 0 : index
      %c0_13 = arith.constant 0 : index
      %13 = vector.load %arg5[%c0_12, %c0_13] : memref<1x32xf32, #tpu.memory_space<vmem>>, vector<1x32xf32>
      %14 = vector.broadcast %13 : vector<1x32xf32> to vector<32x32xf32>
      %15 = arith.addf %12, %14 : vector<32x32xf32>
      %c0_14 = arith.constant 0 : index
      %c0_15 = arith.constant 0 : index
      %16 = vector.load %arg6[%c0_14, %c0_15] : memref<32x32xbf16, #tpu.memory_space<vmem>>, vector<32x32xbf16>
      %17 = arith.extf %16 : vector<32x32xbf16> to vector<32x32xf32>
      %18 = arith.addf %15, %17 : vector<32x32xf32>
      %19 = arith.truncf %18 : vector<32x32xf32> to vector<32x32xbf16>
      %c0_16 = arith.constant 0 : index
      %c0_17 = arith.constant 0 : index
      %20 = vector.load %arg7[%c0_16, %c0_17] : memref<32x32xbf16, #tpu.memory_space<vmem>>, vector<32x32xbf16>
      tpu.vector_store %arg7[%c0_16, %c0_17], %19 {strides = array<i32>} : memref<32x32xbf16, #tpu.memory_space<vmem>>, vector<32x32xbf16>,
    } else {
    }
    return
  }
  func.func @transform_0(%arg0: i32, %arg1: i32, %arg2: i32) -> (i32, i32) {
    %c0_i32 = arith.constant 0 : i32
    return %arg0, %arg2 : i32, i32
  }
  func.func @transform_1(%arg0: i32, %arg1: i32, %arg2: i32) -> (i32, i32) {
    %c0_i32 = arith.constant 0 : i32
    return %arg2, %arg1 : i32, i32
  }
  func.func @transform_2(%arg0: i32, %arg1: i32, %arg2: i32) -> (i32, i32) {
    %c0_i32 = arith.constant 0 : i32
    %c0_i32_0 = arith.constant 0 : i32
    return %c0_i32, %arg1 : i32, i32
  }
  func.func @transform_3(%arg0: i32, %arg1: i32, %arg2: i32) -> (i32, i32) {
    %c0_i32 = arith.constant 0 : i32
    return %arg0, %arg1 : i32, i32
  }
  func.func @transform_4(%arg0: i32, %arg1: i32, %arg2: i32) -> (i32, i32) {
    %c0_i32 = arith.constant 0 : i32
    return %arg0, %arg1 : i32, i32
  }
}

module attributes {stable_mosaic.version = 11 : i64} {
  func.func @_ln_linear_kernel(%arg0: i32, %arg1: i32, %arg2: memref<32x32xbf16, #tpu.memory_space<vmem>>, %arg3: memref<1x32xf32, #tpu.memory_space<vmem>>, %arg4: memref<1x32xf32, #tpu.memory_space<vmem>>, %arg5: memref<32x128xbf16, #tpu.memory_space<vmem>>, %arg6: memref<1x128xf32, #tpu.memory_space<vmem>>, %arg7: memref<32x128xbf16, #tpu.memory_space<vmem>>, %arg8: memref<32x32xbf16, #tpu.memory_space<vmem>>) attributes {dimension_semantics = [#tpu.dimension_semantics<parallel>, #tpu.dimension_semantics<arbitrary>], iteration_bounds = array<i64: 1, 1>, scalar_prefetch = 0 : i64, scratch_operands = 1 : i64, tpu.core_type = #tpu.core_type<tc>, window_params = [{transform_indices = @transform_0, window_bounds = array<i64: 32, 32>}, {pipeline_mode = #tpu.pipeline_mode<synchronous>, transform_indices = @transform_1, window_bounds = array<i64: 1, 32>}, {pipeline_mode = #tpu.pipeline_mode<synchronous>, transform_indices = @transform_2, window_bounds = array<i64: 1, 32>}, {transform_indices = @transform_3, window_bounds = array<i64: 32, 128>}, {transform_indices = @transform_4, window_bounds = array<i64: 1, 128>}, {transform_indices = @transform_5, window_bounds = array<i64: 32, 128>}]} {
    %c0_i32 = arith.constant 0 : i32
    %0 = arith.cmpi eq, %arg1, %c0_i32 : i32
    %1 = arith.extui %0 : i1 to i32
    %c0_i32_0 = arith.constant 0 : i32
    %2 = arith.cmpi ne, %1, %c0_i32_0 : i32
    scf.if %2 {
      %c0_12 = arith.constant 0 : index
      %c0_13 = arith.constant 0 : index
      %24 = vector.load %arg2[%c0_12, %c0_13] : memref<32x32xbf16, #tpu.memory_space<vmem>>, vector<32x32xbf16>
      %25 = arith.extf %24 : vector<32x32xbf16> to vector<32x32xf32>
      %cst_14 = arith.constant dense<0.000000e+00> : vector<32xf32>
      %26 = vector.multi_reduction <add>, %25, %cst_14 [1] : vector<32x32xf32> to vector<32xf32>
      %27 = vector.shape_cast %26 : vector<32xf32> to vector<32x1xf32>
      %cst_15 = arith.constant 3.200000e+01 : f32
      %28 = vector.broadcast %cst_15 : f32 to vector<32x1xf32>
      %29 = arith.divf %27, %28 : vector<32x1xf32>
      %30 = vector.broadcast %29 : vector<32x1xf32> to vector<32x32xf32>
      %31 = arith.subf %25, %30 : vector<32x32xf32>
      %32 = arith.mulf %31, %31 : vector<32x32xf32>
      %cst_16 = arith.constant dense<0.000000e+00> : vector<32xf32>
      %33 = vector.multi_reduction <add>, %32, %cst_16 [1] : vector<32x32xf32> to vector<32xf32>
      %34 = vector.shape_cast %33 : vector<32xf32> to vector<32x1xf32>
      %cst_17 = arith.constant 3.200000e+01 : f32
      %35 = vector.broadcast %cst_17 : f32 to vector<32x1xf32>
      %36 = arith.divf %34, %35 : vector<32x1xf32>
      %37 = vector.broadcast %29 : vector<32x1xf32> to vector<32x32xf32>
      %38 = arith.subf %25, %37 : vector<32x32xf32>
      %cst_18 = arith.constant 9.99999974E-6 : f32
      %39 = vector.broadcast %cst_18 : f32 to vector<32x1xf32>
      %40 = arith.addf %36, %39 : vector<32x1xf32>
      %41 = math.rsqrt %40 : vector<32x1xf32>
      %42 = vector.broadcast %41 : vector<32x1xf32> to vector<32x32xf32>
      %43 = arith.mulf %38, %42 : vector<32x32xf32>
      %c0_19 = arith.constant 0 : index
      %c0_20 = arith.constant 0 : index
      %44 = vector.load %arg3[%c0_19, %c0_20] : memref<1x32xf32, #tpu.memory_space<vmem>>, vector<1x32xf32>
      %45 = vector.broadcast %44 : vector<1x32xf32> to vector<32x32xf32>
      %46 = arith.mulf %43, %45 : vector<32x32xf32>
      %c0_21 = arith.constant 0 : index
      %c0_22 = arith.constant 0 : index
      %47 = vector.load %arg4[%c0_21, %c0_22] : memref<1x32xf32, #tpu.memory_space<vmem>>, vector<1x32xf32>
      %48 = vector.broadcast %47 : vector<1x32xf32> to vector<32x32xf32>
      %49 = arith.addf %46, %48 : vector<32x32xf32>
      %50 = arith.truncf %49 : vector<32x32xf32> to vector<32x32xbf16>
      %c0_23 = arith.constant 0 : index
      %c0_24 = arith.constant 0 : index
      %51 = vector.load %arg8[%c0_23, %c0_24] : memref<32x32xbf16, #tpu.memory_space<vmem>>, vector<32x32xbf16>
      tpu.vector_store %arg8[%c0_23, %c0_24], %50 {strides = array<i32>} : memref<32x32xbf16, #tpu.memory_space<vmem>>, vector<32x32xbf16>,
    } else {
    }
    %c0 = arith.constant 0 : index
    %c0_1 = arith.constant 0 : index
    %3 = vector.load %arg8[%c0, %c0_1] : memref<32x32xbf16, #tpu.memory_space<vmem>>, vector<32x32xbf16>
    %c0_2 = arith.constant 0 : index
    %c0_3 = arith.constant 0 : index
    %4 = vector.load %arg5[%c0_2, %c0_3] : memref<32x128xbf16, #tpu.memory_space<vmem>>, vector<32x128xbf16>
    %cst = arith.constant dense<0.000000e+00> : vector<32x128xf32>
    %5 = tpu.matmul %3, %4, %cst {dimension_numbers = #tpu.dot_dimension_numbers<[1], [0], [0], [1], [0, 0, 1, 1], [], []>} : vector<32x32xbf16>, vector<32x128xbf16>, vector<32x128xf32> -> vector<32x128xf32>
    %c0_4 = arith.constant 0 : index
    %c0_5 = arith.constant 0 : index
    %6 = vector.load %arg6[%c0_4, %c0_5] : memref<1x128xf32, #tpu.memory_space<vmem>>, vector<1x128xf32>
    %7 = vector.broadcast %6 : vector<1x128xf32> to vector<32x128xf32>
    %8 = arith.addf %5, %7 : vector<32x128xf32>
    %cst_6 = arith.constant 5.000000e-01 : f32
    %9 = vector.broadcast %cst_6 : f32 to vector<32x128xf32>
    %10 = arith.mulf %9, %8 : vector<32x128xf32>
    %cst_7 = arith.constant 4.471500e-02 : f32
    %11 = vector.broadcast %cst_7 : f32 to vector<32x128xf32>
    %12 = arith.mulf %11, %8 : vector<32x128xf32>
    %13 = arith.mulf %12, %8 : vector<32x128xf32>
    %14 = arith.mulf %13, %8 : vector<32x128xf32>
    %15 = arith.addf %8, %14 : vector<32x128xf32>
    %cst_8 = arith.constant 0.797884583 : f32
    %16 = vector.broadcast %cst_8 : f32 to vector<32x128xf32>
    %17 = arith.mulf %16, %15 : vector<32x128xf32>
    %18 = math.tanh %17 : vector<32x128xf32>
    %cst_9 = arith.constant 1.000000e+00 : f32
    %19 = vector.broadcast %cst_9 : f32 to vector<32x128xf32>
    %20 = arith.addf %19, %18 : vector<32x128xf32>
    %21 = arith.mulf %10, %20 : vector<32x128xf32>
    %22 = arith.truncf %21 : vector<32x128xf32> to vector<32x128xbf16>
    %c0_10 = arith.constant 0 : index
    %c0_11 = arith.constant 0 : index
    %23 = vector.load %arg7[%c0_10, %c0_11] : memref<32x128xbf16, #tpu.memory_space<vmem>>, vector<32x128xbf16>
    tpu.vector_store %arg7[%c0_10, %c0_11], %22 {strides = array<i32>} : memref<32x128xbf16, #tpu.memory_space<vmem>>, vector<32x128xbf16>,
    return
  }
  func.func @transform_0(%arg0: i32, %arg1: i32) -> (i32, i32) {
    %c0_i32 = arith.constant 0 : i32
    %c0_i32_0 = arith.constant 0 : i32
    return %arg0, %c0_i32 : i32, i32
  }
  func.func @transform_1(%arg0: i32, %arg1: i32) -> (i32, i32) {
    %c0_i32 = arith.constant 0 : i32
    %c0_i32_0 = arith.constant 0 : i32
    %c0_i32_1 = arith.constant 0 : i32
    return %c0_i32, %c0_i32_0 : i32, i32
  }
  func.func @transform_2(%arg0: i32, %arg1: i32) -> (i32, i32) {
    %c0_i32 = arith.constant 0 : i32
    %c0_i32_0 = arith.constant 0 : i32
    %c0_i32_1 = arith.constant 0 : i32
    return %c0_i32, %c0_i32_0 : i32, i32
  }
  func.func @transform_3(%arg0: i32, %arg1: i32) -> (i32, i32) {
    %c0_i32 = arith.constant 0 : i32
    %c0_i32_0 = arith.constant 0 : i32
    return %c0_i32, %arg1 : i32, i32
  }
  func.func @transform_4(%arg0: i32, %arg1: i32) -> (i32, i32) {
    %c0_i32 = arith.constant 0 : i32
    %c0_i32_0 = arith.constant 0 : i32
    return %c0_i32, %arg1 : i32, i32
  }
  func.func @transform_5(%arg0: i32, %arg1: i32) -> (i32, i32) {
    %c0_i32 = arith.constant 0 : i32
    return %arg0, %arg1 : i32, i32
  }
}

module attributes {stable_mosaic.version = 11 : i64} {
  func.func @_matmul_resid_kernel(%arg0: i32, %arg1: i32, %arg2: i32, %arg3: memref<32x128xbf16, #tpu.memory_space<vmem>>, %arg4: memref<128x32xbf16, #tpu.memory_space<vmem>>, %arg5: memref<1x32xf32, #tpu.memory_space<vmem>>, %arg6: memref<32x32xbf16, #tpu.memory_space<vmem>>, %arg7: memref<32x32xbf16, #tpu.memory_space<vmem>>, %arg8: memref<32x32xf32, #tpu.memory_space<vmem>>) attributes {dimension_semantics = [#tpu.dimension_semantics<parallel>, #tpu.dimension_semantics<parallel>, #tpu.dimension_semantics<arbitrary>], iteration_bounds = array<i64: 1, 1, 1>, scalar_prefetch = 0 : i64, scratch_operands = 1 : i64, tpu.core_type = #tpu.core_type<tc>, window_params = [{transform_indices = @transform_0, window_bounds = array<i64: 32, 128>}, {transform_indices = @transform_1, window_bounds = array<i64: 128, 32>}, {transform_indices = @transform_2, window_bounds = array<i64: 1, 32>}, {transform_indices = @transform_3, window_bounds = array<i64: 32, 32>}, {transform_indices = @transform_4, window_bounds = array<i64: 32, 32>}]} {
    %c0_i32 = arith.constant 0 : i32
    %0 = arith.cmpi eq, %arg2, %c0_i32 : i32
    %1 = arith.extui %0 : i1 to i32
    %c0_i32_0 = arith.constant 0 : i32
    %2 = arith.cmpi ne, %1, %c0_i32_0 : i32
    scf.if %2 {
      %cst_10 = arith.constant 0.000000e+00 : f32
      %12 = vector.broadcast %cst_10 : f32 to vector<32x32xf32>
      %c0_11 = arith.constant 0 : index
      %c0_12 = arith.constant 0 : index
      %13 = vector.load %arg8[%c0_11, %c0_12] : memref<32x32xf32, #tpu.memory_space<vmem>>, vector<32x32xf32>
      tpu.vector_store %arg8[%c0_11, %c0_12], %12 {strides = array<i32>} : memref<32x32xf32, #tpu.memory_space<vmem>>, vector<32x32xf32>,
    } else {
    }
    %c0 = arith.constant 0 : index
    %c0_1 = arith.constant 0 : index
    %3 = vector.load %arg8[%c0, %c0_1] : memref<32x32xf32, #tpu.memory_space<vmem>>, vector<32x32xf32>
    %c0_2 = arith.constant 0 : index
    %c0_3 = arith.constant 0 : index
    %4 = vector.load %arg3[%c0_2, %c0_3] : memref<32x128xbf16, #tpu.memory_space<vmem>>, vector<32x128xbf16>
    %c0_4 = arith.constant 0 : index
    %c0_5 = arith.constant 0 : index
    %5 = vector.load %arg4[%c0_4, %c0_5] : memref<128x32xbf16, #tpu.memory_space<vmem>>, vector<128x32xbf16>
    %cst = arith.constant dense<0.000000e+00> : vector<32x32xf32>
    %6 = tpu.matmul %4, %5, %cst {dimension_numbers = #tpu.dot_dimension_numbers<[1], [0], [0], [1], [0, 0, 1, 1], [], []>} : vector<32x128xbf16>, vector<128x32xbf16>, vector<32x32xf32> -> vector<32x32xf32>
    %7 = arith.addf %3, %6 : vector<32x32xf32>
    %c0_6 = arith.constant 0 : index
    %c0_7 = arith.constant 0 : index
    %8 = vector.load %arg8[%c0_6, %c0_7] : memref<32x32xf32, #tpu.memory_space<vmem>>, vector<32x32xf32>
    tpu.vector_store %arg8[%c0_6, %c0_7], %7 {strides = array<i32>} : memref<32x32xf32, #tpu.memory_space<vmem>>, vector<32x32xf32>,
    %c0_i32_8 = arith.constant 0 : i32
    %9 = arith.cmpi eq, %arg2, %c0_i32_8 : i32
    %10 = arith.extui %9 : i1 to i32
    %c0_i32_9 = arith.constant 0 : i32
    %11 = arith.cmpi ne, %10, %c0_i32_9 : i32
    scf.if %11 {
      %c0_10 = arith.constant 0 : index
      %c0_11 = arith.constant 0 : index
      %12 = vector.load %arg8[%c0_10, %c0_11] : memref<32x32xf32, #tpu.memory_space<vmem>>, vector<32x32xf32>
      %c0_12 = arith.constant 0 : index
      %c0_13 = arith.constant 0 : index
      %13 = vector.load %arg5[%c0_12, %c0_13] : memref<1x32xf32, #tpu.memory_space<vmem>>, vector<1x32xf32>
      %14 = vector.broadcast %13 : vector<1x32xf32> to vector<32x32xf32>
      %15 = arith.addf %12, %14 : vector<32x32xf32>
      %c0_14 = arith.constant 0 : index
      %c0_15 = arith.constant 0 : index
      %16 = vector.load %arg6[%c0_14, %c0_15] : memref<32x32xbf16, #tpu.memory_space<vmem>>, vector<32x32xbf16>
      %17 = arith.extf %16 : vector<32x32xbf16> to vector<32x32xf32>
      %18 = arith.addf %15, %17 : vector<32x32xf32>
      %19 = arith.truncf %18 : vector<32x32xf32> to vector<32x32xbf16>
      %c0_16 = arith.constant 0 : index
      %c0_17 = arith.constant 0 : index
      %20 = vector.load %arg7[%c0_16, %c0_17] : memref<32x32xbf16, #tpu.memory_space<vmem>>, vector<32x32xbf16>
      tpu.vector_store %arg7[%c0_16, %c0_17], %19 {strides = array<i32>} : memref<32x32xbf16, #tpu.memory_space<vmem>>, vector<32x32xbf16>,
    } else {
    }
    return
  }
  func.func @transform_0(%arg0: i32, %arg1: i32, %arg2: i32) -> (i32, i32) {
    %c0_i32 = arith.constant 0 : i32
    return %arg0, %arg2 : i32, i32
  }
  func.func @transform_1(%arg0: i32, %arg1: i32, %arg2: i32) -> (i32, i32) {
    %c0_i32 = arith.constant 0 : i32
    return %arg2, %arg1 : i32, i32
  }
  func.func @transform_2(%arg0: i32, %arg1: i32, %arg2: i32) -> (i32, i32) {
    %c0_i32 = arith.constant 0 : i32
    %c0_i32_0 = arith.constant 0 : i32
    return %c0_i32, %arg1 : i32, i32
  }
  func.func @transform_3(%arg0: i32, %arg1: i32, %arg2: i32) -> (i32, i32) {
    %c0_i32 = arith.constant 0 : i32
    return %arg0, %arg1 : i32, i32
  }
  func.func @transform_4(%arg0: i32, %arg1: i32, %arg2: i32) -> (i32, i32) {
    %c0_i32 = arith.constant 0 : i32
    return %arg0, %arg1 : i32, i32
  }
}

module attributes {stable_mosaic.version = 11 : i64} {
  func.func @_ln_matmul_kernel(%arg0: i32, %arg1: i32, %arg2: memref<32x32xbf16, #tpu.memory_space<vmem>>, %arg3: memref<1x32xf32, #tpu.memory_space<vmem>>, %arg4: memref<1x32xf32, #tpu.memory_space<vmem>>, %arg5: memref<32x128xbf16, #tpu.memory_space<vmem>>, %arg6: memref<32x128xf32, #tpu.memory_space<vmem>>, %arg7: memref<32x32xbf16, #tpu.memory_space<vmem>>) attributes {dimension_semantics = [#tpu.dimension_semantics<parallel>, #tpu.dimension_semantics<arbitrary>], iteration_bounds = array<i64: 1, 1>, scalar_prefetch = 0 : i64, scratch_operands = 1 : i64, tpu.core_type = #tpu.core_type<tc>, window_params = [{transform_indices = @transform_0, window_bounds = array<i64: 32, 32>}, {pipeline_mode = #tpu.pipeline_mode<synchronous>, transform_indices = @transform_1, window_bounds = array<i64: 1, 32>}, {pipeline_mode = #tpu.pipeline_mode<synchronous>, transform_indices = @transform_2, window_bounds = array<i64: 1, 32>}, {transform_indices = @transform_3, window_bounds = array<i64: 32, 128>}, {transform_indices = @transform_4, window_bounds = array<i64: 32, 128>}]} {
    %c0_i32 = arith.constant 0 : i32
    %0 = arith.cmpi eq, %arg1, %c0_i32 : i32
    %1 = arith.extui %0 : i1 to i32
    %c0_i32_0 = arith.constant 0 : i32
    %2 = arith.cmpi ne, %1, %c0_i32_0 : i32
    scf.if %2 {
      %c0_6 = arith.constant 0 : index
      %c0_7 = arith.constant 0 : index
      %7 = vector.load %arg2[%c0_6, %c0_7] : memref<32x32xbf16, #tpu.memory_space<vmem>>, vector<32x32xbf16>
      %8 = arith.extf %7 : vector<32x32xbf16> to vector<32x32xf32>
      %cst_8 = arith.constant dense<0.000000e+00> : vector<32xf32>
      %9 = vector.multi_reduction <add>, %8, %cst_8 [1] : vector<32x32xf32> to vector<32xf32>
      %10 = vector.shape_cast %9 : vector<32xf32> to vector<32x1xf32>
      %cst_9 = arith.constant 3.200000e+01 : f32
      %11 = vector.broadcast %cst_9 : f32 to vector<32x1xf32>
      %12 = arith.divf %10, %11 : vector<32x1xf32>
      %13 = vector.broadcast %12 : vector<32x1xf32> to vector<32x32xf32>
      %14 = arith.subf %8, %13 : vector<32x32xf32>
      %15 = arith.mulf %14, %14 : vector<32x32xf32>
      %cst_10 = arith.constant dense<0.000000e+00> : vector<32xf32>
      %16 = vector.multi_reduction <add>, %15, %cst_10 [1] : vector<32x32xf32> to vector<32xf32>
      %17 = vector.shape_cast %16 : vector<32xf32> to vector<32x1xf32>
      %cst_11 = arith.constant 3.200000e+01 : f32
      %18 = vector.broadcast %cst_11 : f32 to vector<32x1xf32>
      %19 = arith.divf %17, %18 : vector<32x1xf32>
      %20 = vector.broadcast %12 : vector<32x1xf32> to vector<32x32xf32>
      %21 = arith.subf %8, %20 : vector<32x32xf32>
      %cst_12 = arith.constant 9.99999974E-6 : f32
      %22 = vector.broadcast %cst_12 : f32 to vector<32x1xf32>
      %23 = arith.addf %19, %22 : vector<32x1xf32>
      %24 = math.rsqrt %23 : vector<32x1xf32>
      %25 = vector.broadcast %24 : vector<32x1xf32> to vector<32x32xf32>
      %26 = arith.mulf %21, %25 : vector<32x32xf32>
      %c0_13 = arith.constant 0 : index
      %c0_14 = arith.constant 0 : index
      %27 = vector.load %arg3[%c0_13, %c0_14] : memref<1x32xf32, #tpu.memory_space<vmem>>, vector<1x32xf32>
      %28 = vector.broadcast %27 : vector<1x32xf32> to vector<32x32xf32>
      %29 = arith.mulf %26, %28 : vector<32x32xf32>
      %c0_15 = arith.constant 0 : index
      %c0_16 = arith.constant 0 : index
      %30 = vector.load %arg4[%c0_15, %c0_16] : memref<1x32xf32, #tpu.memory_space<vmem>>, vector<1x32xf32>
      %31 = vector.broadcast %30 : vector<1x32xf32> to vector<32x32xf32>
      %32 = arith.addf %29, %31 : vector<32x32xf32>
      %33 = arith.truncf %32 : vector<32x32xf32> to vector<32x32xbf16>
      %c0_17 = arith.constant 0 : index
      %c0_18 = arith.constant 0 : index
      %34 = vector.load %arg7[%c0_17, %c0_18] : memref<32x32xbf16, #tpu.memory_space<vmem>>, vector<32x32xbf16>
      tpu.vector_store %arg7[%c0_17, %c0_18], %33 {strides = array<i32>} : memref<32x32xbf16, #tpu.memory_space<vmem>>, vector<32x32xbf16>,
    } else {
    }
    %c0 = arith.constant 0 : index
    %c0_1 = arith.constant 0 : index
    %3 = vector.load %arg7[%c0, %c0_1] : memref<32x32xbf16, #tpu.memory_space<vmem>>, vector<32x32xbf16>
    %c0_2 = arith.constant 0 : index
    %c0_3 = arith.constant 0 : index
    %4 = vector.load %arg5[%c0_2, %c0_3] : memref<32x128xbf16, #tpu.memory_space<vmem>>, vector<32x128xbf16>
    %cst = arith.constant dense<0.000000e+00> : vector<32x128xf32>
    %5 = tpu.matmul %3, %4, %cst {dimension_numbers = #tpu.dot_dimension_numbers<[1], [0], [0], [1], [0, 0, 1, 1], [], []>} : vector<32x32xbf16>, vector<32x128xbf16>, vector<32x128xf32> -> vector<32x128xf32>
    %c0_4 = arith.constant 0 : index
    %c0_5 = arith.constant 0 : index
    %6 = vector.load %arg6[%c0_4, %c0_5] : memref<32x128xf32, #tpu.memory_space<vmem>>, vector<32x128xf32>
    tpu.vector_store %arg6[%c0_4, %c0_5], %5 {strides = array<i32>} : memref<32x128xf32, #tpu.memory_space<vmem>>, vector<32x128xf32>,
    return
  }
  func.func @transform_0(%arg0: i32, %arg1: i32) -> (i32, i32) {
    %c0_i32 = arith.constant 0 : i32
    %c0_i32_0 = arith.constant 0 : i32
    return %arg0, %c0_i32 : i32, i32
  }
  func.func @transform_1(%arg0: i32, %arg1: i32) -> (i32, i32) {
    %c0_i32 = arith.constant 0 : i32
    %c0_i32_0 = arith.constant 0 : i32
    %c0_i32_1 = arith.constant 0 : i32
    return %c0_i32, %c0_i32_0 : i32, i32
  }
  func.func @transform_2(%arg0: i32, %arg1: i32) -> (i32, i32) {
    %c0_i32 = arith.constant 0 : i32
    %c0_i32_0 = arith.constant 0 : i32
    %c0_i32_1 = arith.constant 0 : i32
    return %c0_i32, %c0_i32_0 : i32, i32
  }
  func.func @transform_3(%arg0: i32, %arg1: i32) -> (i32, i32) {
    %c0_i32 = arith.constant 0 : i32
    %c0_i32_0 = arith.constant 0 : i32
    return %c0_i32, %arg1 : i32, i32
  }
  func.func @transform_4(%arg0: i32, %arg1: i32) -> (i32, i32) {
    %c0_i32 = arith.constant 0 : i32
    return %arg0, %arg1 : i32, i32
  }
}

</mosaic_0001>

<llo_original>
// kernel: gpt_forward.13
$region0: #{gpt_forward.13}
  #allocation0 [shape = 'u32[]', space=smem, size = 0x4, offset = 0x4, fixed_abs, tag = 'smem constant byte address 0x4 - core index']
  #allocation1 [shape = 'u32[72,128]{1,0:T(1,128)}', space=vmem, size = 0x9000, scoped, tag = 'internal scratch']
  #allocation2 [shape = 'f32[32,32]{1,0:T(8,128)}', space=vmem, size = 0x4000, scoped, tag = 'scratch operand']
  %s0 = inlined_call_operand.vmem [shape: bf16[32,32], index: 0, kind: input, shape index: {}]
  %s1 = inlined_call_operand.vmem [shape: bf16[32,32], index: 1, kind: input, shape index: {}]
  %s2 = inlined_call_operand.vmem [shape: f32[1,32], index: 2, kind: input, shape index: {}]
  %s3 = inlined_call_operand.vmem [shape: bf16[32,32], index: 3, kind: input, shape index: {}, may-alias: {3,4}]
  %s4 = inlined_call_operand.vmem [shape: bf16[32,32], index: 4, kind: output, shape index: {}, may-alias: {3,4}]
  %s5 = sld [smem:[#allocation0]]
  $region34: #{gpt_forward.13} parent=0
    _
  %s7 = ssub.s32 1, %s5
  %s8 = scalar_select 0, %s7, %s5
  // Predicated region
  $region2: #{gpt_forward.13} parent=0 // pred_check
    _
  $region3: #{gpt_forward.13} parent=0 // pred_check_branch
    %10 = sbr.rel (0) target = $region5
  $region4: #{gpt_forward.13} parent=0 // pred_region
    _
  $region5: #{gpt_forward.13} parent=0 // pred_fallthru
    _
  // Predicated region
  $region6: #{gpt_forward.13} parent=0 // pred_check
    _
  $region7: #{gpt_forward.13} parent=0 // pred_check_branch
    %12 = sbr.rel (0) target = $region9
  $region8: #{gpt_forward.13} parent=0 // pred_region
    _
  $region9: #{gpt_forward.13} parent=0 // pred_fallthru
    _
  // Predicated region
  $region10: #{gpt_forward.13} parent=0 // pred_check
    _
  $region11: #{gpt_forward.13} parent=0 // pred_check_branch
    %14 = sbr.rel (0) target = $region13
  $region12: #{gpt_forward.13} parent=0 // pred_region
    _
  $region13: #{gpt_forward.13} parent=0 // pred_fallthru
    _
  // Predicated region
  $region14: #{gpt_forward.13} parent=0 // pred_check
    _
  $region15: #{gpt_forward.13} parent=0 // pred_check_branch
    %16 = sbr.rel (0) target = $region17
  $region16: #{gpt_forward.13} parent=0 // pred_region
    _
  $region17: #{gpt_forward.13} parent=0 // pred_fallthru
    _
  %p18 = scmp.eq.s32.totalorder 0, 0
  // Predicated region
  $region18: #{gpt_forward.13} parent=0 // pred_check
    %p19 = pneg %p18
  $region19: #{gpt_forward.13} parent=0 // pred_check_branch
    %21 = sbr.rel (%p19) target = $region21
  $region20: #{gpt_forward.13} parent=0 // pred_region
    %vm22 = vcmask 261120
    %23 = vst.msk [vmem:[#allocation2] sm:$0xff] %vm22, 0.0
    %24 = vst.msk [vmem:[#allocation2 + $0x8] sm:$0xff] %vm22, 0.0
    %25 = vst.msk [vmem:[#allocation2 + $0x10] sm:$0xff] %vm22, 0.0
    %26 = vst.msk [vmem:[#allocation2 + $0x18] sm:$0xff] %vm22, 0.0
  $region21: #{gpt_forward.13} parent=0 // pred_fallthru
    _
  %v27 = vld [vmem:[#allocation2] sm:$0xff]
  %v28 = vld [vmem:[#allocation2 + $0x8] sm:$0xff]
  %v29 = vld [vmem:[#allocation2 + $0x10] sm:$0xff]
  %v30 = vld [vmem:[#allocation2 + $0x18] sm:$0xff]
  %v31 = vld [vmem:[%s0] sm:$0xf]
  %v32 = vld [vmem:[%s0 + $0x4] sm:$0xf]
  %v33 = vld [vmem:[%s0 + $0x8] sm:$0xf]
  %v34 = vld [vmem:[%s0 + $0xc] sm:$0xf]
  %v35 = vld [vmem:[%s1] sm:$0xf]
  %v36 = vld [vmem:[%s1 + $0x4] sm:$0xf]
  %v37 = vld [vmem:[%s1 + $0x8] sm:$0xf]
  %v38 = vld [vmem:[%s1 + $0xc] sm:$0xf]
  %v43 = vunpack.c.l.b16 %v31
  %v44 = vunpack.c.l.b16 %v32
  %v45 = vunpack.c.l.b16 %v33
  %v46 = vunpack.c.l.b16 %v34
  %v47 = vpack.c.b16 %v44, %v43
  %v48 = vpack.c.b16 %v46, %v45
  %v53 = vunpack.c.l.b16 %v35
  %v54 = vunpack.c.l.b16 %v36
  %v55 = vunpack.c.l.b16 %v37
  %v56 = vunpack.c.l.b16 %v38
  %v57 = vpack.c.b16 %v54, %v53
  %v58 = vpack.c.b16 %v56, %v55
  %vm61 = vcmask 261120
  %v63 = vsel %vm61, %v47, 0
  %v66 = vsel %vm61, %v48, 0
  %68 = vmatpush.bf16.msra.mxu0 0
  %69 = vmatpush.bf16.msra.mxu0 0
  %70 = vmatpush.bf16.msra.mxu0 0
  %71 = vmatpush.bf16.msra.mxu0 0
  %72 = vmatpush.bf16.msra.mxu0 0
  %73 = vmatpush.bf16.msra.mxu0 0
  %74 = vmatpush.bf16.msra.mxu0 %v58
  %75 = vmatpush.bf16.msra.mxu0 %v57
  %76 = vmatmul.bf16.gmra.mxu0 %v63
  %v77 = vpop.f32.mrf.mxu0
  %v78 = vadd.f32 0.0, %v77
  %v79 = vpop.f32.mrf.mxu0
  %v80 = vadd.f32 0.0, %v79
  %81 = vmatmul.bf16.gmra.mxu0 %v66
  %v82 = vpop.f32.mrf.mxu0
  %v83 = vadd.f32 0.0, %v82
  %v84 = vpop.f32.mrf.mxu0
  %v85 = vadd.f32 0.0, %v84
  %86 = vdwg.mxu0
  %v87 = vadd.f32 %v27, %v78
  %v88 = vadd.f32 %v28, %v80
  %v89 = vadd.f32 %v29, %v83
  %v90 = vadd.f32 %v30, %v85
  %91 = vst.msk [vmem:[#allocation2] sm:$0xff] %vm61, %v87
  %92 = vst.msk [vmem:[#allocation2 + $0x8] sm:$0xff] %vm61, %v88
  %93 = vst.msk [vmem:[#allocation2 + $0x10] sm:$0xff] %vm61, %v89
  %94 = vst.msk [vmem:[#allocation2 + $0x18] sm:$0xff] %vm61, %v90
  // Predicated region
  $region22: #{gpt_forward.13} parent=0 // pred_check
    %p95 = pneg %p18
  $region23: #{gpt_forward.13} parent=0 // pred_check_branch
    %97 = sbr.rel (%p95) target = $region25
  $region24: #{gpt_forward.13} parent=0 // pred_region
    %v98 = vld [vmem:[#allocation2] sm:$0xff]
    %v99 = vld [vmem:[#allocation2 + $0x8] sm:$0xff]
    %v100 = vld [vmem:[#allocation2 + $0x10] sm:$0xff]
    %v101 = vld [vmem:[#allocation2 + $0x18] sm:$0xff]
    %v102 = vld [vmem:[%s2] sm:$0x1]
    %v104 = vperm.slane %v102, 0
    %v106 = vadd.f32 %v98, %v104
    %v107 = vadd.f32 %v99, %v104
    %v108 = vadd.f32 %v100, %v104
    %v109 = vadd.f32 %v101, %v104
    %v110 = vld [vmem:[%s3] sm:$0xf]
    %v111 = vld [vmem:[%s3 + $0x4] sm:$0xf]
    %v112 = vld [vmem:[%s3 + $0x8] sm:$0xf]
    %v113 = vld [vmem:[%s3 + $0xc] sm:$0xf]
    %v114 = vunpack.c.l.bf16 %v110
    %v115 = vunpack.c.l.bf16 %v111
    %v116 = vunpack.c.l.bf16 %v112
    %v117 = vunpack.c.l.bf16 %v113
    %v118 = vadd.f32 %v106, %v114
    %v119 = vadd.f32 %v107, %v115
    %v120 = vadd.f32 %v108, %v116
    %v121 = vadd.f32 %v109, %v117
    %v122 = vpack.c.bf16 %v118, %v118
    %v123 = vpack.c.bf16 %v119, %v119
    %v124 = vpack.c.bf16 %v120, %v120
    %v125 = vpack.c.bf16 %v121, %v121
    %vm126 = vcmask 257024
    %127 = vst.msk [vmem:[%s4] sm:$0xf] %vm126, %v122
    %128 = vst.msk [vmem:[%s4 + $0x4] sm:$0xf] %vm126, %v123
    %129 = vst.msk [vmem:[%s4 + $0x8] sm:$0xf] %vm126, %v124
    %130 = vst.msk [vmem:[%s4 + $0xc] sm:$0xf] %vm126, %v125
  $region25: #{gpt_forward.13} parent=0 // pred_fallthru
    _
  // Predicated region
  $region26: #{gpt_forward.13} parent=0 // pred_check
    _
  $region27: #{gpt_forward.13} parent=0 // pred_check_branch
    %132 = sbr.rel (0) target = $region29
  $region28: #{gpt_forward.13} parent=0 // pred_region
    _
  $region29: #{gpt_forward.13} parent=0 // pred_fallthru
    _
  // Predicated region
  $region30: #{gpt_forward.13} parent=0 // pred_check
    _
  $region31: #{gpt_forward.13} parent=0 // pred_check_branch
    %134 = sbr.rel (0) target = $region33
  $region32: #{gpt_forward.13} parent=0 // pred_region
    _
  $region33: #{gpt_forward.13} parent=0 // pred_fallthru
    _

// kernel: gpt_forward.11
$region0: #{gpt_forward.11}
  #allocation0 [shape = 'u32[]', space=smem, size = 0x4, offset = 0x4, fixed_abs, tag = 'smem constant byte address 0x4 - core index']
  #allocation1 [shape = 'u32[72,128]{1,0:T(1,128)}', space=vmem, size = 0x9000, scoped, tag = 'internal scratch']
  #allocation2 [shape = 'bf16[32,32]{1,0:T(8,128)(2,1)}', space=vmem, size = 0x2000, scoped, tag = 'scratch operand']
  %s0 = inlined_call_operand.vmem [shape: bf16[32,32], index: 0, kind: input, shape index: {}]
  %s1 = inlined_call_operand.vmem [shape: f32[1,32], index: 1, kind: input, shape index: {}]
  %s2 = inlined_call_operand.vmem [shape: f32[1,32], index: 2, kind: input, shape index: {}]
  %s3 = inlined_call_operand.vmem [shape: bf16[32,96], index: 3, kind: input, shape index: {}]
  %s4 = inlined_call_operand.vmem [shape: f32[1,96], index: 4, kind: input, shape index: {}]
  %s5 = inlined_call_operand.vmem [shape: bf16[32,96], index: 5, kind: output, shape index: {}]
  %s6 = sld [smem:[#allocation0]]
  $region34: #{gpt_forward.11} parent=0
    _
  %s8 = ssub.s32 1, %s6
  %s9 = scalar_select 0, %s8, %s6
  // Predicated region
  $region2: #{gpt_forward.11} parent=0 // pred_check
    _
  $region3: #{gpt_forward.11} parent=0 // pred_check_branch
    %11 = sbr.rel (0) target = $region5
  $region4: #{gpt_forward.11} parent=0 // pred_region
    _
  $region5: #{gpt_forward.11} parent=0 // pred_fallthru
    _
  // Predicated region
  $region6: #{gpt_forward.11} parent=0 // pred_check
    _
  $region7: #{gpt_forward.11} parent=0 // pred_check_branch
    %13 = sbr.rel (0) target = $region9
  $region8: #{gpt_forward.11} parent=0 // pred_region
    _
  $region9: #{gpt_forward.11} parent=0 // pred_fallthru
    _
  // Predicated region
  $region10: #{gpt_forward.11} parent=0 // pred_check
    _
  $region11: #{gpt_forward.11} parent=0 // pred_check_branch
    %15 = sbr.rel (0) target = $region13
  $region12: #{gpt_forward.11} parent=0 // pred_region
    _
  $region13: #{gpt_forward.11} parent=0 // pred_fallthru
    _
  // Predicated region
  $region14: #{gpt_forward.11} parent=0 // pred_check
    _
  $region15: #{gpt_forward.11} parent=0 // pred_check_branch
    %17 = sbr.rel (0) target = $region17
  $region16: #{gpt_forward.11} parent=0 // pred_region
    _
  $region17: #{gpt_forward.11} parent=0 // pred_fallthru
    _
  // Predicated region
  $region18: #{gpt_forward.11} parent=0 // pred_check
    _
  $region19: #{gpt_forward.11} parent=0 // pred_check_branch
    %19 = sbr.rel (0) target = $region21
  $region20: #{gpt_forward.11} parent=0 // pred_region
    _
  $region21: #{gpt_forward.11} parent=0 // pred_fallthru
    _
  %p21 = scmp.eq.s32.totalorder 0, 0
  // Predicated region
  $region22: #{gpt_forward.11} parent=0 // pred_check
    %p22 = pneg %p21
  $region23: #{gpt_forward.11} parent=0 // pred_check_branch
    %24 = sbr.rel (%p22) target = $region25
  $region24: #{gpt_forward.11} parent=0 // pred_region
    %v25 = vld [vmem:[%s0] sm:$0xf]
    %v26 = vld [vmem:[%s0 + $0x4] sm:$0xf]
    %v27 = vld [vmem:[%s0 + $0x8] sm:$0xf]
    %v28 = vld [vmem:[%s0 + $0xc] sm:$0xf]
    %v29 = vunpack.c.l.bf16 %v25
    %v30 = vunpack.c.l.bf16 %v26
    %v31 = vunpack.c.l.bf16 %v27
    %v32 = vunpack.c.l.bf16 %v28
    %vm33 = vcmask 261120
    %v34 = vsel %vm33, %v29, 0.0
    %35 = vadd.xlane.f32.xlu0 %v34
    %v36 = vpop.xlane.xlu0 %35
    %v37 = vsel %vm33, %v30, 0.0
    %38 = vadd.xlane.f32.xlu0 %v37
    %v39 = vpop.xlane.xlu0 %38
    %v40 = vsel %vm33, %v31, 0.0
    %41 = vadd.xlane.f32.xlu0 %v40
    %v42 = vpop.xlane.xlu0 %41
    %v43 = vsel %vm33, %v32, 0.0
    %44 = vadd.xlane.f32.xlu0 %v43
    %v45 = vpop.xlane.xlu0 %44
    %v46 = vrcp.pop 32.0
    %v47 = vmul.f32 32.0, %v46
    %v48 = vsub.f32 1.0, %v47
    %v49 = vmul.f32 %v46, %v48
    %v50 = vadd.f32 %v46, %v49
    %vm51 = vweird.f32 %v46
    %v52 = vsel %vm51, %v46, %v50
    %v53 = vmul.f32 %v36, %v52
    %v54 = vmul.f32 %v39, %v52
    %v55 = vmul.f32 %v42, %v52
    %v56 = vmul.f32 %v45, %v52
    %v57 = vsub.f32 %v29, %v53
    %v58 = vsub.f32 %v30, %v54
    %v59 = vsub.f32 %v31, %v55
    %v60 = vsub.f32 %v32, %v56
    %v61 = vmul.f32 %v57, %v57
    %v62 = vmul.f32 %v58, %v58
    %v63 = vmul.f32 %v59, %v59
    %v64 = vmul.f32 %v60, %v60
    %v65 = vsel %vm33, %v61, 0.0
    %66 = vadd.xlane.f32.xlu0 %v65
    %v67 = vpop.xlane.xlu0 %66
    %v68 = vsel %vm33, %v62, 0.0
    %69 = vadd.xlane.f32.xlu0 %v68
    %v70 = vpop.xlane.xlu0 %69
    %v71 = vsel %vm33, %v63, 0.0
    %72 = vadd.xlane.f32.xlu0 %v71
    %v73 = vpop.xlane.xlu0 %72
    %v74 = vsel %vm33, %v64, 0.0
    %75 = vadd.xlane.f32.xlu0 %v74
    %v76 = vpop.xlane.xlu0 %75
    %v77 = vmul.f32 %v67, %v52
    %v78 = vmul.f32 %v70, %v52
    %v79 = vmul.f32 %v73, %v52
    %v80 = vmul.f32 %v76, %v52
    %v81 = vadd.f32 %v77, 1e-05
    %v82 = vadd.f32 %v78, 1e-05
    %v83 = vadd.f32 %v79, 1e-05
    %v84 = vadd.f32 %v80, 1e-05
    %v85 = vrsqrt.pop %v81
    %v86 = vmul.f32 %v85, %v81
    %v87 = vmul.f32 %v86, %v85
    %v88 = vmul.f32 0.5, %v87
    %v89 = vsub.f32 1.5, %v88
    %v90 = vmul.f32 %v85, %v89
    %vm91 = vweird.f32 %v81
    %vm92 = vweird.f32 %v85
    %vm93 = vmor %vm91, %vm92
    %v94 = vsel %vm93, %v85, %v90
    %v95 = vrsqrt.pop %v82
    %v96 = vmul.f32 %v95, %v82
    %v97 = vmul.f32 %v96, %v95
    %v98 = vmul.f32 0.5, %v97
    %v99 = vsub.f32 1.5, %v98
    %v100 = vmul.f32 %v95, %v99
    %vm101 = vweird.f32 %v82
    %vm102 = vweird.f32 %v95
    %vm103 = vmor %vm101, %vm102
    %v104 = vsel %vm103, %v95, %v100
    %v105 = vrsqrt.pop %v83
    %v106 = vmul.f32 %v105, %v83
    %v107 = vmul.f32 %v106, %v105
    %v108 = vmul.f32 0.5, %v107
    %v109 = vsub.f32 1.5, %v108
    %v110 = vmul.f32 %v105, %v109
    %vm111 = vweird.f32 %v83
    %vm112 = vweird.f32 %v105
    %vm113 = vmor %vm111, %vm112
    %v114 = vsel %vm113, %v105, %v110
    %v115 = vrsqrt.pop %v84
    %v116 = vmul.f32 %v115, %v84
    %v117 = vmul.f32 %v116, %v115
    %v118 = vmul.f32 0.5, %v117
    %v119 = vsub.f32 1.5, %v118
    %v120 = vmul.f32 %v115, %v119
    %vm121 = vweird.f32 %v84
    %vm122 = vweird.f32 %v115
    %vm123 = vmor %vm121, %vm122
    %v124 = vsel %vm123, %v115, %v120
    %v125 = vmul.f32 %v57, %v94
    %v126 = vmul.f32 %v58, %v104
    %v127 = vmul.f32 %v59, %v114
    %v128 = vmul.f32 %v60, %v124
    %v129 = vld [vmem:[%s1] sm:$0x1]
    %v131 = vperm.slane %v129, 0
    %v133 = vmul.f32 %v125, %v131
    %v134 = vmul.f32 %v126, %v131
    %v135 = vmul.f32 %v127, %v131
    %v136 = vmul.f32 %v128, %v131
    %v137 = vld [vmem:[%s2] sm:$0x1]
    %v139 = vperm.slane %v137, 0
    %v141 = vadd.f32 %v133, %v139
    %v142 = vadd.f32 %v134, %v139
    %v143 = vadd.f32 %v135, %v139
    %v144 = vadd.f32 %v136, %v139
    %v145 = vpack.c.bf16 %v141, %v141
    %v146 = vpack.c.bf16 %v142, %v142
    %v147 = vpack.c.bf16 %v143, %v143
    %v148 = vpack.c.bf16 %v144, %v144
    %vm149 = vcmask 257024
    %150 = vst.msk [vmem:[#allocation2] sm:$0xf] %vm149, %v145
    %151 = vst.msk [vmem:[#allocation2 + $0x4] sm:$0xf] %vm149, %v146
    %152 = vst.msk [vmem:[#allocation2 + $0x8] sm:$0xf] %vm149, %v147
    %153 = vst.msk [vmem:[#allocation2 + $0xc] sm:$0xf] %vm149, %v148
  $region25: #{gpt_forward.11} parent=0 // pred_fallthru
    _
  %v154 = vld [vmem:[#allocation2] sm:$0xf]
  %v155 = vld [vmem:[#allocation2 + $0x4] sm:$0xf]
  %v156 = vld [vmem:[#allocation2 + $0x8] sm:$0xf]
  %v157 = vld [vmem:[#allocation2 + $0xc] sm:$0xf]
  %v158 = vld [vmem:[%s3] sm:$0xf]
  %v159 = vld [vmem:[%s3 + $0x4] sm:$0xf]
  %v160 = vld [vmem:[%s3 + $0x8] sm:$0xf]
  %v161 = vld [vmem:[%s3 + $0xc] sm:$0xf]
  %v162 = vld [vmem:[%s4] sm:$0x1]
  %v164 = vperm.slane %v162, 0
  %v170 = vunpack.c.l.b16 %v154
  %v171 = vunpack.c.l.b16 %v155
  %v172 = vunpack.c.l.b16 %v156
  %v173 = vunpack.c.l.b16 %v157
  %v174 = vpack.c.b16 %v171, %v170
  %v175 = vpack.c.b16 %v173, %v172
  %v180 = vunpack.c.l.b16 %v158
  %v181 = vunpack.c.l.b16 %v159
  %v182 = vunpack.c.l.b16 %v160
  %v183 = vunpack.c.l.b16 %v161
  %v184 = vpack.c.b16 %v181, %v180
  %v185 = vpack.c.b16 %v183, %v182
  %vm188 = vcmask 261120
  %v190 = vsel %vm188, %v174, 0
  %v193 = vsel %vm188, %v175, 0
  %195 = vmatpush.bf16.msra.mxu0 0
  %196 = vmatpush.bf16.msra.mxu0 0
  %197 = vmatpush.bf16.msra.mxu0 0
  %198 = vmatpush.bf16.msra.mxu0 0
  %199 = vmatpush.bf16.msra.mxu0 0
  %200 = vmatpush.bf16.msra.mxu0 0
  %201 = vmatpush.bf16.msra.mxu0 %v185
  %202 = vmatpush.bf16.msra.mxu0 %v184
  %203 = vmatmul.bf16.gmra.mxu0 %v190
  %v204 = vpop.f32.mrf.mxu0
  %v205 = vadd.f32 %v164, %v204
  %v206 = vpop.f32.mrf.mxu0
  %v207 = vadd.f32 %v164, %v206
  %208 = vmatmul.bf16.gmra.mxu0 %v193
  %v209 = vpop.f32.mrf.mxu0
  %v210 = vadd.f32 %v164, %v209
  %v211 = vpop.f32.mrf.mxu0
  %v212 = vadd.f32 %v164, %v211
  %213 = vdwg.mxu0
  %v214 = vpack.c.bf16 %v205, %v205
  %v215 = vpack.c.bf16 %v207, %v207
  %v216 = vpack.c.bf16 %v210, %v210
  %v217 = vpack.c.bf16 %v212, %v212
  %vm218 = vcmask 781312
  %219 = vst.msk [vmem:[%s5] sm:$0xf] %vm218, %v214
  %220 = vst.msk [vmem:[%s5 + $0x4] sm:$0xf] %vm218, %v215
  %221 = vst.msk [vmem:[%s5 + $0x8] sm:$0xf] %vm218, %v216
  %222 = vst.msk [vmem:[%s5 + $0xc] sm:$0xf] %vm218, %v217
  // Predicated region
  $region26: #{gpt_forward.11} parent=0 // pred_check
    _
  $region27: #{gpt_forward.11} parent=0 // pred_check_branch
    %224 = sbr.rel (0) target = $region29
  $region28: #{gpt_forward.11} parent=0 // pred_region
    _
  $region29: #{gpt_forward.11} parent=0 // pred_fallthru
    _
  // Predicated region
  $region30: #{gpt_forward.11} parent=0 // pred_check
    _
  $region31: #{gpt_forward.11} parent=0 // pred_check_branch
    %226 = sbr.rel (0) target = $region33
  $region32: #{gpt_forward.11} parent=0 // pred_region
    _
  $region33: #{gpt_forward.11} parent=0 // pred_fallthru
    _

// kernel: gpt_forward.12
$region0: #{gpt_forward.12}
  #allocation0 [shape = 'u32[]', space=smem, size = 0x4, offset = 0x4, fixed_abs, tag = 'smem constant byte address 0x4 - core index']
  #allocation1 [shape = 'u32[72,128]{1,0:T(1,128)}', space=vmem, size = 0x9000, scoped, tag = 'internal scratch']
  #allocation2 [shape = 'f32[2,16,1]{2,1,0:T(8,128)}', space=vmem, size = 0x4000, scoped, tag = 'scratch operand']
  #allocation3 [shape = 'f32[2,16,1]{2,1,0:T(8,128)}', space=vmem, size = 0x4000, scoped, tag = 'scratch operand']
  #allocation4 [shape = 'f32[16,32]{1,0:T(8,128)}', space=vmem, size = 0x2000, scoped, tag = 'scratch operand']
  %s0 = inlined_call_operand.vmem [shape: bf16[2,16,32], index: 0, kind: input, shape index: {}]
  %s1 = inlined_call_operand.vmem [shape: bf16[2,16,32], index: 1, kind: input, shape index: {}]
  %s2 = inlined_call_operand.vmem [shape: bf16[2,16,32], index: 2, kind: input, shape index: {}]
  %s3 = inlined_call_operand.vmem [shape: bf16[2,16,32], index: 3, kind: output, shape index: {}]
  %s4 = sld [smem:[#allocation0]]
  $region61: #{gpt_forward.12} parent=0
    _
  %s6 = ssub.s32 1, %s4
  %s7 = scalar_select 0, %s6, %s4
  loop: start=0, step=1, limit=4
  $region2: #{gpt_forward.12} parent=0 // loop_pre_header
    _
  $region3: #{gpt_forward.12} parent=0 // loop_header
    %s9 = sphi 0, %s13
    %p10 = scmp.ge.s32.totalorder %s9, 4
    %s16 = sphi 0, %s42
    %s17 = sphi 0, %s38
    %s18 = sphi 0, %s34
    %s19 = sphi 0, %s30
    %s20 = sphi 0, %s16
    %s21 = sphi 0, %s17
    %s22 = sphi 0, %s18
    %s23 = sphi 0, %s19
    %s24 = sphi 0, %s20
    %s25 = sphi 0, %s21
    %s26 = sphi 0, %s22
    %s27 = sphi 0, %s23
    %s49 = sphi 0, %s51
    %s52 = sphi 0, %s49
    %s53 = sphi 0, %s52
    %s69 = sphi 0, %s53
    %s83 = sphi 0, %s85
    %s86 = sphi 0, %s83
    %s87 = sphi 0, %s86
    %s103 = sphi 0, %s87
    %s117 = sphi 0, %s119
    %s120 = sphi 0, %s117
    %s121 = sphi 0, %s120
    %s137 = sphi 0, %s121
    %s147 = sphi 0, %s149
    %s150 = sphi 0, %s147
    %s151 = sphi 0, %s150
    %s167 = sphi 0, %s151
  $region4: #{gpt_forward.12} parent=0 // loop_header_branch
    %12 = sbr.rel (%p10) target = $region8
  $region5: #{gpt_forward.12} parent=0 // loop_body
    %s14 = ssub.s32 %s9, 1
    %s15 = ssub.s32 %s9, 2
    %s28 = sadd.s32 1, %s19
    %p29 = scmp.ge.s32.totalorder %s28, 1
    %s30 = scalar_select %p29, 0, %s28
    %s31 = sadd.s32 1, %s18
    %s32 = scalar_select %p29, %s31, %s18
    %p33 = scmp.ge.s32.totalorder %s32, 1
    %s34 = scalar_select %p33, 0, %s32
    %s35 = sadd.s32 1, %s17
    %s36 = scalar_select %p33, %s35, %s17
    %p37 = scmp.ge.s32.totalorder %s36, 1
    %s38 = scalar_select %p37, 0, %s36
    %s39 = sadd.s32 1, %s16
    %s40 = scalar_select %p37, %s39, %s16
    %p41 = scmp.ge.s32.totalorder %s40, 2
    %s42 = scalar_select %p41, 0, %s40
    %s43 = ssub.s32 %s16, %s42
    %s44 = ssub.s32 %s18, %s34
    %s45 = sor.u32 %s43, %s44
    %s46 = ssub.s32 %s17, %s38
    %s47 = sor.u32 %s45, %s46
    %p48 = scmp.eq.s32.totalorder %s47, 0
    %s50 = sadd.s32 %s49, 1
    %s51 = scalar_select %p48, %s49, %s50
    %p54 = pneg %p48
    %p55 = scmp.eq.s32.totalorder %s9, 1
    %p56 = por %p54, %p55
    %p57 = scmp.ne.s32.totalorder %s49, %s52
    %p58 = scmp.eq.s32.totalorder %s9, 0
    %p59 = por %p57, %p58
    %p60 = scmp.ne.s32.totalorder %s49, %s52
    %p61 = scmp.eq.s32.totalorder %s14, 1
    %p62 = por %p60, %p61
    %p63 = scmp.ne.s32.totalorder %s52, %s53
    %p64 = scmp.eq.s32.totalorder %s14, 0
    %p65 = por %p63, %p64
    %p66 = scmp.ne.s32.totalorder %s52, %s53
    %p67 = scmp.eq.s32.totalorder %s15, 1
    %p68 = por %p66, %p67
    %p70 = scmp.ne.s32.totalorder %s53, %s69
    %p71 = scmp.eq.s32.totalorder %s15, 0
    %p72 = por %p70, %p71
    %p73 = scmp.lt.s32.totalorder %s19, %s18
    %s74 = scalar_select %p73, %s19, %s18
    %p75 = scmp.lt.s32.totalorder %s30, %s34
    %s76 = scalar_select %p75, %s30, %s34
    %s77 = ssub.s32 %s16, %s42
    %s78 = ssub.s32 %s74, %s76
    %s79 = sor.u32 %s77, %s78
    %s80 = ssub.s32 %s17, %s38
    %s81 = sor.u32 %s79, %s80
    %p82 = scmp.eq.s32.totalorder %s81, 0
    %s84 = sadd.s32 %s83, 1
    %s85 = scalar_select %p82, %s83, %s84
    %p88 = pneg %p82
    %p89 = scmp.eq.s32.totalorder %s9, 1
    %p90 = por %p88, %p89
    %p91 = scmp.ne.s32.totalorder %s83, %s86
    %p92 = scmp.eq.s32.totalorder %s9, 0
    %p93 = por %p91, %p92
    %p94 = scmp.ne.s32.totalorder %s83, %s86
    %p95 = scmp.eq.s32.totalorder %s14, 1
    %p96 = por %p94, %p95
    %p97 = scmp.ne.s32.totalorder %s86, %s87
    %p98 = scmp.eq.s32.totalorder %s14, 0
    %p99 = por %p97, %p98
    %p100 = scmp.ne.s32.totalorder %s86, %s87
    %p101 = scmp.eq.s32.totalorder %s15, 1
    %p102 = por %p100, %p101
    %p104 = scmp.ne.s32.totalorder %s87, %s103
    %p105 = scmp.eq.s32.totalorder %s15, 0
    %p106 = por %p104, %p105
    %p107 = scmp.lt.s32.totalorder %s19, %s18
    %s108 = scalar_select %p107, %s19, %s18
    %p109 = scmp.lt.s32.totalorder %s30, %s34
    %s110 = scalar_select %p109, %s30, %s34
    %s111 = ssub.s32 %s16, %s42
    %s112 = ssub.s32 %s108, %s110
    %s113 = sor.u32 %s111, %s112
    %s114 = ssub.s32 %s17, %s38
    %s115 = sor.u32 %s113, %s114
    %p116 = scmp.eq.s32.totalorder %s115, 0
    %s118 = sadd.s32 %s117, 1
    %s119 = scalar_select %p116, %s117, %s118
    %p122 = pneg %p116
    %p123 = scmp.eq.s32.totalorder %s9, 1
    %p124 = por %p122, %p123
    %p125 = scmp.ne.s32.totalorder %s117, %s120
    %p126 = scmp.eq.s32.totalorder %s9, 0
    %p127 = por %p125, %p126
    %p128 = scmp.ne.s32.totalorder %s117, %s120
    %p129 = scmp.eq.s32.totalorder %s14, 1
    %p130 = por %p128, %p129
    %p131 = scmp.ne.s32.totalorder %s120, %s121
    %p132 = scmp.eq.s32.totalorder %s14, 0
    %p133 = por %p131, %p132
    %p134 = scmp.ne.s32.totalorder %s120, %s121
    %p135 = scmp.eq.s32.totalorder %s15, 1
    %p136 = por %p134, %p135
    %p138 = scmp.ne.s32.totalorder %s121, %s137
    %p139 = scmp.eq.s32.totalorder %s15, 0
    %p140 = por %p138, %p139
    %s141 = ssub.s32 %s16, %s42
    %s142 = ssub.s32 %s18, %s34
    %s143 = sor.u32 %s141, %s142
    %s144 = ssub.s32 %s17, %s38
    %s145 = sor.u32 %s143, %s144
    %p146 = scmp.eq.s32.totalorder %s145, 0
    %s148 = sadd.s32 %s147, 1
    %s149 = scalar_select %p146, %s147, %s148
    %p152 = pneg %p146
    %p153 = scmp.eq.s32.totalorder %s9, 1
    %p154 = por %p152, %p153
    %p155 = scmp.ne.s32.totalorder %s147, %s150
    %p156 = scmp.eq.s32.totalorder %s9, 0
    %p157 = por %p155, %p156
    %p158 = scmp.ne.s32.totalorder %s147, %s150
    %p159 = scmp.eq.s32.totalorder %s14, 1
    %p160 = por %p158, %p159
    %p161 = scmp.ne.s32.totalorder %s150, %s151
    %p162 = scmp.eq.s32.totalorder %s14, 0
    %p163 = por %p161, %p162
    %p164 = scmp.ne.s32.totalorder %s150, %s151
    %p165 = scmp.eq.s32.totalorder %s15, 1
    %p166 = por %p164, %p165
    %p168 = scmp.ne.s32.totalorder %s151, %s167
    %p169 = scmp.eq.s32.totalorder %s15, 0
    %p170 = por %p168, %p169
    %p171 = scmp.le.s32.totalorder 1, %s9
    %p172 = scmp.lt.s32.totalorder %s9, 3
    %p173 = pnand %p171, %p172
    %p174 = pneg %p173
    // Predicated region
    $region9: #{gpt_forward.12} parent=5 // pred_check
      _
    $region10: #{gpt_forward.12} parent=5 // pred_check_branch
      %176 = sbr.rel (%p173) target = $region12
    $region11: #{gpt_forward.12} parent=5 // pred_region
      %s177 = ssub.s32 %s9, 1
    $region12: #{gpt_forward.12} parent=5 // pred_fallthru
      _
    %p178 = scmp.lt.s32.totalorder %s9, 2
    // Predicated region
    $region13: #{gpt_forward.12} parent=5 // pred_check
      %p179 = pneg %p178
    $region14: #{gpt_forward.12} parent=5 // pred_check_branch
      %181 = sbr.rel (%p179) target = $region16
    $region15: #{gpt_forward.12} parent=5 // pred_region
      // Predicated region
      $region17: #{gpt_forward.12} parent=15 // pred_check
        %p182 = pneg %p59
      $region18: #{gpt_forward.12} parent=15 // pred_check_branch
        %184 = sbr.rel (%p182) target = $region20
      $region19: #{gpt_forward.12} parent=15 // pred_region
        %s185 = smul.u32 2, %s18
        %p186 = scmp.lt.s32.totalorder %s16, 1
        %s187 = scalar_select %p186, %s16, 1
        %p188 = scmp.lt.s32.totalorder %s185, 1
        %s189 = scalar_select %p188, %s185, 1
        %p190 = scmp.lt.s32.totalorder %s17, 0
        %s191 = scalar_select %p190, %s17, 0
        %s192 = sadd.s32 %s191, %s189
        %s193 = smul.addr %s187, 2
        %s194 = sadd.s32 %s192, %s193
        %s195 = smul.addr %s194, 4
        %s196 = scalar_lea.vmem %s0, %s195
        %s197 = smul.u32 2, %s18
      $region20: #{gpt_forward.12} parent=15 // pred_fallthru
        _
      // Predicated region
      $region21: #{gpt_forward.12} parent=15 // pred_check
        %p198 = pneg %p93
      $region22: #{gpt_forward.12} parent=15 // pred_check_branch
        %200 = sbr.rel (%p198) target = $region24
      $region23: #{gpt_forward.12} parent=15 // pred_region
        %p201 = scmp.lt.s32.totalorder %s19, %s18
        %s202 = scalar_select %p201, %s19, %s18
        %s203 = smul.u32 2, %s202
        %p204 = scmp.lt.s32.totalorder %s16, 1
        %s205 = scalar_select %p204, %s16, 1
        %p206 = scmp.lt.s32.totalorder %s203, 1
        %s207 = scalar_select %p206, %s203, 1
        %p208 = scmp.lt.s32.totalorder %s17, 0
        %s209 = scalar_select %p208, %s17, 0
        %s210 = sadd.s32 %s209, %s207
        %s211 = smul.addr %s205, 2
        %s212 = sadd.s32 %s210, %s211
        %s213 = smul.addr %s212, 4
        %s214 = scalar_lea.vmem %s1, %s213
        %p215 = scmp.lt.s32.totalorder %s19, %s18
        %s216 = scalar_select %p215, %s19, %s18
        %s217 = smul.u32 2, %s216
      $region24: #{gpt_forward.12} parent=15 // pred_fallthru
        _
      // Predicated region
      $region25: #{gpt_forward.12} parent=15 // pred_check
        %p218 = pneg %p127
      $region26: #{gpt_forward.12} parent=15 // pred_check_branch
        %220 = sbr.rel (%p218) target = $region28
      $region27: #{gpt_forward.12} parent=15 // pred_region
        %p221 = scmp.lt.s32.totalorder %s19, %s18
        %s222 = scalar_select %p221, %s19, %s18
        %s223 = smul.u32 2, %s222
        %p224 = scmp.lt.s32.totalorder %s16, 1
        %s225 = scalar_select %p224, %s16, 1
        %p226 = scmp.lt.s32.totalorder %s223, 1
        %s227 = scalar_select %p226, %s223, 1
        %p228 = scmp.lt.s32.totalorder %s17, 0
        %s229 = scalar_select %p228, %s17, 0
        %s230 = sadd.s32 %s229, %s227
        %s231 = smul.addr %s225, 2
        %s232 = sadd.s32 %s230, %s231
        %s233 = smul.addr %s232, 4
        %s234 = scalar_lea.vmem %s2, %s233
        %p235 = scmp.lt.s32.totalorder %s19, %s18
        %s236 = scalar_select %p235, %s19, %s18
        %s237 = smul.u32 2, %s236
      $region28: #{gpt_forward.12} parent=15 // pred_fallthru
        _
    $region16: #{gpt_forward.12} parent=5 // pred_fallthru
      _
    %p238 = scmp.le.s32.totalorder 1, %s9
    %p239 = scmp.lt.s32.totalorder %s9, 3
    %p240 = pnand %p238, %p239
    %p241 = pneg %p240
    // Predicated region
    $region29: #{gpt_forward.12} parent=5 // pred_check
      _
    $region30: #{gpt_forward.12} parent=5 // pred_check_branch
      %243 = sbr.rel (%p240) target = $region32
    $region31: #{gpt_forward.12} parent=5 // pred_region
      %s244 = ssub.s32 %s9, 1
      %s245 = smul.u32 2, %s22
      %p246 = scmp.lt.s32.totalorder %s20, 1
      %s247 = scalar_select %p246, %s20, 1
      %p248 = scmp.lt.s32.totalorder %s245, 1
      %s249 = scalar_select %p248, %s245, 1
      %p250 = scmp.lt.s32.totalorder %s21, 0
      %s251 = scalar_select %p250, %s21, 0
      %s252 = sadd.s32 %s251, %s249
      %s253 = smul.addr %s247, 2
      %s254 = sadd.s32 %s252, %s253
      %s255 = smul.addr %s254, 4
      %s256 = scalar_lea.vmem %s0, %s255
      %p257 = pneg %p65
      %p258 = pneg %p62
      %p259 = scmp.lt.s32.totalorder %s23, %s22
      %s260 = scalar_select %p259, %s23, %s22
      %s261 = smul.u32 2, %s260
      %p262 = scmp.lt.s32.totalorder %s20, 1
      %s263 = scalar_select %p262, %s20, 1
      %p264 = scmp.lt.s32.totalorder %s261, 1
      %s265 = scalar_select %p264, %s261, 1
      %p266 = scmp.lt.s32.totalorder %s21, 0
      %s267 = scalar_select %p266, %s21, 0
      %s268 = sadd.s32 %s267, %s265
      %s269 = smul.addr %s263, 2
      %s270 = sadd.s32 %s268, %s269
      %s271 = smul.addr %s270, 4
      %s272 = scalar_lea.vmem %s1, %s271
      %p273 = pneg %p99
      %p274 = pneg %p96
      %p275 = scmp.lt.s32.totalorder %s23, %s22
      %s276 = scalar_select %p275, %s23, %s22
      %s277 = smul.u32 2, %s276
      %p278 = scmp.lt.s32.totalorder %s20, 1
      %s279 = scalar_select %p278, %s20, 1
      %p280 = scmp.lt.s32.totalorder %s277, 1
      %s281 = scalar_select %p280, %s277, 1
      %p282 = scmp.lt.s32.totalorder %s21, 0
      %s283 = scalar_select %p282, %s21, 0
      %s284 = sadd.s32 %s283, %s281
      %s285 = smul.addr %s279, 2
      %s286 = sadd.s32 %s284, %s285
      %s287 = smul.addr %s286, 4
      %s288 = scalar_lea.vmem %s2, %s287
      %p289 = pneg %p133
      %p290 = pneg %p130
      %p291 = pneg %p163
      %p292 = pneg %p160
      %s293 = smul.u32 2, %s22
      %p294 = scmp.lt.s32.totalorder %s20, 1
      %s295 = scalar_select %p294, %s20, 1
      %p296 = scmp.lt.s32.totalorder %s293, 1
      %s297 = scalar_select %p296, %s293, 1
      %p298 = scmp.lt.s32.totalorder %s21, 0
      %s299 = scalar_select %p298, %s21, 0
      %s300 = sadd.s32 %s299, %s297
      %s301 = smul.addr %s295, 2
      %s302 = sadd.s32 %s300, %s301
      %s303 = smul.addr %s302, 4
      %s304 = scalar_lea.vmem %s3, %s303
      %s305 = smul.u32 2, %s22
      %p306 = scmp.lt.s32.totalorder %s20, 1
      %s307 = scalar_select %p306, %s20, 1
      %p308 = scmp.lt.s32.totalorder %s305, 1
      %s309 = scalar_select %p308, %s305, 1
      %p310 = scmp.lt.s32.totalorder %s21, 0
      %s311 = scalar_select %p310, %s21, 0
      %s312 = sadd.s32 %s311, %s309
      %s313 = smul.addr %s307, 2
      %s314 = sadd.s32 %s312, %s313
      %s315 = smul.addr %s314, 4
      %s316 = scalar_lea.vmem %s0, %s315
      %s317 = smul.u32 2, %s22
      %p318 = scmp.lt.s32.totalorder %s23, %s22
      %s319 = scalar_select %p318, %s23, %s22
      %s320 = smul.u32 2, %s319
      %p321 = scmp.lt.s32.totalorder %s20, 1
      %s322 = scalar_select %p321, %s20, 1
      %p323 = scmp.lt.s32.totalorder %s320, 1
      %s324 = scalar_select %p323, %s320, 1
      %p325 = scmp.lt.s32.totalorder %s21, 0
      %s326 = scalar_select %p325, %s21, 0
      %s327 = sadd.s32 %s326, %s324
      %s328 = smul.addr %s322, 2
      %s329 = sadd.s32 %s327, %s328
      %s330 = smul.addr %s329, 4
      %s331 = scalar_lea.vmem %s1, %s330
      %p332 = scmp.lt.s32.totalorder %s23, %s22
      %s333 = scalar_select %p332, %s23, %s22
      %s334 = smul.u32 2, %s333
      %p335 = scmp.lt.s32.totalorder %s23, %s22
      %s336 = scalar_select %p335, %s23, %s22
      %s337 = smul.u32 2, %s336
      %p338 = scmp.lt.s32.totalorder %s20, 1
      %s339 = scalar_select %p338, %s20, 1
      %p340 = scmp.lt.s32.totalorder %s337, 1
      %s341 = scalar_select %p340, %s337, 1
      %p342 = scmp.lt.s32.totalorder %s21, 0
      %s343 = scalar_select %p342, %s21, 0
      %s344 = sadd.s32 %s343, %s341
      %s345 = smul.addr %s339, 2
      %s346 = sadd.s32 %s344, %s345
      %s347 = smul.addr %s346, 4
      %s348 = scalar_lea.vmem %s2, %s347
      %p349 = scmp.lt.s32.totalorder %s23, %s22
      %s350 = scalar_select %p349, %s23, %s22
      %s351 = smul.u32 2, %s350
      %s352 = smul.u32 2, %s22
      %p353 = scmp.lt.s32.totalorder %s20, 1
      %s354 = scalar_select %p353, %s20, 1
      %p355 = scmp.lt.s32.totalorder %s352, 1
      %s356 = scalar_select %p355, %s352, 1
      %p357 = scmp.lt.s32.totalorder %s21, 0
      %s358 = scalar_select %p357, %s21, 0
      %s359 = sadd.s32 %s358, %s356
      %s360 = smul.addr %s354, 2
      %s361 = sadd.s32 %s359, %s360
      %s362 = smul.addr %s361, 4
      %s363 = scalar_lea.vmem %s3, %s362
      %s364 = smul.u32 2, %s22
      %p366 = scmp.eq.s32.totalorder %s23, 0
      // Predicated region
      $region33: #{gpt_forward.12} parent=31 // pred_check
        %p367 = pneg %p366
      $region34: #{gpt_forward.12} parent=31 // pred_check_branch
        %369 = sbr.rel (%p367) target = $region36
      $region35: #{gpt_forward.12} parent=31 // pred_region
        %vm370 = vcmask 7168
        %371 = vst.msk [vmem:[#allocation2] sm:$0xff] %vm370, -1e+30
        %372 = vst.msk [vmem:[#allocation2 + $0x8] sm:$0xff] %vm370, -1e+30
        %373 = vst.msk [vmem:[#allocation2 + $0x10] sm:$0xff] %vm370, -1e+30
        %374 = vst.msk [vmem:[#allocation2 + $0x18] sm:$0xff] %vm370, -1e+30
        %375 = vst.msk [vmem:[#allocation3] sm:$0xff] %vm370, 0.0
        %376 = vst.msk [vmem:[#allocation3 + $0x8] sm:$0xff] %vm370, 0.0
        %377 = vst.msk [vmem:[#allocation3 + $0x10] sm:$0xff] %vm370, 0.0
        %378 = vst.msk [vmem:[#allocation3 + $0x18] sm:$0xff] %vm370, 0.0
        %vm379 = vcmask 261120
        %380 = vst.msk [vmem:[#allocation4] sm:$0xff] %vm379, 0.0
        %381 = vst.msk [vmem:[#allocation4 + $0x8] sm:$0xff] %vm379, 0.0
      $region36: #{gpt_forward.12} parent=31 // pred_fallthru
        _
      %p382 = scmp.lt.s32.totalorder %s23, %s22
      // Predicated region
      $region37: #{gpt_forward.12} parent=31 // pred_check
        %p383 = pneg %p382
      $region38: #{gpt_forward.12} parent=31 // pred_check_branch
        %385 = sbr.rel (%p383) target = $region40
      $region39: #{gpt_forward.12} parent=31 // pred_region
        %v386 = vld [vmem:[%s316] sm:$0xf]
        %v387 = vld [vmem:[%s316 + $0x4] sm:$0xf]
        %v388 = vld [vmem:[%s331] sm:$0xf]
        %v389 = vld [vmem:[%s331 + $0x4] sm:$0xf]
        %v390 = vld [vmem:[%s348] sm:$0xf]
        %v391 = vld [vmem:[%s348 + $0x4] sm:$0xf]
        %v394 = vunpack.c.l.b16 %v386
        %v395 = vunpack.c.l.b16 %v387
        %v396 = vpack.c.b16 %v395, %v394
        %v399 = vunpack.c.l.b16 %v388
        %v400 = vunpack.c.l.b16 %v389
        %v401 = vpack.c.b16 %v400, %v399
        %vm402 = vcmask 130048
        %v404 = vsel %vm402, %v396, 0
        %v407 = vsel %vm402, %v401, 0
        %409 = vmatpush.bf16.xpose.msra.mxu0 0
        %410 = vmatpush.bf16.xpose.msra.mxu0 0
        %411 = vmatpush.bf16.xpose.msra.mxu0 0
        %412 = vmatpush.bf16.xpose.msra.mxu0 0
        %413 = vmatpush.bf16.xpose.msra.mxu0 0
        %414 = vmatpush.bf16.xpose.msra.mxu0 0
        %415 = vmatpush.bf16.xpose.msra.mxu0 0
        %416 = vmatpush.bf16.xpose.msra.mxu0 %v407
        %417 = vmatmul.bf16.gmra.mxu0 %v404
        %v418 = vpop.f32.mrf.mxu0
        %v419 = vadd.f32 0.0, %v418
        %v420 = vpop.f32.mrf.mxu0
        %v421 = vadd.f32 0.0, %v420
        %422 = vdwg.mxu0
        %v423 = vld [vmem:[#allocation2] sm:$0xff]
        %v424 = vld [vmem:[#allocation2 + $0x8] sm:$0xff]
        %v425 = vsel %vm402, %v419, -inf
        %426 = vmax.xlane.f32.xlu0 %v425
        %v427 = vpop.xlane.xlu0 %426
        %v428 = vsel %vm402, %v421, -inf
        %429 = vmax.xlane.f32.xlu0 %v428
        %v430 = vpop.xlane.xlu0 %429
        %v431 = vmax.f32 %v423, %v427
        %v432 = vmax.f32 %v424, %v430
        %v433 = vsub.f32 %v423, %v431
        %v434 = vsub.f32 %v424, %v432
        %v435 = vmul.f32 %v433, 1.442695
        %v436 = vpow.pop %v435
        %v437 = vmul.f32 %v434, 1.442695
        %v438 = vpow.pop %v437
        %440 = vset.pattern.permute.xlu0 0
        %441 = vperm.xlu0 %440, %v431
        %v442 = vpop.permute.xlu0 %441
        %445 = vset.pattern.permute.xlu0 0
        %446 = vperm.xlu0 %445, %v432
        %v447 = vpop.permute.xlu0 %446
        %v449 = vsub.f32 %v419, %v442
        %v450 = vsub.f32 %v421, %v447
        %v451 = vmul.f32 %v449, 1.442695
        %v452 = vpow.pop %v451
        %v453 = vmul.f32 %v450, 1.442695
        %v454 = vpow.pop %v453
        %v455 = vld [vmem:[#allocation3] sm:$0xff]
        %v456 = vld [vmem:[#allocation3 + $0x8] sm:$0xff]
        %v457 = vmul.f32 %v436, %v455
        %v458 = vmul.f32 %v438, %v456
        %v459 = vsel %vm402, %v452, 0.0
        %460 = vadd.xlane.f32.xlu0 %v459
        %v461 = vpop.xlane.xlu0 %460
        %v462 = vsel %vm402, %v454, 0.0
        %463 = vadd.xlane.f32.xlu0 %v462
        %v464 = vpop.xlane.xlu0 %463
        %v465 = vadd.f32 %v457, %v461
        %v466 = vadd.f32 %v458, %v464
        %vm467 = vcmask 7168
        %468 = vst.msk [vmem:[#allocation3] sm:$0xff] %vm467, %v465
        %469 = vst.msk [vmem:[#allocation3 + $0x8] sm:$0xff] %vm467, %v466
        %v470 = vld [vmem:[#allocation4] sm:$0xff]
        %v471 = vld [vmem:[#allocation4 + $0x8] sm:$0xff]
        %473 = vset.pattern.permute.xlu0 0
        %474 = vperm.xlu0 %473, %v436
        %v475 = vpop.permute.xlu0 %474
        %478 = vset.pattern.permute.xlu0 0
        %479 = vperm.xlu0 %478, %v438
        %v480 = vpop.permute.xlu0 %479
        %v482 = vmul.f32 %v475, %v470
        %v483 = vmul.f32 %v480, %v471
        %v484 = vpack.c.bf16 %v454, %v452
        %v487 = vunpack.c.l.b16 %v390
        %v488 = vunpack.c.l.b16 %v391
        %v489 = vpack.c.b16 %v488, %v487
        %v492 = vsel %vm402, %v484, 0
        %494 = vmatpush.bf16.msra.mxu0 0
        %495 = vmatpush.bf16.msra.mxu0 0
        %496 = vmatpush.bf16.msra.mxu0 0
        %497 = vmatpush.bf16.msra.mxu0 0
        %498 = vmatpush.bf16.msra.mxu0 0
        %499 = vmatpush.bf16.msra.mxu0 0
        %500 = vmatpush.bf16.msra.mxu0 0
        %501 = vmatpush.bf16.msra.mxu0 %v489
        %502 = vmatmul.bf16.gmra.mxu0 %v492
        %v503 = vpop.f32.mrf.mxu0
        %v504 = vadd.f32 0.0, %v503
        %v505 = vpop.f32.mrf.mxu0
        %v506 = vadd.f32 0.0, %v505
        %507 = vdwg.mxu0
        %v508 = vadd.f32 %v482, %v504
        %v509 = vadd.f32 %v483, %v506
        %510 = vst.msk [vmem:[#allocation4] sm:$0xff] %vm402, %v508
        %511 = vst.msk [vmem:[#allocation4 + $0x8] sm:$0xff] %vm402, %v509
        %512 = vst.msk [vmem:[#allocation2] sm:$0xff] %vm467, %v431
        %513 = vst.msk [vmem:[#allocation2 + $0x8] sm:$0xff] %vm467, %v432
        %v514 = vld [vmem:[%s316] sm:$0xf]
        %v515 = vld [vmem:[%s316 + $0x4] sm:$0xf]
        %v516 = vld [vmem:[%s331] sm:$0xf]
        %v517 = vld [vmem:[%s331 + $0x4] sm:$0xf]
        %v518 = vld [vmem:[%s348] sm:$0xf]
        %v519 = vld [vmem:[%s348 + $0x4] sm:$0xf]
        %v522 = vunpack.c.l.b16 %v514
        %v523 = vunpack.c.l.b16 %v515
        %v524 = vpack.c.b16 %v523, %v522
        %525 = vrot.lane.b32.xlu0 %v524, 112
        %v526 = vpop.permute.xlu0 %525
        %v529 = vunpack.c.l.b16 %v516
        %v530 = vunpack.c.l.b16 %v517
        %v531 = vpack.c.b16 %v530, %v529
        %532 = vrot.lane.b32.xlu0 %v531, 112
        %v533 = vpop.permute.xlu0 %532
        %v535 = vsel %vm402, %v526, 0
        %v538 = vsel %vm402, %v533, 0
        %540 = vmatpush.bf16.xpose.msra.mxu0 0
        %541 = vmatpush.bf16.xpose.msra.mxu0 0
        %542 = vmatpush.bf16.xpose.msra.mxu0 0
        %543 = vmatpush.bf16.xpose.msra.mxu0 0
        %544 = vmatpush.bf16.xpose.msra.mxu0 0
        %545 = vmatpush.bf16.xpose.msra.mxu0 0
        %546 = vmatpush.bf16.xpose.msra.mxu0 0
        %547 = vmatpush.bf16.xpose.msra.mxu0 %v538
        %548 = vmatmul.bf16.gmra.mxu0 %v535
        %v549 = vpop.f32.mrf.mxu0
        %v550 = vadd.f32 0.0, %v549
        %v551 = vpop.f32.mrf.mxu0
        %v552 = vadd.f32 0.0, %v551
        %553 = vdwg.mxu0
        %s554 = scalar_lea.vmem [#allocation2], 16
        %v555 = vld [vmem:[%s554] sm:$0xff]
        %v556 = vld [vmem:[%s554 + $0x8] sm:$0xff]
        %v557 = vsel %vm402, %v550, -inf
        %558 = vmax.xlane.f32.xlu0 %v557
        %v559 = vpop.xlane.xlu0 %558
        %v560 = vsel %vm402, %v552, -inf
        %561 = vmax.xlane.f32.xlu0 %v560
        %v562 = vpop.xlane.xlu0 %561
        %v563 = vmax.f32 %v555, %v559
        %v564 = vmax.f32 %v556, %v562
        %v565 = vsub.f32 %v555, %v563
        %v566 = vsub.f32 %v556, %v564
        %v567 = vmul.f32 %v565, 1.442695
        %v568 = vpow.pop %v567
        %v569 = vmul.f32 %v566, 1.442695
        %v570 = vpow.pop %v569
        %572 = vset.pattern.permute.xlu0 0
        %573 = vperm.xlu0 %572, %v563
        %v574 = vpop.permute.xlu0 %573
        %577 = vset.pattern.permute.xlu0 0
        %578 = vperm.xlu0 %577, %v564
        %v579 = vpop.permute.xlu0 %578
        %v581 = vsub.f32 %v550, %v574
        %v582 = vsub.f32 %v552, %v579
        %v583 = vmul.f32 %v581, 1.442695
        %v584 = vpow.pop %v583
        %v585 = vmul.f32 %v582, 1.442695
        %v586 = vpow.pop %v585
        %s587 = scalar_lea.vmem [#allocation3], 16
        %v588 = vld [vmem:[%s587] sm:$0xff]
        %v589 = vld [vmem:[%s587 + $0x8] sm:$0xff]
        %v590 = vmul.f32 %v568, %v588
        %v591 = vmul.f32 %v570, %v589
        %v592 = vsel %vm402, %v584, 0.0
        %593 = vadd.xlane.f32.xlu0 %v592
        %v594 = vpop.xlane.xlu0 %593
        %v595 = vsel %vm402, %v586, 0.0
        %596 = vadd.xlane.f32.xlu0 %v595
        %v597 = vpop.xlane.xlu0 %596
        %v598 = vadd.f32 %v590, %v594
        %v599 = vadd.f32 %v591, %v597
        %600 = vst.msk [vmem:[%s587] sm:$0xff] %vm467, %v598
        %601 = vst.msk [vmem:[%s587 + $0x8] sm:$0xff] %vm467, %v599
        %v602 = vld [vmem:[#allocation4] sm:$0xff]
        %v603 = vld [vmem:[#allocation4 + $0x8] sm:$0xff]
        %605 = vset.pattern.permute.xlu0 0
        %606 = vperm.xlu0 %605, %v568
        %v607 = vpop.permute.xlu0 %606
        %610 = vset.pattern.permute.xlu0 0
        %611 = vperm.xlu0 %610, %v570
        %v612 = vpop.permute.xlu0 %611
        %v614 = vmul.f32 %v607, %v602
        %v615 = vmul.f32 %v612, %v603
        %v616 = vpack.c.bf16 %v586, %v584
        %v619 = vunpack.c.l.b16 %v518
        %v620 = vunpack.c.l.b16 %v519
        %v621 = vpack.c.b16 %v620, %v619
        %622 = vrot.lane.b32.xlu0 %v621, 112
        %v623 = vpop.permute.xlu0 %622
        %v626 = vsel %vm402, %v616, 0
        %628 = vmatpush.bf16.msra.mxu0 0
        %629 = vmatpush.bf16.msra.mxu0 0
        %630 = vmatpush.bf16.msra.mxu0 0
        %631 = vmatpush.bf16.msra.mxu0 0
        %632 = vmatpush.bf16.msra.mxu0 0
        %633 = vmatpush.bf16.msra.mxu0 0
        %634 = vmatpush.bf16.msra.mxu0 0
        %635 = vmatpush.bf16.msra.mxu0 %v623
        %636 = vmatmul.bf16.gmra.mxu0 %v626
        %v637 = vpop.f32.mrf.mxu0
        %v638 = vadd.f32 0.0, %v637
        %v639 = vpop.f32.mrf.mxu0
        %v640 = vadd.f32 0.0, %v639
        %641 = vdwg.mxu0
        %644 = vrot.lane.b32.xlu0 %v638, 16
        %v645 = vpop.permute.xlu0 %644
        %646 = vrot.lane.b32.xlu0 %v640, 16
        %v647 = vpop.permute.xlu0 %646
        %v650 = vadd.f32 %v614, %v645
        %v651 = vadd.f32 %v615, %v647
        %vm652 = vcmask 261248
        %653 = vst.msk [vmem:[#allocation4] sm:$0xff] %vm652, %v650
        %654 = vst.msk [vmem:[#allocation4 + $0x8] sm:$0xff] %vm652, %v651
        %655 = vst.msk [vmem:[%s554] sm:$0xff] %vm467, %v563
        %656 = vst.msk [vmem:[%s554 + $0x8] sm:$0xff] %vm467, %v564
      $region40: #{gpt_forward.12} parent=31 // pred_fallthru
        _
      %p657 = scmp.eq.s32.totalorder %s23, %s22
      // Predicated region
      $region41: #{gpt_forward.12} parent=31 // pred_check
        %p658 = pneg %p657
      $region42: #{gpt_forward.12} parent=31 // pred_check_branch
        %660 = sbr.rel (%p658) target = $region44
      $region43: #{gpt_forward.12} parent=31 // pred_region
        %s661 = smul.u32 %s22, 16
        %v662 = vlaneseq
        %v663 = vshrl.u32 %v662, 7
        %v664 = vadd.s32 %v663, 8
        %v665 = vstv %s661
        %v666 = vadd.s32 %v665, %v663
        %v667 = vadd.s32 %v665, %v664
        %s668 = smul.u32 %s23, 16
        %v669 = vlaneseq
        %v670 = vand.u32 %v669, 127
        %v671 = vstv %s668
        %v672 = vadd.s32 %v671, %v670
        %vm673 = vcmp.le.s32.totalorder %v672, %v666
        %vm674 = vcmp.le.s32.totalorder %v672, %v667
        %v675 = vld [vmem:[%s316] sm:$0xf]
        %v676 = vld [vmem:[%s316 + $0x4] sm:$0xf]
        %v677 = vld [vmem:[%s331] sm:$0xf]
        %v678 = vld [vmem:[%s331 + $0x4] sm:$0xf]
        %v679 = vld [vmem:[%s348] sm:$0xf]
        %v680 = vld [vmem:[%s348 + $0x4] sm:$0xf]
        %v683 = vunpack.c.l.b16 %v675
        %v684 = vunpack.c.l.b16 %v676
        %v685 = vpack.c.b16 %v684, %v683
        %v688 = vunpack.c.l.b16 %v677
        %v689 = vunpack.c.l.b16 %v678
        %v690 = vpack.c.b16 %v689, %v688
        %vm691 = vcmask 130048
        %v693 = vsel %vm691, %v685, 0
        %v696 = vsel %vm691, %v690, 0
        %698 = vmatpush.bf16.xpose.msra.mxu0 0
        %699 = vmatpush.bf16.xpose.msra.mxu0 0
        %700 = vmatpush.bf16.xpose.msra.mxu0 0
        %701 = vmatpush.bf16.xpose.msra.mxu0 0
        %702 = vmatpush.bf16.xpose.msra.mxu0 0
        %703 = vmatpush.bf16.xpose.msra.mxu0 0
        %704 = vmatpush.bf16.xpose.msra.mxu0 0
        %705 = vmatpush.bf16.xpose.msra.mxu0 %v696
        %706 = vmatmul.bf16.gmra.mxu0 %v693
        %v707 = vpop.f32.mrf.mxu0
        %v708 = vadd.f32 0.0, %v707
        %v709 = vpop.f32.mrf.mxu0
        %v710 = vadd.f32 0.0, %v709
        %711 = vdwg.mxu0
        %v712 = vsel %vm673, %v708, -1e+30
        %v713 = vsel %vm674, %v710, -1e+30
        %v714 = vld [vmem:[#allocation2] sm:$0xff]
        %v715 = vld [vmem:[#allocation2 + $0x8] sm:$0xff]
        %v716 = vsel %vm691, %v712, -inf
        %717 = vmax.xlane.f32.xlu0 %v716
        %v718 = vpop.xlane.xlu0 %717
        %v719 = vsel %vm691, %v713, -inf
        %720 = vmax.xlane.f32.xlu0 %v719
        %v721 = vpop.xlane.xlu0 %720
        %v722 = vmax.f32 %v714, %v718
        %v723 = vmax.f32 %v715, %v721
        %v724 = vsub.f32 %v714, %v722
        %v725 = vsub.f32 %v715, %v723
        %v726 = vmul.f32 %v724, 1.442695
        %v727 = vpow.pop %v726
        %v728 = vmul.f32 %v725, 1.442695
        %v729 = vpow.pop %v728
        %731 = vset.pattern.permute.xlu0 0
        %732 = vperm.xlu0 %731, %v722
        %v733 = vpop.permute.xlu0 %732
        %736 = vset.pattern.permute.xlu0 0
        %737 = vperm.xlu0 %736, %v723
        %v738 = vpop.permute.xlu0 %737
        %v740 = vsub.f32 %v712, %v733
        %v741 = vsub.f32 %v713, %v738
        %v742 = vmul.f32 %v740, 1.442695
        %v743 = vpow.pop %v742
        %v744 = vmul.f32 %v741, 1.442695
        %v745 = vpow.pop %v744
        %v746 = vld [vmem:[#allocation3] sm:$0xff]
        %v747 = vld [vmem:[#allocation3 + $0x8] sm:$0xff]
        %v748 = vmul.f32 %v727, %v746
        %v749 = vmul.f32 %v729, %v747
        %v750 = vsel %vm691, %v743, 0.0
        %751 = vadd.xlane.f32.xlu0 %v750
        %v752 = vpop.xlane.xlu0 %751
        %v753 = vsel %vm691, %v745, 0.0
        %754 = vadd.xlane.f32.xlu0 %v753
        %v755 = vpop.xlane.xlu0 %754
        %v756 = vadd.f32 %v748, %v752
        %v757 = vadd.f32 %v749, %v755
        %vm758 = vcmask 7168
        %759 = vst.msk [vmem:[#allocation3] sm:$0xff] %vm758, %v756
        %760 = vst.msk [vmem:[#allocation3 + $0x8] sm:$0xff] %vm758, %v757
        %v761 = vld [vmem:[#allocation4] sm:$0xff]
        %v762 = vld [vmem:[#allocation4 + $0x8] sm:$0xff]
        %764 = vset.pattern.permute.xlu0 0
        %765 = vperm.xlu0 %764, %v727
        %v766 = vpop.permute.xlu0 %765
        %769 = vset.pattern.permute.xlu0 0
        %770 = vperm.xlu0 %769, %v729
        %v771 = vpop.permute.xlu0 %770
        %v773 = vmul.f32 %v766, %v761
        %v774 = vmul.f32 %v771, %v762
        %v775 = vpack.c.bf16 %v745, %v743
        %v778 = vunpack.c.l.b16 %v679
        %v779 = vunpack.c.l.b16 %v680
        %v780 = vpack.c.b16 %v779, %v778
        %v783 = vsel %vm691, %v775, 0
        %785 = vmatpush.bf16.msra.mxu0 0
        %786 = vmatpush.bf16.msra.mxu0 0
        %787 = vmatpush.bf16.msra.mxu0 0
        %788 = vmatpush.bf16.msra.mxu0 0
        %789 = vmatpush.bf16.msra.mxu0 0
        %790 = vmatpush.bf16.msra.mxu0 0
        %791 = vmatpush.bf16.msra.mxu0 0
        %792 = vmatpush.bf16.msra.mxu0 %v780
        %793 = vmatmul.bf16.gmra.mxu0 %v783
        %v794 = vpop.f32.mrf.mxu0
        %v795 = vadd.f32 0.0, %v794
        %v796 = vpop.f32.mrf.mxu0
        %v797 = vadd.f32 0.0, %v796
        %798 = vdwg.mxu0
        %v799 = vadd.f32 %v773, %v795
        %v800 = vadd.f32 %v774, %v797
        %801 = vst.msk [vmem:[#allocation4] sm:$0xff] %vm691, %v799
        %802 = vst.msk [vmem:[#allocation4 + $0x8] sm:$0xff] %vm691, %v800
        %803 = vst.msk [vmem:[#allocation2] sm:$0xff] %vm758, %v722
        %804 = vst.msk [vmem:[#allocation2 + $0x8] sm:$0xff] %vm758, %v723
        %v805 = vld [vmem:[%s316] sm:$0xf]
        %v806 = vld [vmem:[%s316 + $0x4] sm:$0xf]
        %v807 = vld [vmem:[%s331] sm:$0xf]
        %v808 = vld [vmem:[%s331 + $0x4] sm:$0xf]
        %v809 = vld [vmem:[%s348] sm:$0xf]
        %v810 = vld [vmem:[%s348 + $0x4] sm:$0xf]
        %v813 = vunpack.c.l.b16 %v805
        %v814 = vunpack.c.l.b16 %v806
        %v815 = vpack.c.b16 %v814, %v813
        %816 = vrot.lane.b32.xlu0 %v815, 112
        %v817 = vpop.permute.xlu0 %816
        %v820 = vunpack.c.l.b16 %v807
        %v821 = vunpack.c.l.b16 %v808
        %v822 = vpack.c.b16 %v821, %v820
        %823 = vrot.lane.b32.xlu0 %v822, 112
        %v824 = vpop.permute.xlu0 %823
        %v826 = vsel %vm691, %v817, 0
        %v829 = vsel %vm691, %v824, 0
        %831 = vmatpush.bf16.xpose.msra.mxu0 0
        %832 = vmatpush.bf16.xpose.msra.mxu0 0
        %833 = vmatpush.bf16.xpose.msra.mxu0 0
        %834 = vmatpush.bf16.xpose.msra.mxu0 0
        %835 = vmatpush.bf16.xpose.msra.mxu0 0
        %836 = vmatpush.bf16.xpose.msra.mxu0 0
        %837 = vmatpush.bf16.xpose.msra.mxu0 0
        %838 = vmatpush.bf16.xpose.msra.mxu0 %v829
        %839 = vmatmul.bf16.gmra.mxu0 %v826
        %v840 = vpop.f32.mrf.mxu0
        %v841 = vadd.f32 0.0, %v840
        %v842 = vpop.f32.mrf.mxu0
        %v843 = vadd.f32 0.0, %v842
        %844 = vdwg.mxu0
        %v845 = vsel %vm673, %v841, -1e+30
        %v846 = vsel %vm674, %v843, -1e+30
        %s847 = scalar_lea.vmem [#allocation2], 16
        %v848 = vld [vmem:[%s847] sm:$0xff]
        %v849 = vld [vmem:[%s847 + $0x8] sm:$0xff]
        %v850 = vsel %vm691, %v845, -inf
        %851 = vmax.xlane.f32.xlu0 %v850
        %v852 = vpop.xlane.xlu0 %851
        %v853 = vsel %vm691, %v846, -inf
        %854 = vmax.xlane.f32.xlu0 %v853
        %v855 = vpop.xlane.xlu0 %854
        %v856 = vmax.f32 %v848, %v852
        %v857 = vmax.f32 %v849, %v855
        %v858 = vsub.f32 %v848, %v856
        %v859 = vsub.f32 %v849, %v857
        %v860 = vmul.f32 %v858, 1.442695
        %v861 = vpow.pop %v860
        %v862 = vmul.f32 %v859, 1.442695
        %v863 = vpow.pop %v862
        %865 = vset.pattern.permute.xlu0 0
        %866 = vperm.xlu0 %865, %v856
        %v867 = vpop.permute.xlu0 %866
        %870 = vset.pattern.permute.xlu0 0
        %871 = vperm.xlu0 %870, %v857
        %v872 = vpop.permute.xlu0 %871
        %v874 = vsub.f32 %v845, %v867
        %v875 = vsub.f32 %v846, %v872
        %v876 = vmul.f32 %v874, 1.442695
        %v877 = vpow.pop %v876
        %v878 = vmul.f32 %v875, 1.442695
        %v879 = vpow.pop %v878
        %s880 = scalar_lea.vmem [#allocation3], 16
        %v881 = vld [vmem:[%s880] sm:$0xff]
        %v882 = vld [vmem:[%s880 + $0x8] sm:$0xff]
        %v883 = vmul.f32 %v861, %v881
        %v884 = vmul.f32 %v863, %v882
        %v885 = vsel %vm691, %v877, 0.0
        %886 = vadd.xlane.f32.xlu0 %v885
        %v887 = vpop.xlane.xlu0 %886
        %v888 = vsel %vm691, %v879, 0.0
        %889 = vadd.xlane.f32.xlu0 %v888
        %v890 = vpop.xlane.xlu0 %889
        %v891 = vadd.f32 %v883, %v887
        %v892 = vadd.f32 %v884, %v890
        %893 = vst.msk [vmem:[%s880] sm:$0xff] %vm758, %v891
        %894 = vst.msk [vmem:[%s880 + $0x8] sm:$0xff] %vm758, %v892
        %v895 = vld [vmem:[#allocation4] sm:$0xff]
        %v896 = vld [vmem:[#allocation4 + $0x8] sm:$0xff]
        %898 = vset.pattern.permute.xlu0 0
        %899 = vperm.xlu0 %898, %v861
        %v900 = vpop.permute.xlu0 %899
        %903 = vset.pattern.permute.xlu0 0
        %904 = vperm.xlu0 %903, %v863
        %v905 = vpop.permute.xlu0 %904
        %v907 = vmul.f32 %v900, %v895
        %v908 = vmul.f32 %v905, %v896
        %v909 = vpack.c.bf16 %v879, %v877
        %v912 = vunpack.c.l.b16 %v809
        %v913 = vunpack.c.l.b16 %v810
        %v914 = vpack.c.b16 %v913, %v912
        %915 = vrot.lane.b32.xlu0 %v914, 112
        %v916 = vpop.permute.xlu0 %915
        %v919 = vsel %vm691, %v909, 0
        %921 = vmatpush.bf16.msra.mxu0 0
        %922 = vmatpush.bf16.msra.mxu0 0
        %923 = vmatpush.bf16.msra.mxu0 0
        %924 = vmatpush.bf16.msra.mxu0 0
        %925 = vmatpush.bf16.msra.mxu0 0
        %926 = vmatpush.bf16.msra.mxu0 0
        %927 = vmatpush.bf16.msra.mxu0 0
        %928 = vmatpush.bf16.msra.mxu0 %v916
        %929 = vmatmul.bf16.gmra.mxu0 %v919
        %v930 = vpop.f32.mrf.mxu0
        %v931 = vadd.f32 0.0, %v930
        %v932 = vpop.f32.mrf.mxu0
        %v933 = vadd.f32 0.0, %v932
        %934 = vdwg.mxu0
        %937 = vrot.lane.b32.xlu0 %v931, 16
        %v938 = vpop.permute.xlu0 %937
        %939 = vrot.lane.b32.xlu0 %v933, 16
        %v940 = vpop.permute.xlu0 %939
        %v943 = vadd.f32 %v907, %v938
        %v944 = vadd.f32 %v908, %v940
        %vm945 = vcmask 261248
        %946 = vst.msk [vmem:[#allocation4] sm:$0xff] %vm945, %v943
        %947 = vst.msk [vmem:[#allocation4 + $0x8] sm:$0xff] %vm945, %v944
        %948 = vst.msk [vmem:[%s847] sm:$0xff] %vm758, %v856
        %949 = vst.msk [vmem:[%s847 + $0x8] sm:$0xff] %vm758, %v857
      $region44: #{gpt_forward.12} parent=31 // pred_fallthru
        _
      // Predicated region
      $region45: #{gpt_forward.12} parent=31 // pred_check
        %p950 = pneg %p366
      $region46: #{gpt_forward.12} parent=31 // pred_check_branch
        %952 = sbr.rel (%p950) target = $region48
      $region47: #{gpt_forward.12} parent=31 // pred_region
        %v953 = vld [vmem:[#allocation4] sm:$0xff]
        %v954 = vld [vmem:[#allocation4 + $0x8] sm:$0xff]
        %v955 = vld [vmem:[#allocation3] sm:$0xff]
        %v956 = vld [vmem:[#allocation3 + $0x8] sm:$0xff]
        %v957 = vrcp.pop %v955
        %v958 = vrcp.pop %v956
        %960 = vset.pattern.permute.xlu0 0
        %961 = vperm.xlu0 %960, %v957
        %v962 = vpop.permute.xlu0 %961
        %965 = vset.pattern.permute.xlu0 0
        %966 = vperm.xlu0 %965, %v958
        %v967 = vpop.permute.xlu0 %966
        %v969 = vmul.f32 %v953, %v962
        %v970 = vmul.f32 %v954, %v967
        %vm971 = vcmask 130048
        %972 = vst.msk [vmem:[#allocation4] sm:$0xff] %vm971, %v969
        %973 = vst.msk [vmem:[#allocation4 + $0x8] sm:$0xff] %vm971, %v970
        %v974 = vld [vmem:[#allocation4] sm:$0xff]
        %v975 = vld [vmem:[#allocation4 + $0x8] sm:$0xff]
        %s976 = scalar_lea.vmem [#allocation3], 16
        %v977 = vld [vmem:[%s976] sm:$0xff]
        %v978 = vld [vmem:[%s976 + $0x8] sm:$0xff]
        %v979 = vrcp.pop %v977
        %v980 = vrcp.pop %v978
        %982 = vset.pattern.permute.xlu0 0
        %983 = vperm.xlu0 %982, %v979
        %v984 = vpop.permute.xlu0 %983
        %987 = vset.pattern.permute.xlu0 0
        %988 = vperm.xlu0 %987, %v980
        %v989 = vpop.permute.xlu0 %988
        %v991 = vmul.f32 %v974, %v984
        %v992 = vmul.f32 %v975, %v989
        %vm993 = vcmask 261248
        %994 = vst.msk [vmem:[#allocation4] sm:$0xff] %vm993, %v991
        %995 = vst.msk [vmem:[#allocation4 + $0x8] sm:$0xff] %vm993, %v992
        %v996 = vld [vmem:[#allocation4] sm:$0xff]
        %v997 = vld [vmem:[#allocation4 + $0x8] sm:$0xff]
        %v998 = vpack.c.bf16 %v996, %v996
        %v999 = vpack.c.bf16 %v997, %v997
        %vm1000 = vcmask 257024
        %1001 = vst.msk [vmem:[%s363] sm:$0xf] %vm1000, %v998
        %1002 = vst.msk [vmem:[%s363 + $0x4] sm:$0xf] %vm1000, %v999
      $region48: #{gpt_forward.12} parent=31 // pred_fallthru
        _
      %s1003 = smul.u32 2, %s22
      %p1004 = scmp.lt.s32.totalorder %s20, 1
      %s1005 = scalar_select %p1004, %s20, 1
      %p1006 = scmp.lt.s32.totalorder %s1003, 1
      %s1007 = scalar_select %p1006, %s1003, 1
      %p1008 = scmp.lt.s32.totalorder %s21, 0
      %s1009 = scalar_select %p1008, %s21, 0
      %s1010 = sadd.s32 %s1009, %s1007
      %s1011 = smul.addr %s1005, 2
      %s1012 = sadd.s32 %s1010, %s1011
      %s1013 = smul.addr %s1012, 4
      %s1014 = scalar_lea.vmem %s3, %s1013
      // Predicated region
      $region49: #{gpt_forward.12} parent=31 // pred_check
        %p1015 = pneg %p160
      $region50: #{gpt_forward.12} parent=31 // pred_check_branch
        %1017 = sbr.rel (%p1015) target = $region52
      $region51: #{gpt_forward.12} parent=31 // pred_region
        %s1018 = smul.u32 2, %s22
      $region52: #{gpt_forward.12} parent=31 // pred_fallthru
        _
    $region32: #{gpt_forward.12} parent=5 // pred_fallthru
      _
    %p1019 = scmp.le.s32.totalorder 2, %s9
    // Predicated region
    $region53: #{gpt_forward.12} parent=5 // pred_check
      %p1020 = pneg %p1019
    $region54: #{gpt_forward.12} parent=5 // pred_check_branch
      %1022 = sbr.rel (%p1020) target = $region56
    $region55: #{gpt_forward.12} parent=5 // pred_region
      %s1023 = ssub.s32 %s9, 2
      // Predicated region
      $region57: #{gpt_forward.12} parent=55 // pred_check
        %p1024 = pneg %p166
      $region58: #{gpt_forward.12} parent=55 // pred_check_branch
        %1026 = sbr.rel (%p1024) target = $region60
      $region59: #{gpt_forward.12} parent=55 // pred_region
        %s1027 = smul.u32 2, %s26
        %p1028 = scmp.lt.s32.totalorder %s24, 1
        %s1029 = scalar_select %p1028, %s24, 1
        %p1030 = scmp.lt.s32.totalorder %s1027, 1
        %s1031 = scalar_select %p1030, %s1027, 1
        %p1032 = scmp.lt.s32.totalorder %s25, 0
        %s1033 = scalar_select %p1032, %s25, 0
        %s1034 = sadd.s32 %s1033, %s1031
        %s1035 = smul.addr %s1029, 2
        %s1036 = sadd.s32 %s1034, %s1035
        %s1037 = smul.addr %s1036, 4
        %s1038 = scalar_lea.vmem %s3, %s1037
      $region60: #{gpt_forward.12} parent=55 // pred_fallthru
        _
    $region56: #{gpt_forward.12} parent=5 // pred_fallthru
      _
  $region6: #{gpt_forward.12} parent=0 // loop_footer
    %s13 = sadd.s32 1, %s9
  $region7: #{gpt_forward.12} parent=0 // loop_footer_branch
    %8 = sbr.rel target = $region3
  $region8: #{gpt_forward.12} parent=0 // loop_exit
    _

// kernel: gpt_forward.14
$region0: #{gpt_forward.14}
  #allocation0 [shape = 'u32[]', space=smem, size = 0x4, offset = 0x4, fixed_abs, tag = 'smem constant byte address 0x4 - core index']
  #allocation1 [shape = 'u32[72,128]{1,0:T(1,128)}', space=vmem, size = 0x9000, scoped, tag = 'internal scratch']
  #allocation2 [shape = 'bf16[32,32]{1,0:T(8,128)(2,1)}', space=vmem, size = 0x2000, scoped, tag = 'scratch operand']
  %s0 = inlined_call_operand.vmem [shape: bf16[32,32], index: 0, kind: input, shape index: {}]
  %s1 = inlined_call_operand.vmem [shape: f32[1,32], index: 1, kind: input, shape index: {}]
  %s2 = inlined_call_operand.vmem [shape: f32[1,32], index: 2, kind: input, shape index: {}]
  %s3 = inlined_call_operand.vmem [shape: bf16[32,128], index: 3, kind: input, shape index: {}]
  %s4 = inlined_call_operand.vmem [shape: f32[1,128], index: 4, kind: input, shape index: {}]
  %s5 = inlined_call_operand.vmem [shape: bf16[32,128], index: 5, kind: output, shape index: {}]
  %s6 = sld [smem:[#allocation0]]
  $region34: #{gpt_forward.14} parent=0
    _
  %s8 = ssub.s32 1, %s6
  %s9 = scalar_select 0, %s8, %s6
  // Predicated region
  $region2: #{gpt_forward.14} parent=0 // pred_check
    _
  $region3: #{gpt_forward.14} parent=0 // pred_check_branch
    %11 = sbr.rel (0) target = $region5
  $region4: #{gpt_forward.14} parent=0 // pred_region
    _
  $region5: #{gpt_forward.14} parent=0 // pred_fallthru
    _
  // Predicated region
  $region6: #{gpt_forward.14} parent=0 // pred_check
    _
  $region7: #{gpt_forward.14} parent=0 // pred_check_branch
    %13 = sbr.rel (0) target = $region9
  $region8: #{gpt_forward.14} parent=0 // pred_region
    _
  $region9: #{gpt_forward.14} parent=0 // pred_fallthru
    _
  // Predicated region
  $region10: #{gpt_forward.14} parent=0 // pred_check
    _
  $region11: #{gpt_forward.14} parent=0 // pred_check_branch
    %15 = sbr.rel (0) target = $region13
  $region12: #{gpt_forward.14} parent=0 // pred_region
    _
  $region13: #{gpt_forward.14} parent=0 // pred_fallthru
    _
  // Predicated region
  $region14: #{gpt_forward.14} parent=0 // pred_check
    _
  $region15: #{gpt_forward.14} parent=0 // pred_check_branch
    %17 = sbr.rel (0) target = $region17
  $region16: #{gpt_forward.14} parent=0 // pred_region
    _
  $region17: #{gpt_forward.14} parent=0 // pred_fallthru
    _
  // Predicated region
  $region18: #{gpt_forward.14} parent=0 // pred_check
    _
  $region19: #{gpt_forward.14} parent=0 // pred_check_branch
    %19 = sbr.rel (0) target = $region21
  $region20: #{gpt_forward.14} parent=0 // pred_region
    _
  $region21: #{gpt_forward.14} parent=0 // pred_fallthru
    _
  %p21 = scmp.eq.s32.totalorder 0, 0
  // Predicated region
  $region22: #{gpt_forward.14} parent=0 // pred_check
    %p22 = pneg %p21
  $region23: #{gpt_forward.14} parent=0 // pred_check_branch
    %24 = sbr.rel (%p22) target = $region25
  $region24: #{gpt_forward.14} parent=0 // pred_region
    %v25 = vld [vmem:[%s0] sm:$0xf]
    %v26 = vld [vmem:[%s0 + $0x4] sm:$0xf]
    %v27 = vld [vmem:[%s0 + $0x8] sm:$0xf]
    %v28 = vld [vmem:[%s0 + $0xc] sm:$0xf]
    %v29 = vunpack.c.l.bf16 %v25
    %v30 = vunpack.c.l.bf16 %v26
    %v31 = vunpack.c.l.bf16 %v27
    %v32 = vunpack.c.l.bf16 %v28
    %vm33 = vcmask 261120
    %v34 = vsel %vm33, %v29, 0.0
    %35 = vadd.xlane.f32.xlu0 %v34
    %v36 = vpop.xlane.xlu0 %35
    %v37 = vsel %vm33, %v30, 0.0
    %38 = vadd.xlane.f32.xlu0 %v37
    %v39 = vpop.xlane.xlu0 %38
    %v40 = vsel %vm33, %v31, 0.0
    %41 = vadd.xlane.f32.xlu0 %v40
    %v42 = vpop.xlane.xlu0 %41
    %v43 = vsel %vm33, %v32, 0.0
    %44 = vadd.xlane.f32.xlu0 %v43
    %v45 = vpop.xlane.xlu0 %44
    %v46 = vrcp.pop 32.0
    %v47 = vmul.f32 32.0, %v46
    %v48 = vsub.f32 1.0, %v47
    %v49 = vmul.f32 %v46, %v48
    %v50 = vadd.f32 %v46, %v49
    %vm51 = vweird.f32 %v46
    %v52 = vsel %vm51, %v46, %v50
    %v53 = vmul.f32 %v36, %v52
    %v54 = vmul.f32 %v39, %v52
    %v55 = vmul.f32 %v42, %v52
    %v56 = vmul.f32 %v45, %v52
    %v57 = vsub.f32 %v29, %v53
    %v58 = vsub.f32 %v30, %v54
    %v59 = vsub.f32 %v31, %v55
    %v60 = vsub.f32 %v32, %v56
    %v61 = vmul.f32 %v57, %v57
    %v62 = vmul.f32 %v58, %v58
    %v63 = vmul.f32 %v59, %v59
    %v64 = vmul.f32 %v60, %v60
    %v65 = vsel %vm33, %v61, 0.0
    %66 = vadd.xlane.f32.xlu0 %v65
    %v67 = vpop.xlane.xlu0 %66
    %v68 = vsel %vm33, %v62, 0.0
    %69 = vadd.xlane.f32.xlu0 %v68
    %v70 = vpop.xlane.xlu0 %69
    %v71 = vsel %vm33, %v63, 0.0
    %72 = vadd.xlane.f32.xlu0 %v71
    %v73 = vpop.xlane.xlu0 %72
    %v74 = vsel %vm33, %v64, 0.0
    %75 = vadd.xlane.f32.xlu0 %v74
    %v76 = vpop.xlane.xlu0 %75
    %v77 = vmul.f32 %v67, %v52
    %v78 = vmul.f32 %v70, %v52
    %v79 = vmul.f32 %v73, %v52
    %v80 = vmul.f32 %v76, %v52
    %v81 = vadd.f32 %v77, 1e-05
    %v82 = vadd.f32 %v78, 1e-05
    %v83 = vadd.f32 %v79, 1e-05
    %v84 = vadd.f32 %v80, 1e-05
    %v85 = vrsqrt.pop %v81
    %v86 = vmul.f32 %v85, %v81
    %v87 = vmul.f32 %v86, %v85
    %v88 = vmul.f32 0.5, %v87
    %v89 = vsub.f32 1.5, %v88
    %v90 = vmul.f32 %v85, %v89
    %vm91 = vweird.f32 %v81
    %vm92 = vweird.f32 %v85
    %vm93 = vmor %vm91, %vm92
    %v94 = vsel %vm93, %v85, %v90
    %v95 = vrsqrt.pop %v82
    %v96 = vmul.f32 %v95, %v82
    %v97 = vmul.f32 %v96, %v95
    %v98 = vmul.f32 0.5, %v97
    %v99 = vsub.f32 1.5, %v98
    %v100 = vmul.f32 %v95, %v99
    %vm101 = vweird.f32 %v82
    %vm102 = vweird.f32 %v95
    %vm103 = vmor %vm101, %vm102
    %v104 = vsel %vm103, %v95, %v100
    %v105 = vrsqrt.pop %v83
    %v106 = vmul.f32 %v105, %v83
    %v107 = vmul.f32 %v106, %v105
    %v108 = vmul.f32 0.5, %v107
    %v109 = vsub.f32 1.5, %v108
    %v110 = vmul.f32 %v105, %v109
    %vm111 = vweird.f32 %v83
    %vm112 = vweird.f32 %v105
    %vm113 = vmor %vm111, %vm112
    %v114 = vsel %vm113, %v105, %v110
    %v115 = vrsqrt.pop %v84
    %v116 = vmul.f32 %v115, %v84
    %v117 = vmul.f32 %v116, %v115
    %v118 = vmul.f32 0.5, %v117
    %v119 = vsub.f32 1.5, %v118
    %v120 = vmul.f32 %v115, %v119
    %vm121 = vweird.f32 %v84
    %vm122 = vweird.f32 %v115
    %vm123 = vmor %vm121, %vm122
    %v124 = vsel %vm123, %v115, %v120
    %v125 = vmul.f32 %v57, %v94
    %v126 = vmul.f32 %v58, %v104
    %v127 = vmul.f32 %v59, %v114
    %v128 = vmul.f32 %v60, %v124
    %v129 = vld [vmem:[%s1] sm:$0x1]
    %v131 = vperm.slane %v129, 0
    %v133 = vmul.f32 %v125, %v131
    %v134 = vmul.f32 %v126, %v131
    %v135 = vmul.f32 %v127, %v131
    %v136 = vmul.f32 %v128, %v131
    %v137 = vld [vmem:[%s2] sm:$0x1]
    %v139 = vperm.slane %v137, 0
    %v141 = vadd.f32 %v133, %v139
    %v142 = vadd.f32 %v134, %v139
    %v143 = vadd.f32 %v135, %v139
    %v144 = vadd.f32 %v136, %v139
    %v145 = vpack.c.bf16 %v141, %v141
    %v146 = vpack.c.bf16 %v142, %v142
    %v147 = vpack.c.bf16 %v143, %v143
    %v148 = vpack.c.bf16 %v144, %v144
    %vm149 = vcmask 257024
    %150 = vst.msk [vmem:[#allocation2] sm:$0xf] %vm149, %v145
    %151 = vst.msk [vmem:[#allocation2 + $0x4] sm:$0xf] %vm149, %v146
    %152 = vst.msk [vmem:[#allocation2 + $0x8] sm:$0xf] %vm149, %v147
    %153 = vst.msk [vmem:[#allocation2 + $0xc] sm:$0xf] %vm149, %v148
  $region25: #{gpt_forward.14} parent=0 // pred_fallthru
    _
  %v154 = vld [vmem:[#allocation2] sm:$0xf]
  %v155 = vld [vmem:[#allocation2 + $0x4] sm:$0xf]
  %v156 = vld [vmem:[#allocation2 + $0x8] sm:$0xf]
  %v157 = vld [vmem:[#allocation2 + $0xc] sm:$0xf]
  %v158 = vld [vmem:[%s3] sm:$0xf]
  %v159 = vld [vmem:[%s3 + $0x4] sm:$0xf]
  %v160 = vld [vmem:[%s3 + $0x8] sm:$0xf]
  %v161 = vld [vmem:[%s3 + $0xc] sm:$0xf]
  %v162 = vld [vmem:[%s4] sm:$0x1]
  %v164 = vperm.slane %v162, 0
  %v170 = vunpack.c.l.b16 %v154
  %v171 = vunpack.c.l.b16 %v155
  %v172 = vunpack.c.l.b16 %v156
  %v173 = vunpack.c.l.b16 %v157
  %v174 = vpack.c.b16 %v171, %v170
  %v175 = vpack.c.b16 %v173, %v172
  %v180 = vunpack.c.l.b16 %v158
  %v181 = vunpack.c.l.b16 %v159
  %v182 = vunpack.c.l.b16 %v160
  %v183 = vunpack.c.l.b16 %v161
  %v184 = vpack.c.b16 %v181, %v180
  %v185 = vpack.c.b16 %v183, %v182
  %vm188 = vcmask 261120
  %v190 = vsel %vm188, %v174, 0
  %v193 = vsel %vm188, %v175, 0
  %195 = vmatpush.bf16.msra.mxu0 0
  %196 = vmatpush.bf16.msra.mxu0 0
  %197 = vmatpush.bf16.msra.mxu0 0
  %198 = vmatpush.bf16.msra.mxu0 0
  %199 = vmatpush.bf16.msra.mxu0 0
  %200 = vmatpush.bf16.msra.mxu0 0
  %201 = vmatpush.bf16.msra.mxu0 %v185
  %202 = vmatpush.bf16.msra.mxu0 %v184
  %203 = vmatmul.bf16.gmra.mxu0 %v190
  %v204 = vpop.f32.mrf.mxu0
  %v205 = vadd.f32 %v164, %v204
  %v206 = vpop.f32.mrf.mxu0
  %v207 = vadd.f32 %v164, %v206
  %208 = vmatmul.bf16.gmra.mxu0 %v193
  %v209 = vpop.f32.mrf.mxu0
  %v210 = vadd.f32 %v164, %v209
  %v211 = vpop.f32.mrf.mxu0
  %v212 = vadd.f32 %v164, %v211
  %213 = vdwg.mxu0
  %v214 = vmul.f32 %v205, 0.5
  %v215 = vmul.f32 %v207, 0.5
  %v216 = vmul.f32 %v210, 0.5
  %v217 = vmul.f32 %v212, 0.5
  %v218 = vmul.f32 %v205, 0.044715
  %v219 = vmul.f32 %v207, 0.044715
  %v220 = vmul.f32 %v210, 0.044715
  %v221 = vmul.f32 %v212, 0.044715
  %v222 = vmul.f32 %v218, %v205
  %v223 = vmul.f32 %v219, %v207
  %v224 = vmul.f32 %v220, %v210
  %v225 = vmul.f32 %v221, %v212
  %v226 = vmul.f32 %v222, %v205
  %v227 = vmul.f32 %v223, %v207
  %v228 = vmul.f32 %v224, %v210
  %v229 = vmul.f32 %v225, %v212
  %v230 = vadd.f32 %v205, %v226
  %v231 = vadd.f32 %v207, %v227
  %v232 = vadd.f32 %v210, %v228
  %v233 = vadd.f32 %v212, %v229
  %v234 = vmul.f32 %v230, 0.7978846
  %v235 = vmul.f32 %v231, 0.7978846
  %v236 = vmul.f32 %v232, 0.7978846
  %v237 = vmul.f32 %v233, 0.7978846
  %v238 = vtanh.pop %v234
  %v239 = vtanh.pop %v235
  %v240 = vtanh.pop %v236
  %v241 = vtanh.pop %v237
  %v242 = vadd.f32 %v238, 1.0
  %v243 = vadd.f32 %v239, 1.0
  %v244 = vadd.f32 %v240, 1.0
  %v245 = vadd.f32 %v241, 1.0
  %v246 = vmul.f32 %v214, %v242
  %v247 = vmul.f32 %v215, %v243
  %v248 = vmul.f32 %v216, %v244
  %v249 = vmul.f32 %v217, %v245
  %v250 = vpack.c.bf16 %v246, %v246
  %v251 = vpack.c.bf16 %v247, %v247
  %v252 = vpack.c.bf16 %v248, %v248
  %v253 = vpack.c.bf16 %v249, %v249
  %254 = vst [vmem:[%s5] sm:$0xf] %v250
  %255 = vst [vmem:[%s5 + $0x4] sm:$0xf] %v251
  %256 = vst [vmem:[%s5 + $0x8] sm:$0xf] %v252
  %257 = vst [vmem:[%s5 + $0xc] sm:$0xf] %v253
  // Predicated region
  $region26: #{gpt_forward.14} parent=0 // pred_check
    _
  $region27: #{gpt_forward.14} parent=0 // pred_check_branch
    %259 = sbr.rel (0) target = $region29
  $region28: #{gpt_forward.14} parent=0 // pred_region
    _
  $region29: #{gpt_forward.14} parent=0 // pred_fallthru
    _
  // Predicated region
  $region30: #{gpt_forward.14} parent=0 // pred_check
    _
  $region31: #{gpt_forward.14} parent=0 // pred_check_branch
    %261 = sbr.rel (0) target = $region33
  $region32: #{gpt_forward.14} parent=0 // pred_region
    _
  $region33: #{gpt_forward.14} parent=0 // pred_fallthru
    _

// kernel: gpt_forward.15
$region0: #{gpt_forward.15}
  #allocation0 [shape = 'u32[]', space=smem, size = 0x4, offset = 0x4, fixed_abs, tag = 'smem constant byte address 0x4 - core index']
  #allocation1 [shape = 'u32[72,128]{1,0:T(1,128)}', space=vmem, size = 0x9000, scoped, tag = 'internal scratch']
  #allocation2 [shape = 'f32[32,32]{1,0:T(8,128)}', space=vmem, size = 0x4000, scoped, tag = 'scratch operand']
  %s0 = inlined_call_operand.vmem [shape: bf16[32,128], index: 0, kind: input, shape index: {}]
  %s1 = inlined_call_operand.vmem [shape: bf16[128,32], index: 1, kind: input, shape index: {}]
  %s2 = inlined_call_operand.vmem [shape: f32[1,32], index: 2, kind: input, shape index: {}]
  %s3 = inlined_call_operand.vmem [shape: bf16[32,32], index: 3, kind: input, shape index: {}, may-alias: {3,4}]
  %s4 = inlined_call_operand.vmem [shape: bf16[32,32], index: 4, kind: output, shape index: {}, may-alias: {3,4}]
  %s5 = sld [smem:[#allocation0]]
  $region34: #{gpt_forward.15} parent=0
    _
  %s7 = ssub.s32 1, %s5
  %s8 = scalar_select 0, %s7, %s5
  // Predicated region
  $region2: #{gpt_forward.15} parent=0 // pred_check
    _
  $region3: #{gpt_forward.15} parent=0 // pred_check_branch
    %10 = sbr.rel (0) target = $region5
  $region4: #{gpt_forward.15} parent=0 // pred_region
    _
  $region5: #{gpt_forward.15} parent=0 // pred_fallthru
    _
  // Predicated region
  $region6: #{gpt_forward.15} parent=0 // pred_check
    _
  $region7: #{gpt_forward.15} parent=0 // pred_check_branch
    %12 = sbr.rel (0) target = $region9
  $region8: #{gpt_forward.15} parent=0 // pred_region
    _
  $region9: #{gpt_forward.15} parent=0 // pred_fallthru
    _
  // Predicated region
  $region10: #{gpt_forward.15} parent=0 // pred_check
    _
  $region11: #{gpt_forward.15} parent=0 // pred_check_branch
    %14 = sbr.rel (0) target = $region13
  $region12: #{gpt_forward.15} parent=0 // pred_region
    _
  $region13: #{gpt_forward.15} parent=0 // pred_fallthru
    _
  // Predicated region
  $region14: #{gpt_forward.15} parent=0 // pred_check
    _
  $region15: #{gpt_forward.15} parent=0 // pred_check_branch
    %16 = sbr.rel (0) target = $region17
  $region16: #{gpt_forward.15} parent=0 // pred_region
    _
  $region17: #{gpt_forward.15} parent=0 // pred_fallthru
    _
  %p17 = scmp.eq.s32.totalorder 0, 0
  // Predicated region
  $region18: #{gpt_forward.15} parent=0 // pred_check
    %p18 = pneg %p17
  $region19: #{gpt_forward.15} parent=0 // pred_check_branch
    %20 = sbr.rel (%p18) target = $region21
  $region20: #{gpt_forward.15} parent=0 // pred_region
    %vm21 = vcmask 261120
    %22 = vst.msk [vmem:[#allocation2] sm:$0xff] %vm21, 0.0
    %23 = vst.msk [vmem:[#allocation2 + $0x8] sm:$0xff] %vm21, 0.0
    %24 = vst.msk [vmem:[#allocation2 + $0x10] sm:$0xff] %vm21, 0.0
    %25 = vst.msk [vmem:[#allocation2 + $0x18] sm:$0xff] %vm21, 0.0
  $region21: #{gpt_forward.15} parent=0 // pred_fallthru
    _
  %v26 = vld [vmem:[#allocation2] sm:$0xff]
  %v27 = vld [vmem:[#allocation2 + $0x8] sm:$0xff]
  %v28 = vld [vmem:[#allocation2 + $0x10] sm:$0xff]
  %v29 = vld [vmem:[#allocation2 + $0x18] sm:$0xff]
  %v30 = vld [vmem:[%s0] sm:$0xf]
  %v31 = vld [vmem:[%s0 + $0x4] sm:$0xf]
  %v32 = vld [vmem:[%s0 + $0x8] sm:$0xf]
  %v33 = vld [vmem:[%s0 + $0xc] sm:$0xf]
  %v34 = vld [vmem:[%s1] sm:$0xf]
  %v35 = vld [vmem:[%s1 + $0x4] sm:$0xf]
  %v36 = vld [vmem:[%s1 + $0x8] sm:$0xf]
  %v37 = vld [vmem:[%s1 + $0xc] sm:$0xf]
  %v38 = vld [vmem:[%s1 + $0x10] sm:$0xf]
  %v39 = vld [vmem:[%s1 + $0x14] sm:$0xf]
  %v40 = vld [vmem:[%s1 + $0x18] sm:$0xf]
  %v41 = vld [vmem:[%s1 + $0x1c] sm:$0xf]
  %v42 = vld [vmem:[%s1 + $0x20] sm:$0xf]
  %v43 = vld [vmem:[%s1 + $0x24] sm:$0xf]
  %v44 = vld [vmem:[%s1 + $0x28] sm:$0xf]
  %v45 = vld [vmem:[%s1 + $0x2c] sm:$0xf]
  %v46 = vld [vmem:[%s1 + $0x30] sm:$0xf]
  %v47 = vld [vmem:[%s1 + $0x34] sm:$0xf]
  %v48 = vld [vmem:[%s1 + $0x38] sm:$0xf]
  %v49 = vld [vmem:[%s1 + $0x3c] sm:$0xf]
  %v54 = vunpack.c.l.b16 %v30
  %v55 = vunpack.c.l.b16 %v31
  %v56 = vunpack.c.l.b16 %v32
  %v57 = vunpack.c.l.b16 %v33
  %v58 = vpack.c.b16 %v55, %v54
  %v59 = vpack.c.b16 %v57, %v56
  %v78 = vunpack.c.l.b16 %v34
  %v79 = vunpack.c.l.b16 %v35
  %v80 = vunpack.c.l.b16 %v36
  %v81 = vunpack.c.l.b16 %v37
  %v82 = vunpack.c.l.b16 %v38
  %v83 = vunpack.c.l.b16 %v39
  %v84 = vunpack.c.l.b16 %v40
  %v85 = vunpack.c.l.b16 %v41
  %v86 = vunpack.c.l.b16 %v42
  %v87 = vunpack.c.l.b16 %v43
  %v88 = vunpack.c.l.b16 %v44
  %v89 = vunpack.c.l.b16 %v45
  %v90 = vunpack.c.l.b16 %v46
  %v91 = vunpack.c.l.b16 %v47
  %v92 = vunpack.c.l.b16 %v48
  %v93 = vunpack.c.l.b16 %v49
  %v94 = vpack.c.b16 %v79, %v78
  %v95 = vpack.c.b16 %v81, %v80
  %v96 = vpack.c.b16 %v83, %v82
  %v97 = vpack.c.b16 %v85, %v84
  %v98 = vpack.c.b16 %v87, %v86
  %v99 = vpack.c.b16 %v89, %v88
  %v100 = vpack.c.b16 %v91, %v90
  %v101 = vpack.c.b16 %v93, %v92
  %110 = vmatpush.bf16.msra.mxu0 %v101
  %111 = vmatpush.bf16.msra.mxu0 %v100
  %112 = vmatpush.bf16.msra.mxu0 %v99
  %113 = vmatpush.bf16.msra.mxu0 %v98
  %114 = vmatpush.bf16.msra.mxu0 %v97
  %115 = vmatpush.bf16.msra.mxu0 %v96
  %116 = vmatpush.bf16.msra.mxu0 %v95
  %117 = vmatpush.bf16.msra.mxu0 %v94
  %118 = vmatmul.bf16.gmra.mxu0 %v58
  %v119 = vpop.f32.mrf.mxu0
  %v120 = vadd.f32 0.0, %v119
  %v121 = vpop.f32.mrf.mxu0
  %v122 = vadd.f32 0.0, %v121
  %123 = vmatmul.bf16.gmra.mxu0 %v59
  %v124 = vpop.f32.mrf.mxu0
  %v125 = vadd.f32 0.0, %v124
  %v126 = vpop.f32.mrf.mxu0
  %v127 = vadd.f32 0.0, %v126
  %128 = vdwg.mxu0
  %v129 = vadd.f32 %v26, %v120
  %v130 = vadd.f32 %v27, %v122
  %v131 = vadd.f32 %v28, %v125
  %v132 = vadd.f32 %v29, %v127
  %vm133 = vcmask 261120
  %134 = vst.msk [vmem:[#allocation2] sm:$0xff] %vm133, %v129
  %135 = vst.msk [vmem:[#allocation2 + $0x8] sm:$0xff] %vm133, %v130
  %136 = vst.msk [vmem:[#allocation2 + $0x10] sm:$0xff] %vm133, %v131
  %137 = vst.msk [vmem:[#allocation2 + $0x18] sm:$0xff] %vm133, %v132
  // Predicated region
  $region22: #{gpt_forward.15} parent=0 // pred_check
    %p138 = pneg %p17
  $region23: #{gpt_forward.15} parent=0 // pred_check_branch
    %140 = sbr.rel (%p138) target = $region25
  $region24: #{gpt_forward.15} parent=0 // pred_region
    %v141 = vld [vmem:[#allocation2] sm:$0xff]
    %v142 = vld [vmem:[#allocation2 + $0x8] sm:$0xff]
    %v143 = vld [vmem:[#allocation2 + $0x10] sm:$0xff]
    %v144 = vld [vmem:[#allocation2 + $0x18] sm:$0xff]
    %v145 = vld [vmem:[%s2] sm:$0x1]
    %v147 = vperm.slane %v145, 0
    %v149 = vadd.f32 %v141, %v147
    %v150 = vadd.f32 %v142, %v147
    %v151 = vadd.f32 %v143, %v147
    %v152 = vadd.f32 %v144, %v147
    %v153 = vld [vmem:[%s3] sm:$0xf]
    %v154 = vld [vmem:[%s3 + $0x4] sm:$0xf]
    %v155 = vld [vmem:[%s3 + $0x8] sm:$0xf]
    %v156 = vld [vmem:[%s3 + $0xc] sm:$0xf]
    %v157 = vunpack.c.l.bf16 %v153
    %v158 = vunpack.c.l.bf16 %v154
    %v159 = vunpack.c.l.bf16 %v155
    %v160 = vunpack.c.l.bf16 %v156
    %v161 = vadd.f32 %v149, %v157
    %v162 = vadd.f32 %v150, %v158
    %v163 = vadd.f32 %v151, %v159
    %v164 = vadd.f32 %v152, %v160
    %v165 = vpack.c.bf16 %v161, %v161
    %v166 = vpack.c.bf16 %v162, %v162
    %v167 = vpack.c.bf16 %v163, %v163
    %v168 = vpack.c.bf16 %v164, %v164
    %vm169 = vcmask 257024
    %170 = vst.msk [vmem:[%s4] sm:$0xf] %vm169, %v165
    %171 = vst.msk [vmem:[%s4 + $0x4] sm:$0xf] %vm169, %v166
    %172 = vst.msk [vmem:[%s4 + $0x8] sm:$0xf] %vm169, %v167
    %173 = vst.msk [vmem:[%s4 + $0xc] sm:$0xf] %vm169, %v168
  $region25: #{gpt_forward.15} parent=0 // pred_fallthru
    _
  // Predicated region
  $region26: #{gpt_forward.15} parent=0 // pred_check
    _
  $region27: #{gpt_forward.15} parent=0 // pred_check_branch
    %175 = sbr.rel (0) target = $region29
  $region28: #{gpt_forward.15} parent=0 // pred_region
    _
  $region29: #{gpt_forward.15} parent=0 // pred_fallthru
    _
  // Predicated region
  $region30: #{gpt_forward.15} parent=0 // pred_check
    _
  $region31: #{gpt_forward.15} parent=0 // pred_check_branch
    %177 = sbr.rel (0) target = $region33
  $region32: #{gpt_forward.15} parent=0 // pred_region
    _
  $region33: #{gpt_forward.15} parent=0 // pred_fallthru
    _

// kernel: gpt_forward.21
$region0: #{gpt_forward.21}
  #allocation0 [shape = 'u32[]', space=smem, size = 0x4, offset = 0x4, fixed_abs, tag = 'smem constant byte address 0x4 - core index']
  #allocation1 [shape = 'u32[72,128]{1,0:T(1,128)}', space=vmem, size = 0x9000, scoped, tag = 'internal scratch']
  #allocation2 [shape = 'bf16[32,32]{1,0:T(8,128)(2,1)}', space=vmem, size = 0x2000, scoped, tag = 'scratch operand']
  %s0 = inlined_call_operand.vmem [shape: bf16[32,32], index: 0, kind: input, shape index: {}]
  %s1 = inlined_call_operand.vmem [shape: f32[1,32], index: 1, kind: input, shape index: {}]
  %s2 = inlined_call_operand.vmem [shape: f32[1,32], index: 2, kind: input, shape index: {}]
  %s3 = inlined_call_operand.vmem [shape: bf16[32,128], index: 3, kind: input, shape index: {}]
  %s4 = inlined_call_operand.hbm [shape: f32[32,128], index: 4, kind: output, shape index: {}]
  %s5 = sld [smem:[#allocation0]]
  $region30: #{gpt_forward.21} parent=0
    _
  %s7 = ssub.s32 1, %s5
  %s8 = scalar_select 0, %s7, %s5
  $region1: #{gpt_forward.21} parent=0
    #allocation3 [shape = 'u8[16384]{0}', space=vmem, size = 0x4000, scoped, tag = 'output window, operand 0, single buffered']
    #allocation4 [shape = 's32[1]{0}', space=sflag, size = 0x4, scoped, tag = 'scoped memory for gpt_forward.21']
    %9 = vsyncpa [#allocation4], 0
    // Predicated region
    $region2: #{gpt_forward.21} parent=1 // pred_check
      _
    $region3: #{gpt_forward.21} parent=1 // pred_check_branch
      %11 = sbr.rel (0) target = $region5
    $region4: #{gpt_forward.21} parent=1 // pred_region
      _
    $region5: #{gpt_forward.21} parent=1 // pred_fallthru
      _
    // Predicated region
    $region6: #{gpt_forward.21} parent=1 // pred_check
      _
    $region7: #{gpt_forward.21} parent=1 // pred_check_branch
      %13 = sbr.rel (0) target = $region9
    $region8: #{gpt_forward.21} parent=1 // pred_region
      _
    $region9: #{gpt_forward.21} parent=1 // pred_fallthru
      _
    // Predicated region
    $region10: #{gpt_forward.21} parent=1 // pred_check
      _
    $region11: #{gpt_forward.21} parent=1 // pred_check_branch
      %15 = sbr.rel (0) target = $region13
    $region12: #{gpt_forward.21} parent=1 // pred_region
      _
    $region13: #{gpt_forward.21} parent=1 // pred_fallthru
      _
    // Predicated region
    $region14: #{gpt_forward.21} parent=1 // pred_check
      _
    $region15: #{gpt_forward.21} parent=1 // pred_check_branch
      %17 = sbr.rel (0) target = $region17
    $region16: #{gpt_forward.21} parent=1 // pred_region
      _
    $region17: #{gpt_forward.21} parent=1 // pred_fallthru
      _
    %p19 = scmp.eq.s32.totalorder 0, 0
    // Predicated region
    $region18: #{gpt_forward.21} parent=1 // pred_check
      %p20 = pneg %p19
    $region19: #{gpt_forward.21} parent=1 // pred_check_branch
      %22 = sbr.rel (%p20) target = $region21
    $region20: #{gpt_forward.21} parent=1 // pred_region
      %v23 = vld [vmem:[%s0] sm:$0xf]
      %v24 = vld [vmem:[%s0 + $0x4] sm:$0xf]
      %v25 = vld [vmem:[%s0 + $0x8] sm:$0xf]
      %v26 = vld [vmem:[%s0 + $0xc] sm:$0xf]
      %v27 = vunpack.c.l.bf16 %v23
      %v28 = vunpack.c.l.bf16 %v24
      %v29 = vunpack.c.l.bf16 %v25
      %v30 = vunpack.c.l.bf16 %v26
      %vm31 = vcmask 261120
      %v32 = vsel %vm31, %v27, 0.0
      %33 = vadd.xlane.f32.xlu0 %v32
      %v34 = vpop.xlane.xlu0 %33
      %v35 = vsel %vm31, %v28, 0.0
      %36 = vadd.xlane.f32.xlu0 %v35
      %v37 = vpop.xlane.xlu0 %36
      %v38 = vsel %vm31, %v29, 0.0
      %39 = vadd.xlane.f32.xlu0 %v38
      %v40 = vpop.xlane.xlu0 %39
      %v41 = vsel %vm31, %v30, 0.0
      %42 = vadd.xlane.f32.xlu0 %v41
      %v43 = vpop.xlane.xlu0 %42
      %v44 = vrcp.pop 32.0
      %v45 = vmul.f32 32.0, %v44
      %v46 = vsub.f32 1.0, %v45
      %v47 = vmul.f32 %v44, %v46
      %v48 = vadd.f32 %v44, %v47
      %vm49 = vweird.f32 %v44
      %v50 = vsel %vm49, %v44, %v48
      %v51 = vmul.f32 %v34, %v50
      %v52 = vmul.f32 %v37, %v50
      %v53 = vmul.f32 %v40, %v50
      %v54 = vmul.f32 %v43, %v50
      %v55 = vsub.f32 %v27, %v51
      %v56 = vsub.f32 %v28, %v52
      %v57 = vsub.f32 %v29, %v53
      %v58 = vsub.f32 %v30, %v54
      %v59 = vmul.f32 %v55, %v55
      %v60 = vmul.f32 %v56, %v56
      %v61 = vmul.f32 %v57, %v57
      %v62 = vmul.f32 %v58, %v58
      %v63 = vsel %vm31, %v59, 0.0
      %64 = vadd.xlane.f32.xlu0 %v63
      %v65 = vpop.xlane.xlu0 %64
      %v66 = vsel %vm31, %v60, 0.0
      %67 = vadd.xlane.f32.xlu0 %v66
      %v68 = vpop.xlane.xlu0 %67
      %v69 = vsel %vm31, %v61, 0.0
      %70 = vadd.xlane.f32.xlu0 %v69
      %v71 = vpop.xlane.xlu0 %70
      %v72 = vsel %vm31, %v62, 0.0
      %73 = vadd.xlane.f32.xlu0 %v72
      %v74 = vpop.xlane.xlu0 %73
      %v75 = vmul.f32 %v65, %v50
      %v76 = vmul.f32 %v68, %v50
      %v77 = vmul.f32 %v71, %v50
      %v78 = vmul.f32 %v74, %v50
      %v79 = vadd.f32 %v75, 1e-05
      %v80 = vadd.f32 %v76, 1e-05
      %v81 = vadd.f32 %v77, 1e-05
      %v82 = vadd.f32 %v78, 1e-05
      %v83 = vrsqrt.pop %v79
      %v84 = vmul.f32 %v83, %v79
      %v85 = vmul.f32 %v84, %v83
      %v86 = vmul.f32 0.5, %v85
      %v87 = vsub.f32 1.5, %v86
      %v88 = vmul.f32 %v83, %v87
      %vm89 = vweird.f32 %v79
      %vm90 = vweird.f32 %v83
      %vm91 = vmor %vm89, %vm90
      %v92 = vsel %vm91, %v83, %v88
      %v93 = vrsqrt.pop %v80
      %v94 = vmul.f32 %v93, %v80
      %v95 = vmul.f32 %v94, %v93
      %v96 = vmul.f32 0.5, %v95
      %v97 = vsub.f32 1.5, %v96
      %v98 = vmul.f32 %v93, %v97
      %vm99 = vweird.f32 %v80
      %vm100 = vweird.f32 %v93
      %vm101 = vmor %vm99, %vm100
      %v102 = vsel %vm101, %v93, %v98
      %v103 = vrsqrt.pop %v81
      %v104 = vmul.f32 %v103, %v81
      %v105 = vmul.f32 %v104, %v103
      %v106 = vmul.f32 0.5, %v105
      %v107 = vsub.f32 1.5, %v106
      %v108 = vmul.f32 %v103, %v107
      %vm109 = vweird.f32 %v81
      %vm110 = vweird.f32 %v103
      %vm111 = vmor %vm109, %vm110
      %v112 = vsel %vm111, %v103, %v108
      %v113 = vrsqrt.pop %v82
      %v114 = vmul.f32 %v113, %v82
      %v115 = vmul.f32 %v114, %v113
      %v116 = vmul.f32 0.5, %v115
      %v117 = vsub.f32 1.5, %v116
      %v118 = vmul.f32 %v113, %v117
      %vm119 = vweird.f32 %v82
      %vm120 = vweird.f32 %v113
      %vm121 = vmor %vm119, %vm120
      %v122 = vsel %vm121, %v113, %v118
      %v123 = vmul.f32 %v55, %v92
      %v124 = vmul.f32 %v56, %v102
      %v125 = vmul.f32 %v57, %v112
      %v126 = vmul.f32 %v58, %v122
      %v127 = vld [vmem:[%s1] sm:$0x1]
      %v129 = vperm.slane %v127, 0
      %v131 = vmul.f32 %v123, %v129
      %v132 = vmul.f32 %v124, %v129
      %v133 = vmul.f32 %v125, %v129
      %v134 = vmul.f32 %v126, %v129
      %v135 = vld [vmem:[%s2] sm:$0x1]
      %v137 = vperm.slane %v135, 0
      %v139 = vadd.f32 %v131, %v137
      %v140 = vadd.f32 %v132, %v137
      %v141 = vadd.f32 %v133, %v137
      %v142 = vadd.f32 %v134, %v137
      %v143 = vpack.c.bf16 %v139, %v139
      %v144 = vpack.c.bf16 %v140, %v140
      %v145 = vpack.c.bf16 %v141, %v141
      %v146 = vpack.c.bf16 %v142, %v142
      %vm147 = vcmask 257024
      %148 = vst.msk [vmem:[#allocation2] sm:$0xf] %vm147, %v143
      %149 = vst.msk [vmem:[#allocation2 + $0x4] sm:$0xf] %vm147, %v144
      %150 = vst.msk [vmem:[#allocation2 + $0x8] sm:$0xf] %vm147, %v145
      %151 = vst.msk [vmem:[#allocation2 + $0xc] sm:$0xf] %vm147, %v146
    $region21: #{gpt_forward.21} parent=1 // pred_fallthru
      _
    %v152 = vld [vmem:[#allocation2] sm:$0xf]
    %v153 = vld [vmem:[#allocation2 + $0x4] sm:$0xf]
    %v154 = vld [vmem:[#allocation2 + $0x8] sm:$0xf]
    %v155 = vld [vmem:[#allocation2 + $0xc] sm:$0xf]
    %v156 = vld [vmem:[%s3] sm:$0xf]
    %v157 = vld [vmem:[%s3 + $0x4] sm:$0xf]
    %v158 = vld [vmem:[%s3 + $0x8] sm:$0xf]
    %v159 = vld [vmem:[%s3 + $0xc] sm:$0xf]
    %v164 = vunpack.c.l.b16 %v152
    %v165 = vunpack.c.l.b16 %v153
    %v166 = vunpack.c.l.b16 %v154
    %v167 = vunpack.c.l.b16 %v155
    %v168 = vpack.c.b16 %v165, %v164
    %v169 = vpack.c.b16 %v167, %v166
    %v174 = vunpack.c.l.b16 %v156
    %v175 = vunpack.c.l.b16 %v157
    %v176 = vunpack.c.l.b16 %v158
    %v177 = vunpack.c.l.b16 %v159
    %v178 = vpack.c.b16 %v175, %v174
    %v179 = vpack.c.b16 %v177, %v176
    %vm182 = vcmask 261120
    %v184 = vsel %vm182, %v168, 0
    %v187 = vsel %vm182, %v169, 0
    %189 = vmatpush.bf16.msra.mxu0 0
    %190 = vmatpush.bf16.msra.mxu0 0
    %191 = vmatpush.bf16.msra.mxu0 0
    %192 = vmatpush.bf16.msra.mxu0 0
    %193 = vmatpush.bf16.msra.mxu0 0
    %194 = vmatpush.bf16.msra.mxu0 0
    %195 = vmatpush.bf16.msra.mxu0 %v179
    %196 = vmatpush.bf16.msra.mxu0 %v178
    %197 = vmatmul.bf16.gmra.mxu0 %v184
    %v198 = vpop.f32.mrf.mxu0
    %v199 = vadd.f32 0.0, %v198
    %v200 = vpop.f32.mrf.mxu0
    %v201 = vadd.f32 0.0, %v200
    %202 = vmatmul.bf16.gmra.mxu0 %v187
    %v203 = vpop.f32.mrf.mxu0
    %v204 = vadd.f32 0.0, %v203
    %v205 = vpop.f32.mrf.mxu0
    %v206 = vadd.f32 0.0, %v205
    %207 = vdwg.mxu0
    %208 = vst [vmem:[#allocation3] sm:$0xff] %v199
    %209 = vst [vmem:[#allocation3 + $0x8] sm:$0xff] %v201
    %210 = vst [vmem:[#allocation3 + $0x10] sm:$0xff] %v204
    %211 = vst [vmem:[#allocation3 + $0x18] sm:$0xff] %v206
    // Predicated region
    $region22: #{gpt_forward.21} parent=1 // pred_check
      _
    $region23: #{gpt_forward.21} parent=1 // pred_check_branch
      %213 = sbr.rel (0) target = $region25
    $region24: #{gpt_forward.21} parent=1 // pred_region
      %215 = vsyncadd [#allocation4], 0
      %s216 = sshll.u32 [#allocation3], 4
      %s217 = int_to_ptr.vmem [resolvable:$true] %s216
      %s218 = sshll.u32 %s4, 4
      %s219 = int_to_ptr.hbm [resolvable:$true] %s218
      %224 = dma.vmem_to_hbm [thread:$0]  %s217, 512, %s219, [#allocation4], 128, 128, 8
    $region25: #{gpt_forward.21} parent=1 // pred_fallthru
      _
    // Predicated region
    $region26: #{gpt_forward.21} parent=1 // pred_check
      _
    $region27: #{gpt_forward.21} parent=1 // pred_check_branch
      %226 = sbr.rel (0) target = $region29
    $region28: #{gpt_forward.21} parent=1 // pred_region
      %228 = dma.done [#allocation4], 512
    $region29: #{gpt_forward.21} parent=1 // pred_fallthru
      _
    %229 = vsyncpa [#allocation4], 1

</llo_original>
